<compile_context>
chip_gen: v5e
topology: v5e:2x2
jax: 0.10.0
libtpu: 0.0.40
codegen_flags: <defaults>
</compile_context>

<pallas_src>
import numpy as np

import jax
import jax.numpy as jnp
from jax.experimental import pallas as pl
from jax.experimental.pallas import tpu as pltpu

EPS = 1e-5

_VMEM_LIMIT = None


def _vmem_limit():
    """Generation-aware scoped-VMEM budget (v7x: 48 MiB, v5e/v6e: 96 MiB)."""
    global _VMEM_LIMIT
    if _VMEM_LIMIT is None:
        cap = 128 * 1024 * 1024
        try:
            cap = int(getattr(pltpu.get_tpu_info(), "vmem_capacity_bytes", cap))
        except Exception:
            pass
        _VMEM_LIMIT = int(min(cap * 3 // 4, 96 * 1024 * 1024))
    return _VMEM_LIMIT


# ------------------ standalone stats kernel (external input only) ----------- #

def _stats_kernel(x_ref, o_ref):
    """Per-grid-cell partial [sum; sum_sq] over rows of a (TM, W*C) block."""
    x = x_ref[...].astype(jnp.float32)
    o_ref[0] = jnp.concatenate(
        [jnp.sum(x, axis=0, keepdims=True),
         jnp.sum(x * x, axis=0, keepdims=True)], axis=0)


def _row_tile(m, cap):
    if m <= cap:
        return m
    for t in range(min(m, cap), 0, -1):
        if m % t == 0 and t % 8 == 0:
            return t
    return m


def input_channel_stats(x_folded, w, c):
    """Raw per-channel [sum; sum_sq] of a folded (N, H, W*C) activation."""
    N, H, WC = x_folded.shape
    M = N * H
    TM = _row_tile(M, 1024)
    G = M // TM
    part = pl.pallas_call(
        _stats_kernel,
        grid=(G,),
        in_specs=[pl.BlockSpec((TM, WC), lambda i: (i, 0))],
        out_specs=pl.BlockSpec((1, 2, WC), lambda i: (i, 0, 0)),
        out_shape=jax.ShapeDtypeStruct((G, 2, WC), jnp.float32),
        compiler_params=pltpu.CompilerParams(
            dimension_semantics=("parallel",),
            vmem_limit_bytes=_vmem_limit()),
    )(x_folded.reshape(M, WC))
    return part.sum(axis=0).reshape(2, w, c).sum(axis=1)       # (2, C)


def _bn_scale_shift(raw_sums, count, gamma, beta):
    """Training-mode BN: raw [sum; sum_sq] -> per-channel (scale, shift)."""
    # TODO(synk): E[x^2]-E[x]^2 can cancel at large activation scale (clamped
    # at 0 here); use a two-pass/Welford form if accuracy requirements tighten.
    mean = raw_sums[0] / count
    var = jnp.maximum(raw_sums[1] / count - mean * mean, 0.0)
    scale = gamma * jax.lax.rsqrt(var + EPS)
    shift = beta - mean * scale
    return scale, shift


def _fold_output_stats(st, wo, cout):
    """(N, 2, Wo*Cout) folded partials -> raw per-channel (2, Cout) sums."""
    return st.sum(axis=0).reshape(2, wo, cout).sum(axis=1)


# ---------- fused BN -> ReLU -> conv3x3 (+shortcut, +residual, +stats) ------- #

def _make_conv_kernel(*, stride, h, ho, wocout, has_shortcut, has_residual,
                      emit_stats):
    s, H, Ho, WoCout = stride, h, ho, wocout
    Hp = H + 2

    def kernel(*refs):
        it = iter(refs)
        x_ref = next(it)                                # (1, H, W*Cin)
        aff_ref = next(it)                              # (2, W*Cin) f32
        b_ref = next(it)                                # (3, W*Cin, Wo*Cout) bf16
        bs_ref = next(it) if has_shortcut else None     # (1, W*Cin, Wo*Cout) bf16
        res_ref = next(it) if has_residual else None    # (1, Ho, Wo*Cout)
        out_ref = next(it)                              # (1, Ho, Wo*Cout) bf16
        sc_ref = next(it) if has_shortcut else None     # (1, Ho, Wo*Cout) bf16
        st_ref = next(it) if emit_stats else None       # (1, 2, Wo*Cout) f32
        pad_ref = next(it)                              # VMEM (H+2, W*Cin) bf16

        # BN affine + ReLU in f32 (v5e-safe), ONE bf16 cast, written into an
        # H-padded VMEM scratch.  Zero rows == the conv's zero padding; the W
        # zero padding is folded into the banded weights (missing band entry).
        x = x_ref[0].astype(jnp.float32)
        act = jnp.maximum(x * aff_ref[0:1, :] + aff_ref[1:2, :], 0.0)
        pad_ref[...] = jnp.zeros_like(pad_ref)   # scratch is per-core: zero
                                                 # every step, no pl.when gate
        pad_ref[pl.ds(1, H), :] = act.astype(jnp.bfloat16)
        p = pad_ref[...]                                # (H+2, W*Cin) bf16

        if s != 1:
            oh_i = jax.lax.broadcasted_iota(jnp.int32, (Ho, Hp), 0)
            y_i = jax.lax.broadcasted_iota(jnp.int32, (Ho, Hp), 1)

        def rows(kh):
            """Padded-activation rows y = s*oh + kh for oh in [0, Ho)."""
            if s == 1:
                return p[kh:kh + Ho, :]
            # Stride-2: row selection via a tiny 0/1 matmul (no strided VMEM
            # access; the copy through the MXU is exact for bf16 values).
            sel = (y_i == s * oh_i + kh).astype(jnp.bfloat16)   # (Ho, Hp)
            return jnp.dot(sel, p, preferred_element_type=jnp.float32
                           ).astype(jnp.bfloat16)

        # 3x3 conv == 3 MXU matmuls: kw taps + Cin + W-stride + W-padding are
        # all folded into the contraction by the banded weight matrices.
        acc = jnp.zeros((Ho, WoCout), jnp.float32)
        lhs_mid = None
        for kh in range(3):
            lhs = rows(kh)
            if kh == 1:
                lhs_mid = lhs                    # reused by the 1x1 shortcut
            acc = acc + jnp.dot(lhs, b_ref[kh],
                                preferred_element_type=jnp.float32)

        if has_residual:
            acc = acc + res_ref[0].astype(jnp.float32)

        out_ref[0] = acc.astype(out_ref.dtype)

        if has_shortcut:
            sc = jnp.dot(lhs_mid, bs_ref[0], preferred_element_type=jnp.float32)
            sc_ref[0] = sc.astype(sc_ref.dtype)

        if emit_stats:
            # f32 channel sum / sum-of-squares of this kernel's own output so
            # the next BatchNorm never re-reads the activation from HBM.
            st_ref[0] = jnp.concatenate(
                [jnp.sum(acc, axis=0, keepdims=True),
                 jnp.sum(acc * acc, axis=0, keepdims=True)], axis=0)

    return kernel


def fused_bn_relu_conv(x_folded, hw, cin, scale, shift, w_hwio, stride,
                       shortcut_w=None, residual=None, emit_stats=True):
    """BN(scale, shift)+ReLU on a folded (N, H, W*Cin) activation, then a
    3x3 conv (stride, pad=1).  Optionally fuses the 1x1/stride shortcut conv
    (second output), a residual add, and emits output channel statistics."""
    N = x_folded.shape[0]
    H, W = hw
    Cin = int(cin)
    K = int(w_hwio.shape[0])                         # 3
    Cout = int(w_hwio.shape[-1])
    s = int(stride)
    Ho = (H + 2 - K) // s + 1
    Wo = (W + 2 - K) // s + 1
    WCin, WoCout = W * Cin, Wo * Cout

    # Banded weights over unpadded columns:
    #   B[kh, x*Cin+ci, ow*Cout+co] = w[kh, kw, ci, co]  iff  x == s*ow + kw - 1
    # (out-of-range x has no band entry -> implicit zero W padding).
    xs = np.arange(W)[:, None, None]
    kws = np.arange(K)[None, :, None]
    ows = np.arange(Wo)[None, None, :]
    band = jnp.asarray((xs == s * ows + kws - 1).astype(np.float32))  # (W,K,Wo)
    B = jnp.einsum("xqo,hqic->hxioc", band, w_hwio.astype(jnp.float32))
    B = B.reshape(K, WCin, WoCout).astype(jnp.bfloat16)

    # BN (scale, shift) tiled into the channel-minor folded layout.
    aff = jnp.stack([jnp.tile(scale, W), jnp.tile(shift, W)]).astype(jnp.float32)

    in_specs = [
        pl.BlockSpec((1, H, WCin), lambda n: (n, 0, 0)),
        pl.BlockSpec((2, WCin), lambda n: (0, 0)),
        pl.BlockSpec((K, WCin, WoCout), lambda n: (0, 0, 0)),
    ]
    args = [x_folded, aff, B]

    has_shortcut = shortcut_w is not None
    has_residual = residual is not None
    if has_shortcut:
        ws = shortcut_w.reshape(Cin, Cout).astype(jnp.float32)
        band_sc = jnp.asarray(
            (np.arange(W)[:, None] == s * np.arange(Wo)[None, :]
             ).astype(np.float32))                                   # (W, Wo)
        Bs = jnp.einsum("xo,ic->xioc", band_sc, ws)
        Bs = Bs.reshape(1, WCin, WoCout).astype(jnp.bfloat16)
        in_specs.append(pl.BlockSpec((1, WCin, WoCout), lambda n: (0, 0, 0)))
        args.append(Bs)
    if has_residual:
        in_specs.append(pl.BlockSpec((1, Ho, WoCout), lambda n: (n, 0, 0)))
        args.append(residual)

    out_specs = [pl.BlockSpec((1, Ho, WoCout), lambda n: (n, 0, 0))]
    out_shape = [jax.ShapeDtypeStruct((N, Ho, WoCout), jnp.bfloat16)]
    if has_shortcut:
        out_specs.append(pl.BlockSpec((1, Ho, WoCout), lambda n: (n, 0, 0)))
        out_shape.append(jax.ShapeDtypeStruct((N, Ho, WoCout), jnp.bfloat16))
    if emit_stats:
        out_specs.append(pl.BlockSpec((1, 2, WoCout), lambda n: (n, 0, 0)))
        out_shape.append(jax.ShapeDtypeStruct((N, 2, WoCout), jnp.float32))

    kernel = _make_conv_kernel(stride=s, h=H, ho=Ho, wocout=WoCout,
                               has_shortcut=has_shortcut,
                               has_residual=has_residual,
                               emit_stats=emit_stats)

    outs = pl.pallas_call(
        kernel,
        grid=(N,),
        in_specs=in_specs,
        out_specs=tuple(out_specs),
        out_shape=tuple(out_shape),
        scratch_shapes=[pltpu.VMEM((H + 2, WCin), jnp.bfloat16)],
        compiler_params=pltpu.CompilerParams(
            dimension_semantics=("parallel",),          # batch -> both TCs
            vmem_limit_bytes=_vmem_limit()),
    )(*args)
    outs = list(outs) if isinstance(outs, (tuple, list)) else [outs]

    out = outs.pop(0)
    sc = outs.pop(0) if has_shortcut else None
    st = outs.pop(0) if emit_stats else None
    return out, sc, st, (Ho, Wo, Cout)


# --------------------------- BasicBlock / NetworkBlock ---------------------- #

def basic_block_forward(x_folded, hw, cin, in_sums, p, emit_out_stats):
    N = x_folded.shape[0]
    H, W = hw
    s = p["stride"]
    scale1, shift1 = _bn_scale_shift(in_sums, float(N * H * W),
                                     p["bn1_gamma"], p["bn1_beta"])
    if p["equal_in_out"]:
        y1, _, st1, (Ho, Wo, Cout) = fused_bn_relu_conv(
            x_folded, (H, W), cin, scale1, shift1, p["conv1_w"], s,
            emit_stats=True)
        residual = x_folded               # identity shortcut on the block input
    else:
        # conv1 and the 1x1/stride shortcut share the bn1-relu activation tile
        y1, residual, st1, (Ho, Wo, Cout) = fused_bn_relu_conv(
            x_folded, (H, W), cin, scale1, shift1, p["conv1_w"], s,
            shortcut_w=p["shortcut_w"], emit_stats=True)

    scale2, shift2 = _bn_scale_shift(_fold_output_stats(st1, Wo, Cout),
                                     float(N * Ho * Wo),
                                     p["bn2_gamma"], p["bn2_beta"])

    # dropRate == 0.0 -> dropout is the identity.
    out, _, st2, (Ho2, Wo2, Cout2) = fused_bn_relu_conv(
        y1, (Ho, Wo), Cout, scale2, shift2, p["conv2_w"], 1,
        residual=residual, emit_stats=emit_out_stats)
    out_sums = _fold_output_stats(st2, Wo2, Cout2) if emit_out_stats else None
    return out, (Ho2, Wo2), Cout2, out_sums


def init_network_block(key, nb_layers, in_planes, out_planes, stride):
    layers = []
    for i in range(int(nb_layers)):
        ip = in_planes if i == 0 else out_planes
        s = stride if i == 0 else 1
        key, k1, k2, k3 = jax.random.split(key, 4)
        p = {
            "equal_in_out": ip == out_planes,
            "stride": s,
            "bn1_gamma": jnp.ones((ip,), jnp.float32),   # PyTorch BN default init
            "bn1_beta": jnp.zeros((ip,), jnp.float32),
            "conv1_w": 0.1 * jax.random.normal(k1, (3, 3, ip, out_planes), jnp.float32),
            "bn2_gamma": jnp.ones((out_planes,), jnp.float32),
            "bn2_beta": jnp.zeros((out_planes,), jnp.float32),
            "conv2_w": 0.1 * jax.random.normal(k2, (3, 3, out_planes, out_planes), jnp.float32),
            "shortcut_w": (
                None if ip == out_planes
                else 0.1 * jax.random.normal(k3, (1, 1, ip, out_planes), jnp.float32)
            ),
        }
        layers.append(p)
    return layers


def network_block_forward(x_nchw, layers):
    N, C, H, W = x_nchw.shape
    x = jnp.transpose(x_nchw, (0, 2, 3, 1)).reshape(N, H, W * C)  # folded NHWC
    sums = input_channel_stats(x, W, C)     # only the external input needs this
    hw, c = (H, W), C
    for i, p in enumerate(layers):
        x, hw, c, sums = basic_block_forward(
            x, hw, c, sums, p, emit_out_stats=(i + 1 < len(layers)))
    Ho, Wo = hw
    out = x.astype(jnp.float32).reshape(N, Ho, Wo, c)
    return jnp.transpose(out, (0, 3, 1, 2))                       # NHWC -> NCHW


# --------------------------- Pure-JAX reference ----------------------------- #

def _ref_bn_relu(x, gamma, beta):
    mean = x.mean(axis=(0, 1, 2), keepdims=True)
    var = ((x - mean) ** 2).mean(axis=(0, 1, 2), keepdims=True)
    y = (x - mean) * jax.lax.rsqrt(var + EPS) * gamma.reshape(1, 1, 1, -1) \
        + beta.reshape(1, 1, 1, -1)
    return jnp.maximum(y, 0.0)


def _ref_conv(x, w, stride, pad):
    return jax.lax.conv_general_dilated(
        x, w, (stride, stride), [(pad, pad), (pad, pad)],
        dimension_numbers=("NHWC", "HWIO", "NHWC"))


def _ref_block(x, p):
    equal = p["equal_in_out"]
    s = p["stride"]
    if not equal:
        x = _ref_bn_relu(x, p["bn1_gamma"], p["bn1_beta"])
        out = x
    else:
        out = _ref_bn_relu(x, p["bn1_gamma"], p["bn1_beta"])
    out = _ref_conv(out, p["conv1_w"], s, 1)
    out = _ref_bn_relu(out, p["bn2_gamma"], p["bn2_beta"])
    out = _ref_conv(out, p["conv2_w"], 1, 1)
    residual = x if equal else _ref_conv(x, p["shortcut_w"], s, 0)
    return residual + out


def ref_network_block(x_nchw, layers):
    x = jnp.transpose(x_nchw, (0, 2, 3, 1))
    for p in layers:
        x = _ref_block(x, p)
    return jnp.transpose(x, (0, 3, 1, 2))


# ---------------------------------- Main ------------------------------------ #

if __name__ == "__main__":
    key = jax.random.PRNGKey(0)
    kx, kp = jax.random.split(key)

    # NetworkBlock(nb_layers=2, in_planes=4, out_planes=8, block=BasicBlock,
    #              stride=2, dropRate=0.0); input is PyTorch-style NCHW.
    x = jax.random.normal(kx, (2, 4, 16, 16), jnp.float32)
    layers = init_network_block(kp, nb_layers=2, in_planes=4, out_planes=8, stride=2)

    fwd = jax.jit(lambda xx: network_block_forward(xx, layers))
    out = jax.block_until_ready(fwd(x))

    assert out.shape == (2, 8, 8, 8), out.shape
    ref = ref_network_block(x, layers)
    denom = max(float(jnp.max(jnp.abs(ref))), 1e-6)
    rel_err = float(jnp.max(jnp.abs(out - ref))) / denom
    # bf16 MXU operands + bf16 inter-kernel activations with f32 accumulation
    # and f32 BN statistics -> a few percent max-abs relative agreement.
    assert rel_err < 5e-2, f"mismatch vs reference: rel_err={rel_err}"

    print("KERNEL_OK")
</pallas_src>

<mosaic_0001>
module attributes {stable_mosaic.version = 11 : i64} {
  func.func @_stats_kernel(%arg0: i32, %arg1: memref<32x64xf32, #tpu.memory_space<vmem>>, %arg2: memref<1x2x64xf32, #tpu.memory_space<vmem>>) attributes {dimension_semantics = [#tpu.dimension_semantics<parallel>], iteration_bounds = array<i64: 1>, scalar_prefetch = 0 : i64, scratch_operands = 0 : i64, tpu.core_type = #tpu.core_type<tc>, window_params = [{transform_indices = @transform_0, window_bounds = array<i64: 32, 64>}, {transform_indices = @transform_1, window_bounds = array<i64: 1, 2, 64>}]} {
    %c0 = arith.constant 0 : index
    %c0_0 = arith.constant 0 : index
    %0 = vector.load %arg1[%c0, %c0_0] : memref<32x64xf32, #tpu.memory_space<vmem>>, vector<32x64xf32>
    %cst = arith.constant dense<0.000000e+00> : vector<64xf32>
    %1 = vector.multi_reduction <add>, %0, %cst [0] : vector<32x64xf32> to vector<64xf32>
    %2 = vector.shape_cast %1 : vector<64xf32> to vector<1x64xf32>
    %3 = arith.mulf %0, %0 : vector<32x64xf32>
    %cst_1 = arith.constant dense<0.000000e+00> : vector<64xf32>
    %4 = vector.multi_reduction <add>, %3, %cst_1 [0] : vector<32x64xf32> to vector<64xf32>
    %5 = vector.shape_cast %4 : vector<64xf32> to vector<1x64xf32>
    %6 = tpu.concatenate %2, %5 in 0 : vector<1x64xf32>, vector<1x64xf32> -> vector<2x64xf32>
    %c0_2 = arith.constant 0 : index
    %c0_3 = arith.constant 0 : index
    %c0_4 = arith.constant 0 : index
    %7 = vector.load %arg2[%c0_2, %c0_3, %c0_4] : memref<1x2x64xf32, #tpu.memory_space<vmem>>, vector<1x2x64xf32>
    %8 = vector.shape_cast %7 : vector<1x2x64xf32> to vector<2x64xf32>
    %9 = vector.shape_cast %6 : vector<2x64xf32> to vector<1x2x64xf32>
    tpu.vector_store %arg2[%c0_2, %c0_3, %c0_4], %9 {strides = array<i32>} : memref<1x2x64xf32, #tpu.memory_space<vmem>>, vector<1x2x64xf32>,
    return
  }
  func.func @transform_0(%arg0: i32) -> (i32, i32) {
    %c0_i32 = arith.constant 0 : i32
    %c0_i32_0 = arith.constant 0 : i32
    return %arg0, %c0_i32 : i32, i32
  }
  func.func @transform_1(%arg0: i32) -> (i32, i32, i32) {
    %c0_i32 = arith.constant 0 : i32
    %c0_i32_0 = arith.constant 0 : i32
    %c0_i32_1 = arith.constant 0 : i32
    return %arg0, %c0_i32, %c0_i32_0 : i32, i32, i32
  }
}

module attributes {stable_mosaic.version = 11 : i64} {
  func.func @kernel(%arg0: i32, %arg1: memref<1x16x64xf32, #tpu.memory_space<vmem>>, %arg2: memref<2x64xf32, #tpu.memory_space<vmem>>, %arg3: memref<3x64x64xbf16, #tpu.memory_space<vmem>>, %arg4: memref<1x64x64xbf16, #tpu.memory_space<vmem>>, %arg5: memref<1x8x64xbf16, #tpu.memory_space<vmem>>, %arg6: memref<1x8x64xbf16, #tpu.memory_space<vmem>>, %arg7: memref<1x2x64xf32, #tpu.memory_space<vmem>>, %arg8: memref<18x64xbf16, #tpu.memory_space<vmem>>) attributes {dimension_semantics = [#tpu.dimension_semantics<parallel>], iteration_bounds = array<i64: 2>, scalar_prefetch = 0 : i64, scratch_operands = 1 : i64, tpu.core_type = #tpu.core_type<tc>, window_params = [{transform_indices = @transform_0, window_bounds = array<i64: 1, 16, 64>}, {pipeline_mode = #tpu.pipeline_mode<synchronous>, transform_indices = @transform_1, window_bounds = array<i64: 2, 64>}, {pipeline_mode = #tpu.pipeline_mode<synchronous>, transform_indices = @transform_2, window_bounds = array<i64: 3, 64, 64>}, {pipeline_mode = #tpu.pipeline_mode<synchronous>, transform_indices = @transform_3, window_bounds = array<i64: 1, 64, 64>}, {transform_indices = @transform_4, window_bounds = array<i64: 1, 8, 64>}, {transform_indices = @transform_5, window_bounds = array<i64: 1, 8, 64>}, {transform_indices = @transform_6, window_bounds = array<i64: 1, 2, 64>}]} {
    %c0 = arith.constant 0 : index
    %c0_0 = arith.constant 0 : index
    %c0_1 = arith.constant 0 : index
    %0 = vector.load %arg1[%c0, %c0_0, %c0_1] : memref<1x16x64xf32, #tpu.memory_space<vmem>>, vector<1x16x64xf32>
    %1 = vector.shape_cast %0 : vector<1x16x64xf32> to vector<16x64xf32>
    %c0_2 = arith.constant 0 : index
    %c0_3 = arith.constant 0 : index
    %2 = vector.load %arg2[%c0_2, %c0_3] : memref<2x64xf32, #tpu.memory_space<vmem>>, vector<1x64xf32>
    %3 = vector.broadcast %2 : vector<1x64xf32> to vector<16x64xf32>
    %4 = arith.mulf %1, %3 : vector<16x64xf32>
    %c1 = arith.constant 1 : index
    %c0_4 = arith.constant 0 : index
    %5 = vector.load %arg2[%c1, %c0_4] : memref<2x64xf32, #tpu.memory_space<vmem>>, vector<1x64xf32>
    %6 = vector.broadcast %5 : vector<1x64xf32> to vector<16x64xf32>
    %7 = arith.addf %4, %6 : vector<16x64xf32>
    %cst = arith.constant 0.000000e+00 : f32
    %8 = vector.broadcast %cst : f32 to vector<16x64xf32>
    %9 = arith.maximumf %7, %8 : vector<16x64xf32>
    %cst_5 = arith.constant 0.000000e+00 : bf16
    %10 = vector.broadcast %cst_5 : bf16 to vector<18x64xbf16>
    %c0_6 = arith.constant 0 : index
    %c0_7 = arith.constant 0 : index
    %11 = vector.load %arg8[%c0_6, %c0_7] : memref<18x64xbf16, #tpu.memory_space<vmem>>, vector<18x64xbf16>
    tpu.vector_store %arg8[%c0_6, %c0_7], %10 {strides = array<i32>} : memref<18x64xbf16, #tpu.memory_space<vmem>>, vector<18x64xbf16>,
    %12 = arith.truncf %9 : vector<16x64xf32> to vector<16x64xbf16>
    %c1_8 = arith.constant 1 : index
    %c0_9 = arith.constant 0 : index
    %13 = vector.load %arg8[%c1_8, %c0_9] : memref<18x64xbf16, #tpu.memory_space<vmem>>, vector<16x64xbf16>
    tpu.vector_store %arg8[%c1_8, %c0_9], %12 {strides = array<i32>} : memref<18x64xbf16, #tpu.memory_space<vmem>>, vector<16x64xbf16>,
    %c0_10 = arith.constant 0 : index
    %c0_11 = arith.constant 0 : index
    %14 = vector.load %arg8[%c0_10, %c0_11] : memref<18x64xbf16, #tpu.memory_space<vmem>>, vector<18x64xbf16>
    %15 = tpu.iota {dimensions = array<i32: 0>} : vector<8x18xi32>
    %16 = tpu.iota {dimensions = array<i32: 1>} : vector<8x18xi32>
    %cst_12 = arith.constant 0.000000e+00 : f32
    %17 = vector.broadcast %cst_12 : f32 to vector<8x64xf32>
    %c2_i32 = arith.constant 2 : i32
    %18 = vector.broadcast %c2_i32 : i32 to vector<8x18xi32>
    %19 = arith.muli %18, %15 : vector<8x18xi32>
    %c0_i32 = arith.constant 0 : i32
    %20 = vector.broadcast %c0_i32 : i32 to vector<8x18xi32>
    %21 = arith.addi %19, %20 : vector<8x18xi32>
    %22 = arith.cmpi eq, %16, %21 : vector<8x18xi32>
    %23 = arith.extui %22 : vector<8x18xi1> to vector<8x18xi32>
    %24 = arith.sitofp %23 : vector<8x18xi32> to vector<8x18xf32>
    %25 = arith.truncf %24 : vector<8x18xf32> to vector<8x18xbf16>
    %cst_13 = arith.constant dense<0.000000e+00> : vector<8x64xf32>
    %26 = tpu.matmul %25, %14, %cst_13 {dimension_numbers = #tpu.dot_dimension_numbers<[1], [0], [0], [1], [0, 0, 1, 1], [], []>} : vector<8x18xbf16>, vector<18x64xbf16>, vector<8x64xf32> -> vector<8x64xf32>
    %27 = arith.truncf %26 : vector<8x64xf32> to vector<8x64xbf16>
    %c0_14 = arith.constant 0 : index
    %c0_15 = arith.constant 0 : index
    %c0_16 = arith.constant 0 : index
    %28 = vector.load %arg3[%c0_14, %c0_15, %c0_16] : memref<3x64x64xbf16, #tpu.memory_space<vmem>>, vector<1x64x64xbf16>
    %29 = vector.shape_cast %28 : vector<1x64x64xbf16> to vector<64x64xbf16>
    %cst_17 = arith.constant dense<0.000000e+00> : vector<8x64xf32>
    %30 = tpu.matmul %27, %29, %cst_17 {dimension_numbers = #tpu.dot_dimension_numbers<[1], [0], [0], [1], [0, 0, 1, 1], [], []>} : vector<8x64xbf16>, vector<64x64xbf16>, vector<8x64xf32> -> vector<8x64xf32>
    %31 = arith.addf %17, %30 : vector<8x64xf32>
    %c2_i32_18 = arith.constant 2 : i32
    %32 = vector.broadcast %c2_i32_18 : i32 to vector<8x18xi32>
    %33 = arith.muli %32, %15 : vector<8x18xi32>
    %c1_i32 = arith.constant 1 : i32
    %34 = vector.broadcast %c1_i32 : i32 to vector<8x18xi32>
    %35 = arith.addi %33, %34 : vector<8x18xi32>
    %36 = arith.cmpi eq, %16, %35 : vector<8x18xi32>
    %37 = arith.extui %36 : vector<8x18xi1> to vector<8x18xi32>
    %38 = arith.sitofp %37 : vector<8x18xi32> to vector<8x18xf32>
    %39 = arith.truncf %38 : vector<8x18xf32> to vector<8x18xbf16>
    %cst_19 = arith.constant dense<0.000000e+00> : vector<8x64xf32>
    %40 = tpu.matmul %39, %14, %cst_19 {dimension_numbers = #tpu.dot_dimension_numbers<[1], [0], [0], [1], [0, 0, 1, 1], [], []>} : vector<8x18xbf16>, vector<18x64xbf16>, vector<8x64xf32> -> vector<8x64xf32>
    %41 = arith.truncf %40 : vector<8x64xf32> to vector<8x64xbf16>
    %c1_20 = arith.constant 1 : index
    %c0_21 = arith.constant 0 : index
    %c0_22 = arith.constant 0 : index
    %42 = vector.load %arg3[%c1_20, %c0_21, %c0_22] : memref<3x64x64xbf16, #tpu.memory_space<vmem>>, vector<1x64x64xbf16>
    %43 = vector.shape_cast %42 : vector<1x64x64xbf16> to vector<64x64xbf16>
    %cst_23 = arith.constant dense<0.000000e+00> : vector<8x64xf32>
    %44 = tpu.matmul %41, %43, %cst_23 {dimension_numbers = #tpu.dot_dimension_numbers<[1], [0], [0], [1], [0, 0, 1, 1], [], []>} : vector<8x64xbf16>, vector<64x64xbf16>, vector<8x64xf32> -> vector<8x64xf32>
    %45 = arith.addf %31, %44 : vector<8x64xf32>
    %c2_i32_24 = arith.constant 2 : i32
    %46 = vector.broadcast %c2_i32_24 : i32 to vector<8x18xi32>
    %47 = arith.muli %46, %15 : vector<8x18xi32>
    %c2_i32_25 = arith.constant 2 : i32
    %48 = vector.broadcast %c2_i32_25 : i32 to vector<8x18xi32>
    %49 = arith.addi %47, %48 : vector<8x18xi32>
    %50 = arith.cmpi eq, %16, %49 : vector<8x18xi32>
    %51 = arith.extui %50 : vector<8x18xi1> to vector<8x18xi32>
    %52 = arith.sitofp %51 : vector<8x18xi32> to vector<8x18xf32>
    %53 = arith.truncf %52 : vector<8x18xf32> to vector<8x18xbf16>
    %cst_26 = arith.constant dense<0.000000e+00> : vector<8x64xf32>
    %54 = tpu.matmul %53, %14, %cst_26 {dimension_numbers = #tpu.dot_dimension_numbers<[1], [0], [0], [1], [0, 0, 1, 1], [], []>} : vector<8x18xbf16>, vector<18x64xbf16>, vector<8x64xf32> -> vector<8x64xf32>
    %55 = arith.truncf %54 : vector<8x64xf32> to vector<8x64xbf16>
    %c2 = arith.constant 2 : index
    %c0_27 = arith.constant 0 : index
    %c0_28 = arith.constant 0 : index
    %56 = vector.load %arg3[%c2, %c0_27, %c0_28] : memref<3x64x64xbf16, #tpu.memory_space<vmem>>, vector<1x64x64xbf16>
    %57 = vector.shape_cast %56 : vector<1x64x64xbf16> to vector<64x64xbf16>
    %cst_29 = arith.constant dense<0.000000e+00> : vector<8x64xf32>
    %58 = tpu.matmul %55, %57, %cst_29 {dimension_numbers = #tpu.dot_dimension_numbers<[1], [0], [0], [1], [0, 0, 1, 1], [], []>} : vector<8x64xbf16>, vector<64x64xbf16>, vector<8x64xf32> -> vector<8x64xf32>
    %59 = arith.addf %45, %58 : vector<8x64xf32>
    %60 = arith.truncf %59 : vector<8x64xf32> to vector<8x64xbf16>
    %c0_30 = arith.constant 0 : index
    %c0_31 = arith.constant 0 : index
    %c0_32 = arith.constant 0 : index
    %61 = vector.load %arg5[%c0_30, %c0_31, %c0_32] : memref<1x8x64xbf16, #tpu.memory_space<vmem>>, vector<1x8x64xbf16>
    %62 = vector.shape_cast %61 : vector<1x8x64xbf16> to vector<8x64xbf16>
    %63 = vector.shape_cast %60 : vector<8x64xbf16> to vector<1x8x64xbf16>
    tpu.vector_store %arg5[%c0_30, %c0_31, %c0_32], %63 {strides = array<i32>} : memref<1x8x64xbf16, #tpu.memory_space<vmem>>, vector<1x8x64xbf16>,
    %c0_33 = arith.constant 0 : index
    %c0_34 = arith.constant 0 : index
    %c0_35 = arith.constant 0 : index
    %64 = vector.load %arg4[%c0_33, %c0_34, %c0_35] : memref<1x64x64xbf16, #tpu.memory_space<vmem>>, vector<1x64x64xbf16>
    %65 = vector.shape_cast %64 : vector<1x64x64xbf16> to vector<64x64xbf16>
    %cst_36 = arith.constant dense<0.000000e+00> : vector<8x64xf32>
    %66 = tpu.matmul %41, %65, %cst_36 {dimension_numbers = #tpu.dot_dimension_numbers<[1], [0], [0], [1], [0, 0, 1, 1], [], []>} : vector<8x64xbf16>, vector<64x64xbf16>, vector<8x64xf32> -> vector<8x64xf32>
    %67 = arith.truncf %66 : vector<8x64xf32> to vector<8x64xbf16>
    %c0_37 = arith.constant 0 : index
    %c0_38 = arith.constant 0 : index
    %c0_39 = arith.constant 0 : index
    %68 = vector.load %arg6[%c0_37, %c0_38, %c0_39] : memref<1x8x64xbf16, #tpu.memory_space<vmem>>, vector<1x8x64xbf16>
    %69 = vector.shape_cast %68 : vector<1x8x64xbf16> to vector<8x64xbf16>
    %70 = vector.shape_cast %67 : vector<8x64xbf16> to vector<1x8x64xbf16>
    tpu.vector_store %arg6[%c0_37, %c0_38, %c0_39], %70 {strides = array<i32>} : memref<1x8x64xbf16, #tpu.memory_space<vmem>>, vector<1x8x64xbf16>,
    %cst_40 = arith.constant dense<0.000000e+00> : vector<64xf32>
    %71 = vector.multi_reduction <add>, %59, %cst_40 [0] : vector<8x64xf32> to vector<64xf32>
    %72 = vector.shape_cast %71 : vector<64xf32> to vector<1x64xf32>
    %73 = arith.mulf %59, %59 : vector<8x64xf32>
    %cst_41 = arith.constant dense<0.000000e+00> : vector<64xf32>
    %74 = vector.multi_reduction <add>, %73, %cst_41 [0] : vector<8x64xf32> to vector<64xf32>
    %75 = vector.shape_cast %74 : vector<64xf32> to vector<1x64xf32>
    %76 = tpu.concatenate %72, %75 in 0 : vector<1x64xf32>, vector<1x64xf32> -> vector<2x64xf32>
    %c0_42 = arith.constant 0 : index
    %c0_43 = arith.constant 0 : index
    %c0_44 = arith.constant 0 : index
    %77 = vector.load %arg7[%c0_42, %c0_43, %c0_44] : memref<1x2x64xf32, #tpu.memory_space<vmem>>, vector<1x2x64xf32>
    %78 = vector.shape_cast %77 : vector<1x2x64xf32> to vector<2x64xf32>
    %79 = vector.shape_cast %76 : vector<2x64xf32> to vector<1x2x64xf32>
    tpu.vector_store %arg7[%c0_42, %c0_43, %c0_44], %79 {strides = array<i32>} : memref<1x2x64xf32, #tpu.memory_space<vmem>>, vector<1x2x64xf32>,
    return
  }
  func.func @transform_0(%arg0: i32) -> (i32, i32, i32) {
    %c0_i32 = arith.constant 0 : i32
    %c0_i32_0 = arith.constant 0 : i32
    %c0_i32_1 = arith.constant 0 : i32
    return %arg0, %c0_i32, %c0_i32_0 : i32, i32, i32
  }
  func.func @transform_1(%arg0: i32) -> (i32, i32) {
    %c0_i32 = arith.constant 0 : i32
    %c0_i32_0 = arith.constant 0 : i32
    %c0_i32_1 = arith.constant 0 : i32
    return %c0_i32, %c0_i32_0 : i32, i32
  }
  func.func @transform_2(%arg0: i32) -> (i32, i32, i32) {
    %c0_i32 = arith.constant 0 : i32
    %c0_i32_0 = arith.constant 0 : i32
    %c0_i32_1 = arith.constant 0 : i32
    %c0_i32_2 = arith.constant 0 : i32
    return %c0_i32, %c0_i32_0, %c0_i32_1 : i32, i32, i32
  }
  func.func @transform_3(%arg0: i32) -> (i32, i32, i32) {
    %c0_i32 = arith.constant 0 : i32
    %c0_i32_0 = arith.constant 0 : i32
    %c0_i32_1 = arith.constant 0 : i32
    %c0_i32_2 = arith.constant 0 : i32
    return %c0_i32, %c0_i32_0, %c0_i32_1 : i32, i32, i32
  }
  func.func @transform_4(%arg0: i32) -> (i32, i32, i32) {
    %c0_i32 = arith.constant 0 : i32
    %c0_i32_0 = arith.constant 0 : i32
    %c0_i32_1 = arith.constant 0 : i32
    return %arg0, %c0_i32, %c0_i32_0 : i32, i32, i32
  }
  func.func @transform_5(%arg0: i32) -> (i32, i32, i32) {
    %c0_i32 = arith.constant 0 : i32
    %c0_i32_0 = arith.constant 0 : i32
    %c0_i32_1 = arith.constant 0 : i32
    return %arg0, %c0_i32, %c0_i32_0 : i32, i32, i32
  }
  func.func @transform_6(%arg0: i32) -> (i32, i32, i32) {
    %c0_i32 = arith.constant 0 : i32
    %c0_i32_0 = arith.constant 0 : i32
    %c0_i32_1 = arith.constant 0 : i32
    return %arg0, %c0_i32, %c0_i32_0 : i32, i32, i32
  }
}

module attributes {stable_mosaic.version = 11 : i64} {
  func.func @kernel(%arg0: i32, %arg1: memref<1x8x64xbf16, #tpu.memory_space<vmem>>, %arg2: memref<2x64xf32, #tpu.memory_space<vmem>>, %arg3: memref<3x64x64xbf16, #tpu.memory_space<vmem>>, %arg4: memref<1x8x64xbf16, #tpu.memory_space<vmem>>, %arg5: memref<1x8x64xbf16, #tpu.memory_space<vmem>>, %arg6: memref<1x2x64xf32, #tpu.memory_space<vmem>>, %arg7: memref<10x64xbf16, #tpu.memory_space<vmem>>) attributes {dimension_semantics = [#tpu.dimension_semantics<parallel>], iteration_bounds = array<i64: 2>, scalar_prefetch = 0 : i64, scratch_operands = 1 : i64, tpu.core_type = #tpu.core_type<tc>, window_params = [{transform_indices = @transform_0, window_bounds = array<i64: 1, 8, 64>}, {pipeline_mode = #tpu.pipeline_mode<synchronous>, transform_indices = @transform_1, window_bounds = array<i64: 2, 64>}, {pipeline_mode = #tpu.pipeline_mode<synchronous>, transform_indices = @transform_2, window_bounds = array<i64: 3, 64, 64>}, {transform_indices = @transform_3, window_bounds = array<i64: 1, 8, 64>}, {transform_indices = @transform_4, window_bounds = array<i64: 1, 8, 64>}, {transform_indices = @transform_5, window_bounds = array<i64: 1, 2, 64>}]} {
    %c0 = arith.constant 0 : index
    %c0_0 = arith.constant 0 : index
    %c0_1 = arith.constant 0 : index
    %0 = vector.load %arg1[%c0, %c0_0, %c0_1] : memref<1x8x64xbf16, #tpu.memory_space<vmem>>, vector<1x8x64xbf16>
    %1 = vector.shape_cast %0 : vector<1x8x64xbf16> to vector<8x64xbf16>
    %2 = arith.extf %1 : vector<8x64xbf16> to vector<8x64xf32>
    %c0_2 = arith.constant 0 : index
    %c0_3 = arith.constant 0 : index
    %3 = vector.load %arg2[%c0_2, %c0_3] : memref<2x64xf32, #tpu.memory_space<vmem>>, vector<1x64xf32>
    %4 = vector.broadcast %3 : vector<1x64xf32> to vector<8x64xf32>
    %5 = arith.mulf %2, %4 : vector<8x64xf32>
    %c1 = arith.constant 1 : index
    %c0_4 = arith.constant 0 : index
    %6 = vector.load %arg2[%c1, %c0_4] : memref<2x64xf32, #tpu.memory_space<vmem>>, vector<1x64xf32>
    %7 = vector.broadcast %6 : vector<1x64xf32> to vector<8x64xf32>
    %8 = arith.addf %5, %7 : vector<8x64xf32>
    %cst = arith.constant 0.000000e+00 : f32
    %9 = vector.broadcast %cst : f32 to vector<8x64xf32>
    %10 = arith.maximumf %8, %9 : vector<8x64xf32>
    %cst_5 = arith.constant 0.000000e+00 : bf16
    %11 = vector.broadcast %cst_5 : bf16 to vector<10x64xbf16>
    %c0_6 = arith.constant 0 : index
    %c0_7 = arith.constant 0 : index
    %12 = vector.load %arg7[%c0_6, %c0_7] : memref<10x64xbf16, #tpu.memory_space<vmem>>, vector<10x64xbf16>
    tpu.vector_store %arg7[%c0_6, %c0_7], %11 {strides = array<i32>} : memref<10x64xbf16, #tpu.memory_space<vmem>>, vector<10x64xbf16>,
    %13 = arith.truncf %10 : vector<8x64xf32> to vector<8x64xbf16>
    %c1_8 = arith.constant 1 : index
    %c0_9 = arith.constant 0 : index
    %14 = vector.load %arg7[%c1_8, %c0_9] : memref<10x64xbf16, #tpu.memory_space<vmem>>, vector<8x64xbf16>
    tpu.vector_store %arg7[%c1_8, %c0_9], %13 {strides = array<i32>} : memref<10x64xbf16, #tpu.memory_space<vmem>>, vector<8x64xbf16>,
    %c0_10 = arith.constant 0 : index
    %c0_11 = arith.constant 0 : index
    %15 = vector.load %arg7[%c0_10, %c0_11] : memref<10x64xbf16, #tpu.memory_space<vmem>>, vector<10x64xbf16>
    %cst_12 = arith.constant 0.000000e+00 : f32
    %16 = vector.broadcast %cst_12 : f32 to vector<8x64xf32>
    %17 = vector.extract_strided_slice %15 {offsets = [0, 0], sizes = [8, 64], strides = [1, 1]} : vector<10x64xbf16> to vector<8x64xbf16>
    %c0_13 = arith.constant 0 : index
    %c0_14 = arith.constant 0 : index
    %c0_15 = arith.constant 0 : index
    %18 = vector.load %arg3[%c0_13, %c0_14, %c0_15] : memref<3x64x64xbf16, #tpu.memory_space<vmem>>, vector<1x64x64xbf16>
    %19 = vector.shape_cast %18 : vector<1x64x64xbf16> to vector<64x64xbf16>
    %cst_16 = arith.constant dense<0.000000e+00> : vector<8x64xf32>
    %20 = tpu.matmul %17, %19, %cst_16 {dimension_numbers = #tpu.dot_dimension_numbers<[1], [0], [0], [1], [0, 0, 1, 1], [], []>} : vector<8x64xbf16>, vector<64x64xbf16>, vector<8x64xf32> -> vector<8x64xf32>
    %21 = arith.addf %16, %20 : vector<8x64xf32>
    %22 = vector.extract_strided_slice %15 {offsets = [1, 0], sizes = [8, 64], strides = [1, 1]} : vector<10x64xbf16> to vector<8x64xbf16>
    %c1_17 = arith.constant 1 : index
    %c0_18 = arith.constant 0 : index
    %c0_19 = arith.constant 0 : index
    %23 = vector.load %arg3[%c1_17, %c0_18, %c0_19] : memref<3x64x64xbf16, #tpu.memory_space<vmem>>, vector<1x64x64xbf16>
    %24 = vector.shape_cast %23 : vector<1x64x64xbf16> to vector<64x64xbf16>
    %cst_20 = arith.constant dense<0.000000e+00> : vector<8x64xf32>
    %25 = tpu.matmul %22, %24, %cst_20 {dimension_numbers = #tpu.dot_dimension_numbers<[1], [0], [0], [1], [0, 0, 1, 1], [], []>} : vector<8x64xbf16>, vector<64x64xbf16>, vector<8x64xf32> -> vector<8x64xf32>
    %26 = arith.addf %21, %25 : vector<8x64xf32>
    %27 = vector.extract_strided_slice %15 {offsets = [2, 0], sizes = [8, 64], strides = [1, 1]} : vector<10x64xbf16> to vector<8x64xbf16>
    %c2 = arith.constant 2 : index
    %c0_21 = arith.constant 0 : index
    %c0_22 = arith.constant 0 : index
    %28 = vector.load %arg3[%c2, %c0_21, %c0_22] : memref<3x64x64xbf16, #tpu.memory_space<vmem>>, vector<1x64x64xbf16>
    %29 = vector.shape_cast %28 : vector<1x64x64xbf16> to vector<64x64xbf16>
    %cst_23 = arith.constant dense<0.000000e+00> : vector<8x64xf32>
    %30 = tpu.matmul %27, %29, %cst_23 {dimension_numbers = #tpu.dot_dimension_numbers<[1], [0], [0], [1], [0, 0, 1, 1], [], []>} : vector<8x64xbf16>, vector<64x64xbf16>, vector<8x64xf32> -> vector<8x64xf32>
    %31 = arith.addf %26, %30 : vector<8x64xf32>
    %c0_24 = arith.constant 0 : index
    %c0_25 = arith.constant 0 : index
    %c0_26 = arith.constant 0 : index
    %32 = vector.load %arg4[%c0_24, %c0_25, %c0_26] : memref<1x8x64xbf16, #tpu.memory_space<vmem>>, vector<1x8x64xbf16>
    %33 = vector.shape_cast %32 : vector<1x8x64xbf16> to vector<8x64xbf16>
    %34 = arith.extf %33 : vector<8x64xbf16> to vector<8x64xf32>
    %35 = arith.addf %31, %34 : vector<8x64xf32>
    %36 = arith.truncf %35 : vector<8x64xf32> to vector<8x64xbf16>
    %c0_27 = arith.constant 0 : index
    %c0_28 = arith.constant 0 : index
    %c0_29 = arith.constant 0 : index
    %37 = vector.load %arg5[%c0_27, %c0_28, %c0_29] : memref<1x8x64xbf16, #tpu.memory_space<vmem>>, vector<1x8x64xbf16>
    %38 = vector.shape_cast %37 : vector<1x8x64xbf16> to vector<8x64xbf16>
    %39 = vector.shape_cast %36 : vector<8x64xbf16> to vector<1x8x64xbf16>
    tpu.vector_store %arg5[%c0_27, %c0_28, %c0_29], %39 {strides = array<i32>} : memref<1x8x64xbf16, #tpu.memory_space<vmem>>, vector<1x8x64xbf16>,
    %cst_30 = arith.constant dense<0.000000e+00> : vector<64xf32>
    %40 = vector.multi_reduction <add>, %35, %cst_30 [0] : vector<8x64xf32> to vector<64xf32>
    %41 = vector.shape_cast %40 : vector<64xf32> to vector<1x64xf32>
    %42 = arith.mulf %35, %35 : vector<8x64xf32>
    %cst_31 = arith.constant dense<0.000000e+00> : vector<64xf32>
    %43 = vector.multi_reduction <add>, %42, %cst_31 [0] : vector<8x64xf32> to vector<64xf32>
    %44 = vector.shape_cast %43 : vector<64xf32> to vector<1x64xf32>
    %45 = tpu.concatenate %41, %44 in 0 : vector<1x64xf32>, vector<1x64xf32> -> vector<2x64xf32>
    %c0_32 = arith.constant 0 : index
    %c0_33 = arith.constant 0 : index
    %c0_34 = arith.constant 0 : index
    %46 = vector.load %arg6[%c0_32, %c0_33, %c0_34] : memref<1x2x64xf32, #tpu.memory_space<vmem>>, vector<1x2x64xf32>
    %47 = vector.shape_cast %46 : vector<1x2x64xf32> to vector<2x64xf32>
    %48 = vector.shape_cast %45 : vector<2x64xf32> to vector<1x2x64xf32>
    tpu.vector_store %arg6[%c0_32, %c0_33, %c0_34], %48 {strides = array<i32>} : memref<1x2x64xf32, #tpu.memory_space<vmem>>, vector<1x2x64xf32>,
    return
  }
  func.func @transform_0(%arg0: i32) -> (i32, i32, i32) {
    %c0_i32 = arith.constant 0 : i32
    %c0_i32_0 = arith.constant 0 : i32
    %c0_i32_1 = arith.constant 0 : i32
    return %arg0, %c0_i32, %c0_i32_0 : i32, i32, i32
  }
  func.func @transform_1(%arg0: i32) -> (i32, i32) {
    %c0_i32 = arith.constant 0 : i32
    %c0_i32_0 = arith.constant 0 : i32
    %c0_i32_1 = arith.constant 0 : i32
    return %c0_i32, %c0_i32_0 : i32, i32
  }
  func.func @transform_2(%arg0: i32) -> (i32, i32, i32) {
    %c0_i32 = arith.constant 0 : i32
    %c0_i32_0 = arith.constant 0 : i32
    %c0_i32_1 = arith.constant 0 : i32
    %c0_i32_2 = arith.constant 0 : i32
    return %c0_i32, %c0_i32_0, %c0_i32_1 : i32, i32, i32
  }
  func.func @transform_3(%arg0: i32) -> (i32, i32, i32) {
    %c0_i32 = arith.constant 0 : i32
    %c0_i32_0 = arith.constant 0 : i32
    %c0_i32_1 = arith.constant 0 : i32
    return %arg0, %c0_i32, %c0_i32_0 : i32, i32, i32
  }
  func.func @transform_4(%arg0: i32) -> (i32, i32, i32) {
    %c0_i32 = arith.constant 0 : i32
    %c0_i32_0 = arith.constant 0 : i32
    %c0_i32_1 = arith.constant 0 : i32
    return %arg0, %c0_i32, %c0_i32_0 : i32, i32, i32
  }
  func.func @transform_5(%arg0: i32) -> (i32, i32, i32) {
    %c0_i32 = arith.constant 0 : i32
    %c0_i32_0 = arith.constant 0 : i32
    %c0_i32_1 = arith.constant 0 : i32
    return %arg0, %c0_i32, %c0_i32_0 : i32, i32, i32
  }
}

module attributes {stable_mosaic.version = 11 : i64} {
  func.func @kernel(%arg0: i32, %arg1: memref<1x8x64xbf16, #tpu.memory_space<vmem>>, %arg2: memref<2x64xf32, #tpu.memory_space<vmem>>, %arg3: memref<3x64x64xbf16, #tpu.memory_space<vmem>>, %arg4: memref<1x8x64xbf16, #tpu.memory_space<vmem>>, %arg5: memref<1x8x64xbf16, #tpu.memory_space<vmem>>, %arg6: memref<10x64xbf16, #tpu.memory_space<vmem>>) attributes {dimension_semantics = [#tpu.dimension_semantics<parallel>], iteration_bounds = array<i64: 2>, scalar_prefetch = 0 : i64, scratch_operands = 1 : i64, tpu.core_type = #tpu.core_type<tc>, window_params = [{transform_indices = @transform_0, window_bounds = array<i64: 1, 8, 64>}, {pipeline_mode = #tpu.pipeline_mode<synchronous>, transform_indices = @transform_1, window_bounds = array<i64: 2, 64>}, {pipeline_mode = #tpu.pipeline_mode<synchronous>, transform_indices = @transform_2, window_bounds = array<i64: 3, 64, 64>}, {transform_indices = @transform_3, window_bounds = array<i64: 1, 8, 64>}, {transform_indices = @transform_4, window_bounds = array<i64: 1, 8, 64>}]} {
    %c0 = arith.constant 0 : index
    %c0_0 = arith.constant 0 : index
    %c0_1 = arith.constant 0 : index
    %0 = vector.load %arg1[%c0, %c0_0, %c0_1] : memref<1x8x64xbf16, #tpu.memory_space<vmem>>, vector<1x8x64xbf16>
    %1 = vector.shape_cast %0 : vector<1x8x64xbf16> to vector<8x64xbf16>
    %2 = arith.extf %1 : vector<8x64xbf16> to vector<8x64xf32>
    %c0_2 = arith.constant 0 : index
    %c0_3 = arith.constant 0 : index
    %3 = vector.load %arg2[%c0_2, %c0_3] : memref<2x64xf32, #tpu.memory_space<vmem>>, vector<1x64xf32>
    %4 = vector.broadcast %3 : vector<1x64xf32> to vector<8x64xf32>
    %5 = arith.mulf %2, %4 : vector<8x64xf32>
    %c1 = arith.constant 1 : index
    %c0_4 = arith.constant 0 : index
    %6 = vector.load %arg2[%c1, %c0_4] : memref<2x64xf32, #tpu.memory_space<vmem>>, vector<1x64xf32>
    %7 = vector.broadcast %6 : vector<1x64xf32> to vector<8x64xf32>
    %8 = arith.addf %5, %7 : vector<8x64xf32>
    %cst = arith.constant 0.000000e+00 : f32
    %9 = vector.broadcast %cst : f32 to vector<8x64xf32>
    %10 = arith.maximumf %8, %9 : vector<8x64xf32>
    %cst_5 = arith.constant 0.000000e+00 : bf16
    %11 = vector.broadcast %cst_5 : bf16 to vector<10x64xbf16>
    %c0_6 = arith.constant 0 : index
    %c0_7 = arith.constant 0 : index
    %12 = vector.load %arg6[%c0_6, %c0_7] : memref<10x64xbf16, #tpu.memory_space<vmem>>, vector<10x64xbf16>
    tpu.vector_store %arg6[%c0_6, %c0_7], %11 {strides = array<i32>} : memref<10x64xbf16, #tpu.memory_space<vmem>>, vector<10x64xbf16>,
    %13 = arith.truncf %10 : vector<8x64xf32> to vector<8x64xbf16>
    %c1_8 = arith.constant 1 : index
    %c0_9 = arith.constant 0 : index
    %14 = vector.load %arg6[%c1_8, %c0_9] : memref<10x64xbf16, #tpu.memory_space<vmem>>, vector<8x64xbf16>
    tpu.vector_store %arg6[%c1_8, %c0_9], %13 {strides = array<i32>} : memref<10x64xbf16, #tpu.memory_space<vmem>>, vector<8x64xbf16>,
    %c0_10 = arith.constant 0 : index
    %c0_11 = arith.constant 0 : index
    %15 = vector.load %arg6[%c0_10, %c0_11] : memref<10x64xbf16, #tpu.memory_space<vmem>>, vector<10x64xbf16>
    %cst_12 = arith.constant 0.000000e+00 : f32
    %16 = vector.broadcast %cst_12 : f32 to vector<8x64xf32>
    %17 = vector.extract_strided_slice %15 {offsets = [0, 0], sizes = [8, 64], strides = [1, 1]} : vector<10x64xbf16> to vector<8x64xbf16>
    %c0_13 = arith.constant 0 : index
    %c0_14 = arith.constant 0 : index
    %c0_15 = arith.constant 0 : index
    %18 = vector.load %arg3[%c0_13, %c0_14, %c0_15] : memref<3x64x64xbf16, #tpu.memory_space<vmem>>, vector<1x64x64xbf16>
    %19 = vector.shape_cast %18 : vector<1x64x64xbf16> to vector<64x64xbf16>
    %cst_16 = arith.constant dense<0.000000e+00> : vector<8x64xf32>
    %20 = tpu.matmul %17, %19, %cst_16 {dimension_numbers = #tpu.dot_dimension_numbers<[1], [0], [0], [1], [0, 0, 1, 1], [], []>} : vector<8x64xbf16>, vector<64x64xbf16>, vector<8x64xf32> -> vector<8x64xf32>
    %21 = arith.addf %16, %20 : vector<8x64xf32>
    %22 = vector.extract_strided_slice %15 {offsets = [1, 0], sizes = [8, 64], strides = [1, 1]} : vector<10x64xbf16> to vector<8x64xbf16>
    %c1_17 = arith.constant 1 : index
    %c0_18 = arith.constant 0 : index
    %c0_19 = arith.constant 0 : index
    %23 = vector.load %arg3[%c1_17, %c0_18, %c0_19] : memref<3x64x64xbf16, #tpu.memory_space<vmem>>, vector<1x64x64xbf16>
    %24 = vector.shape_cast %23 : vector<1x64x64xbf16> to vector<64x64xbf16>
    %cst_20 = arith.constant dense<0.000000e+00> : vector<8x64xf32>
    %25 = tpu.matmul %22, %24, %cst_20 {dimension_numbers = #tpu.dot_dimension_numbers<[1], [0], [0], [1], [0, 0, 1, 1], [], []>} : vector<8x64xbf16>, vector<64x64xbf16>, vector<8x64xf32> -> vector<8x64xf32>
    %26 = arith.addf %21, %25 : vector<8x64xf32>
    %27 = vector.extract_strided_slice %15 {offsets = [2, 0], sizes = [8, 64], strides = [1, 1]} : vector<10x64xbf16> to vector<8x64xbf16>
    %c2 = arith.constant 2 : index
    %c0_21 = arith.constant 0 : index
    %c0_22 = arith.constant 0 : index
    %28 = vector.load %arg3[%c2, %c0_21, %c0_22] : memref<3x64x64xbf16, #tpu.memory_space<vmem>>, vector<1x64x64xbf16>
    %29 = vector.shape_cast %28 : vector<1x64x64xbf16> to vector<64x64xbf16>
    %cst_23 = arith.constant dense<0.000000e+00> : vector<8x64xf32>
    %30 = tpu.matmul %27, %29, %cst_23 {dimension_numbers = #tpu.dot_dimension_numbers<[1], [0], [0], [1], [0, 0, 1, 1], [], []>} : vector<8x64xbf16>, vector<64x64xbf16>, vector<8x64xf32> -> vector<8x64xf32>
    %31 = arith.addf %26, %30 : vector<8x64xf32>
    %c0_24 = arith.constant 0 : index
    %c0_25 = arith.constant 0 : index
    %c0_26 = arith.constant 0 : index
    %32 = vector.load %arg4[%c0_24, %c0_25, %c0_26] : memref<1x8x64xbf16, #tpu.memory_space<vmem>>, vector<1x8x64xbf16>
    %33 = vector.shape_cast %32 : vector<1x8x64xbf16> to vector<8x64xbf16>
    %34 = arith.extf %33 : vector<8x64xbf16> to vector<8x64xf32>
    %35 = arith.addf %31, %34 : vector<8x64xf32>
    %36 = arith.truncf %35 : vector<8x64xf32> to vector<8x64xbf16>
    %c0_27 = arith.constant 0 : index
    %c0_28 = arith.constant 0 : index
    %c0_29 = arith.constant 0 : index
    %37 = vector.load %arg5[%c0_27, %c0_28, %c0_29] : memref<1x8x64xbf16, #tpu.memory_space<vmem>>, vector<1x8x64xbf16>
    %38 = vector.shape_cast %37 : vector<1x8x64xbf16> to vector<8x64xbf16>
    %39 = vector.shape_cast %36 : vector<8x64xbf16> to vector<1x8x64xbf16>
    tpu.vector_store %arg5[%c0_27, %c0_28, %c0_29], %39 {strides = array<i32>} : memref<1x8x64xbf16, #tpu.memory_space<vmem>>, vector<1x8x64xbf16>,
    return
  }
  func.func @transform_0(%arg0: i32) -> (i32, i32, i32) {
    %c0_i32 = arith.constant 0 : i32
    %c0_i32_0 = arith.constant 0 : i32
    %c0_i32_1 = arith.constant 0 : i32
    return %arg0, %c0_i32, %c0_i32_0 : i32, i32, i32
  }
  func.func @transform_1(%arg0: i32) -> (i32, i32) {
    %c0_i32 = arith.constant 0 : i32
    %c0_i32_0 = arith.constant 0 : i32
    %c0_i32_1 = arith.constant 0 : i32
    return %c0_i32, %c0_i32_0 : i32, i32
  }
  func.func @transform_2(%arg0: i32) -> (i32, i32, i32) {
    %c0_i32 = arith.constant 0 : i32
    %c0_i32_0 = arith.constant 0 : i32
    %c0_i32_1 = arith.constant 0 : i32
    %c0_i32_2 = arith.constant 0 : i32
    return %c0_i32, %c0_i32_0, %c0_i32_1 : i32, i32, i32
  }
  func.func @transform_3(%arg0: i32) -> (i32, i32, i32) {
    %c0_i32 = arith.constant 0 : i32
    %c0_i32_0 = arith.constant 0 : i32
    %c0_i32_1 = arith.constant 0 : i32
    return %arg0, %c0_i32, %c0_i32_0 : i32, i32, i32
  }
  func.func @transform_4(%arg0: i32) -> (i32, i32, i32) {
    %c0_i32 = arith.constant 0 : i32
    %c0_i32_0 = arith.constant 0 : i32
    %c0_i32_1 = arith.constant 0 : i32
    return %arg0, %c0_i32, %c0_i32_0 : i32, i32, i32
  }
}

module attributes {stable_mosaic.version = 11 : i64} {
  func.func @kernel(%arg0: i32, %arg1: memref<1x8x64xbf16, #tpu.memory_space<vmem>>, %arg2: memref<2x64xf32, #tpu.memory_space<vmem>>, %arg3: memref<3x64x64xbf16, #tpu.memory_space<vmem>>, %arg4: memref<1x8x64xbf16, #tpu.memory_space<vmem>>, %arg5: memref<1x2x64xf32, #tpu.memory_space<vmem>>, %arg6: memref<10x64xbf16, #tpu.memory_space<vmem>>) attributes {dimension_semantics = [#tpu.dimension_semantics<parallel>], iteration_bounds = array<i64: 2>, scalar_prefetch = 0 : i64, scratch_operands = 1 : i64, tpu.core_type = #tpu.core_type<tc>, window_params = [{transform_indices = @transform_0, window_bounds = array<i64: 1, 8, 64>}, {pipeline_mode = #tpu.pipeline_mode<synchronous>, transform_indices = @transform_1, window_bounds = array<i64: 2, 64>}, {pipeline_mode = #tpu.pipeline_mode<synchronous>, transform_indices = @transform_2, window_bounds = array<i64: 3, 64, 64>}, {transform_indices = @transform_3, window_bounds = array<i64: 1, 8, 64>}, {transform_indices = @transform_4, window_bounds = array<i64: 1, 2, 64>}]} {
    %c0 = arith.constant 0 : index
    %c0_0 = arith.constant 0 : index
    %c0_1 = arith.constant 0 : index
    %0 = vector.load %arg1[%c0, %c0_0, %c0_1] : memref<1x8x64xbf16, #tpu.memory_space<vmem>>, vector<1x8x64xbf16>
    %1 = vector.shape_cast %0 : vector<1x8x64xbf16> to vector<8x64xbf16>
    %2 = arith.extf %1 : vector<8x64xbf16> to vector<8x64xf32>
    %c0_2 = arith.constant 0 : index
    %c0_3 = arith.constant 0 : index
    %3 = vector.load %arg2[%c0_2, %c0_3] : memref<2x64xf32, #tpu.memory_space<vmem>>, vector<1x64xf32>
    %4 = vector.broadcast %3 : vector<1x64xf32> to vector<8x64xf32>
    %5 = arith.mulf %2, %4 : vector<8x64xf32>
    %c1 = arith.constant 1 : index
    %c0_4 = arith.constant 0 : index
    %6 = vector.load %arg2[%c1, %c0_4] : memref<2x64xf32, #tpu.memory_space<vmem>>, vector<1x64xf32>
    %7 = vector.broadcast %6 : vector<1x64xf32> to vector<8x64xf32>
    %8 = arith.addf %5, %7 : vector<8x64xf32>
    %cst = arith.constant 0.000000e+00 : f32
    %9 = vector.broadcast %cst : f32 to vector<8x64xf32>
    %10 = arith.maximumf %8, %9 : vector<8x64xf32>
    %cst_5 = arith.constant 0.000000e+00 : bf16
    %11 = vector.broadcast %cst_5 : bf16 to vector<10x64xbf16>
    %c0_6 = arith.constant 0 : index
    %c0_7 = arith.constant 0 : index
    %12 = vector.load %arg6[%c0_6, %c0_7] : memref<10x64xbf16, #tpu.memory_space<vmem>>, vector<10x64xbf16>
    tpu.vector_store %arg6[%c0_6, %c0_7], %11 {strides = array<i32>} : memref<10x64xbf16, #tpu.memory_space<vmem>>, vector<10x64xbf16>,
    %13 = arith.truncf %10 : vector<8x64xf32> to vector<8x64xbf16>
    %c1_8 = arith.constant 1 : index
    %c0_9 = arith.constant 0 : index
    %14 = vector.load %arg6[%c1_8, %c0_9] : memref<10x64xbf16, #tpu.memory_space<vmem>>, vector<8x64xbf16>
    tpu.vector_store %arg6[%c1_8, %c0_9], %13 {strides = array<i32>} : memref<10x64xbf16, #tpu.memory_space<vmem>>, vector<8x64xbf16>,
    %c0_10 = arith.constant 0 : index
    %c0_11 = arith.constant 0 : index
    %15 = vector.load %arg6[%c0_10, %c0_11] : memref<10x64xbf16, #tpu.memory_space<vmem>>, vector<10x64xbf16>
    %cst_12 = arith.constant 0.000000e+00 : f32
    %16 = vector.broadcast %cst_12 : f32 to vector<8x64xf32>
    %17 = vector.extract_strided_slice %15 {offsets = [0, 0], sizes = [8, 64], strides = [1, 1]} : vector<10x64xbf16> to vector<8x64xbf16>
    %c0_13 = arith.constant 0 : index
    %c0_14 = arith.constant 0 : index
    %c0_15 = arith.constant 0 : index
    %18 = vector.load %arg3[%c0_13, %c0_14, %c0_15] : memref<3x64x64xbf16, #tpu.memory_space<vmem>>, vector<1x64x64xbf16>
    %19 = vector.shape_cast %18 : vector<1x64x64xbf16> to vector<64x64xbf16>
    %cst_16 = arith.constant dense<0.000000e+00> : vector<8x64xf32>
    %20 = tpu.matmul %17, %19, %cst_16 {dimension_numbers = #tpu.dot_dimension_numbers<[1], [0], [0], [1], [0, 0, 1, 1], [], []>} : vector<8x64xbf16>, vector<64x64xbf16>, vector<8x64xf32> -> vector<8x64xf32>
    %21 = arith.addf %16, %20 : vector<8x64xf32>
    %22 = vector.extract_strided_slice %15 {offsets = [1, 0], sizes = [8, 64], strides = [1, 1]} : vector<10x64xbf16> to vector<8x64xbf16>
    %c1_17 = arith.constant 1 : index
    %c0_18 = arith.constant 0 : index
    %c0_19 = arith.constant 0 : index
    %23 = vector.load %arg3[%c1_17, %c0_18, %c0_19] : memref<3x64x64xbf16, #tpu.memory_space<vmem>>, vector<1x64x64xbf16>
    %24 = vector.shape_cast %23 : vector<1x64x64xbf16> to vector<64x64xbf16>
    %cst_20 = arith.constant dense<0.000000e+00> : vector<8x64xf32>
    %25 = tpu.matmul %22, %24, %cst_20 {dimension_numbers = #tpu.dot_dimension_numbers<[1], [0], [0], [1], [0, 0, 1, 1], [], []>} : vector<8x64xbf16>, vector<64x64xbf16>, vector<8x64xf32> -> vector<8x64xf32>
    %26 = arith.addf %21, %25 : vector<8x64xf32>
    %27 = vector.extract_strided_slice %15 {offsets = [2, 0], sizes = [8, 64], strides = [1, 1]} : vector<10x64xbf16> to vector<8x64xbf16>
    %c2 = arith.constant 2 : index
    %c0_21 = arith.constant 0 : index
    %c0_22 = arith.constant 0 : index
    %28 = vector.load %arg3[%c2, %c0_21, %c0_22] : memref<3x64x64xbf16, #tpu.memory_space<vmem>>, vector<1x64x64xbf16>
    %29 = vector.shape_cast %28 : vector<1x64x64xbf16> to vector<64x64xbf16>
    %cst_23 = arith.constant dense<0.000000e+00> : vector<8x64xf32>
    %30 = tpu.matmul %27, %29, %cst_23 {dimension_numbers = #tpu.dot_dimension_numbers<[1], [0], [0], [1], [0, 0, 1, 1], [], []>} : vector<8x64xbf16>, vector<64x64xbf16>, vector<8x64xf32> -> vector<8x64xf32>
    %31 = arith.addf %26, %30 : vector<8x64xf32>
    %32 = arith.truncf %31 : vector<8x64xf32> to vector<8x64xbf16>
    %c0_24 = arith.constant 0 : index
    %c0_25 = arith.constant 0 : index
    %c0_26 = arith.constant 0 : index
    %33 = vector.load %arg4[%c0_24, %c0_25, %c0_26] : memref<1x8x64xbf16, #tpu.memory_space<vmem>>, vector<1x8x64xbf16>
    %34 = vector.shape_cast %33 : vector<1x8x64xbf16> to vector<8x64xbf16>
    %35 = vector.shape_cast %32 : vector<8x64xbf16> to vector<1x8x64xbf16>
    tpu.vector_store %arg4[%c0_24, %c0_25, %c0_26], %35 {strides = array<i32>} : memref<1x8x64xbf16, #tpu.memory_space<vmem>>, vector<1x8x64xbf16>,
    %cst_27 = arith.constant dense<0.000000e+00> : vector<64xf32>
    %36 = vector.multi_reduction <add>, %31, %cst_27 [0] : vector<8x64xf32> to vector<64xf32>
    %37 = vector.shape_cast %36 : vector<64xf32> to vector<1x64xf32>
    %38 = arith.mulf %31, %31 : vector<8x64xf32>
    %cst_28 = arith.constant dense<0.000000e+00> : vector<64xf32>
    %39 = vector.multi_reduction <add>, %38, %cst_28 [0] : vector<8x64xf32> to vector<64xf32>
    %40 = vector.shape_cast %39 : vector<64xf32> to vector<1x64xf32>
    %41 = tpu.concatenate %37, %40 in 0 : vector<1x64xf32>, vector<1x64xf32> -> vector<2x64xf32>
    %c0_29 = arith.constant 0 : index
    %c0_30 = arith.constant 0 : index
    %c0_31 = arith.constant 0 : index
    %42 = vector.load %arg5[%c0_29, %c0_30, %c0_31] : memref<1x2x64xf32, #tpu.memory_space<vmem>>, vector<1x2x64xf32>
    %43 = vector.shape_cast %42 : vector<1x2x64xf32> to vector<2x64xf32>
    %44 = vector.shape_cast %41 : vector<2x64xf32> to vector<1x2x64xf32>
    tpu.vector_store %arg5[%c0_29, %c0_30, %c0_31], %44 {strides = array<i32>} : memref<1x2x64xf32, #tpu.memory_space<vmem>>, vector<1x2x64xf32>,
    return
  }
  func.func @transform_0(%arg0: i32) -> (i32, i32, i32) {
    %c0_i32 = arith.constant 0 : i32
    %c0_i32_0 = arith.constant 0 : i32
    %c0_i32_1 = arith.constant 0 : i32
    return %arg0, %c0_i32, %c0_i32_0 : i32, i32, i32
  }
  func.func @transform_1(%arg0: i32) -> (i32, i32) {
    %c0_i32 = arith.constant 0 : i32
    %c0_i32_0 = arith.constant 0 : i32
    %c0_i32_1 = arith.constant 0 : i32
    return %c0_i32, %c0_i32_0 : i32, i32
  }
  func.func @transform_2(%arg0: i32) -> (i32, i32, i32) {
    %c0_i32 = arith.constant 0 : i32
    %c0_i32_0 = arith.constant 0 : i32
    %c0_i32_1 = arith.constant 0 : i32
    %c0_i32_2 = arith.constant 0 : i32
    return %c0_i32, %c0_i32_0, %c0_i32_1 : i32, i32, i32
  }
  func.func @transform_3(%arg0: i32) -> (i32, i32, i32) {
    %c0_i32 = arith.constant 0 : i32
    %c0_i32_0 = arith.constant 0 : i32
    %c0_i32_1 = arith.constant 0 : i32
    return %arg0, %c0_i32, %c0_i32_0 : i32, i32, i32
  }
  func.func @transform_4(%arg0: i32) -> (i32, i32, i32) {
    %c0_i32 = arith.constant 0 : i32
    %c0_i32_0 = arith.constant 0 : i32
    %c0_i32_1 = arith.constant 0 : i32
    return %arg0, %c0_i32, %c0_i32_0 : i32, i32, i32
  }
}

</mosaic_0001>

<llo_original>
// kernel: tile.43
$region0: #{tile.43}
  #allocation0 [shape = 's32[1]{0}', space=sflag, size = 0x4, scoped, tag = 'scoped memory for tile.43']
  %s0 = inlined_call_operand.vmem [shape: f32[4], index: 0, kind: input, shape index: {}]
  %s1 = inlined_call_operand.vmem [shape: f32[16,4], index: 1, kind: output, shape index: {}]
  // Predicated region
  $region2: #{tile.43} parent=0 // pred_check
    _
  $region3: #{tile.43} parent=0 // pred_check_branch
    %3 = sbr.rel (0) target = $region5
  $region4: #{tile.43} parent=0 // pred_region
    _
  $region5: #{tile.43} parent=0 // pred_fallthru
    _
  %v4 = vld [vmem:[%s0] ss:$0 sm:$0xff]
  %5 = vst [vmem:[%s1] sm:$0xff] %v4
  %s6 = scalar_lea.vmem %s1, 8
  %7 = vst [vmem:[%s6] sm:$0xff] %v4

// kernel: tile.48
$region0: #{tile.48}
  %s0 = inlined_call_operand.vmem [shape: f32[16,4], index: 0, kind: input, shape index: {}]
  %s1 = inlined_call_operand.vmem [shape: f32[1,64], index: 1, kind: output, shape index: {}]
  $region1: #{tile.48} parent=0
    #allocation0 [shape = 'u8[4096]{0}', space=vmem, size = 0x1000, scoped, tag = 'scoped mem for output reshape']
    %v2 = vld [vmem:[%s0] sm:$0x1]
    %vm3 = vcmask 31744
    %4 = vst.msk [vmem:[#allocation0] sm:$0x1] %vm3, %v2
    %s5 = scalar_lea.vmem %s0, 15
    %v6 = vld [vmem:[%s5] sm:$0x1]
    %7 = vrot.lane.b32.xlu0 %v6, 60
    %v8 = vpop.permute.xlu0 %7
    %vm9 = vcmask 523744
    %10 = vst.msk [vmem:[#allocation0] sm:$0x1] %vm9, %v8
    %s11 = scalar_lea.vmem %s0, 14
    %v12 = vld [vmem:[%s11] sm:$0x1]
    %13 = vrot.lane.b32.xlu0 %v12, 56
    %v14 = vpop.permute.xlu0 %13
    %vm15 = vcmask 490944
    %16 = vst.msk [vmem:[#allocation0] sm:$0x1] %vm15, %v14
    %s17 = scalar_lea.vmem %s0, 13
    %v18 = vld [vmem:[%s17] sm:$0x1]
    %19 = vrot.lane.b32.xlu0 %v18, 52
    %v20 = vpop.permute.xlu0 %19
    %vm21 = vcmask 458144
    %22 = vst.msk [vmem:[#allocation0] sm:$0x1] %vm21, %v20
    %s23 = scalar_lea.vmem %s0, 12
    %v24 = vld [vmem:[%s23] sm:$0x1]
    %25 = vrot.lane.b32.xlu0 %v24, 48
    %v26 = vpop.permute.xlu0 %25
    %vm27 = vcmask 425344
    %28 = vst.msk [vmem:[#allocation0] sm:$0x1] %vm27, %v26
    %s29 = scalar_lea.vmem %s0, 11
    %v30 = vld [vmem:[%s29] sm:$0x1]
    %31 = vrot.lane.b32.xlu0 %v30, 44
    %v32 = vpop.permute.xlu0 %31
    %vm33 = vcmask 392544
    %34 = vst.msk [vmem:[#allocation0] sm:$0x1] %vm33, %v32
    %s35 = scalar_lea.vmem %s0, 10
    %v36 = vld [vmem:[%s35] sm:$0x1]
    %37 = vrot.lane.b32.xlu0 %v36, 40
    %v38 = vpop.permute.xlu0 %37
    %vm39 = vcmask 359744
    %40 = vst.msk [vmem:[#allocation0] sm:$0x1] %vm39, %v38
    %s41 = scalar_lea.vmem %s0, 9
    %v42 = vld [vmem:[%s41] sm:$0x1]
    %43 = vrot.lane.b32.xlu0 %v42, 36
    %v44 = vpop.permute.xlu0 %43
    %vm45 = vcmask 326944
    %46 = vst.msk [vmem:[#allocation0] sm:$0x1] %vm45, %v44
    %s47 = scalar_lea.vmem %s0, 8
    %v48 = vld [vmem:[%s47] sm:$0x1]
    %49 = vrot.lane.b32.xlu0 %v48, 32
    %v50 = vpop.permute.xlu0 %49
    %vm51 = vcmask 294144
    %52 = vst.msk [vmem:[#allocation0] sm:$0x1] %vm51, %v50
    %s53 = scalar_lea.vmem %s0, 7
    %v54 = vld [vmem:[%s53] sm:$0x1]
    %55 = vrot.lane.b32.xlu0 %v54, 28
    %v56 = vpop.permute.xlu0 %55
    %vm57 = vcmask 261344
    %58 = vst.msk [vmem:[#allocation0] sm:$0x1] %vm57, %v56
    %s59 = scalar_lea.vmem %s0, 6
    %v60 = vld [vmem:[%s59] sm:$0x1]
    %61 = vrot.lane.b32.xlu0 %v60, 24
    %v62 = vpop.permute.xlu0 %61
    %vm63 = vcmask 228544
    %64 = vst.msk [vmem:[#allocation0] sm:$0x1] %vm63, %v62
    %s65 = scalar_lea.vmem %s0, 5
    %v66 = vld [vmem:[%s65] sm:$0x1]
    %67 = vrot.lane.b32.xlu0 %v66, 20
    %v68 = vpop.permute.xlu0 %67
    %vm69 = vcmask 195744
    %70 = vst.msk [vmem:[#allocation0] sm:$0x1] %vm69, %v68
    %s71 = scalar_lea.vmem %s0, 4
    %v72 = vld [vmem:[%s71] sm:$0x1]
    %73 = vrot.lane.b32.xlu0 %v72, 16
    %v74 = vpop.permute.xlu0 %73
    %vm75 = vcmask 162944
    %76 = vst.msk [vmem:[#allocation0] sm:$0x1] %vm75, %v74
    %s77 = scalar_lea.vmem %s0, 3
    %v78 = vld [vmem:[%s77] sm:$0x1]
    %79 = vrot.lane.b32.xlu0 %v78, 12
    %v80 = vpop.permute.xlu0 %79
    %vm81 = vcmask 130144
    %82 = vst.msk [vmem:[#allocation0] sm:$0x1] %vm81, %v80
    %s83 = scalar_lea.vmem %s0, 2
    %v84 = vld [vmem:[%s83] sm:$0x1]
    %85 = vrot.lane.b32.xlu0 %v84, 8
    %v86 = vpop.permute.xlu0 %85
    %vm87 = vcmask 97344
    %88 = vst.msk [vmem:[#allocation0] sm:$0x1] %vm87, %v86
    %s89 = scalar_lea.vmem %s0, 1
    %v90 = vld [vmem:[%s89] sm:$0x1]
    %91 = vrot.lane.b32.xlu0 %v90, 4
    %v92 = vpop.permute.xlu0 %91
    %vm93 = vcmask 64544
    %94 = vst.msk [vmem:[#allocation0] sm:$0x1] %vm93, %v92
    %s96 = ssub.s32 2, 1
    %v97 = vld [vmem:[#allocation0] sm:%s96]
    %s99 = ssub.s32 2, 1
    %100 = vst [vmem:[%s1] sm:%s99] %v97

// kernel: tile.53
$region0: #{tile.53}
  #allocation0 [shape = 's32[1]{0}', space=sflag, size = 0x4, scoped, tag = 'scoped memory for tile.53']
  %s0 = inlined_call_operand.vmem [shape: f32[8], index: 0, kind: input, shape index: {}]
  %s1 = inlined_call_operand.vmem [shape: f32[8,8], index: 1, kind: output, shape index: {}]
  // Predicated region
  $region2: #{tile.53} parent=0 // pred_check
    _
  $region3: #{tile.53} parent=0 // pred_check_branch
    %3 = sbr.rel (0) target = $region5
  $region4: #{tile.53} parent=0 // pred_region
    _
  $region5: #{tile.53} parent=0 // pred_fallthru
    _
  %v4 = vld [vmem:[%s0] ss:$0 sm:$0xff]
  %5 = vst [vmem:[%s1] sm:$0xff] %v4

// kernel: tile.58
$region0: #{tile.58}
  %s0 = inlined_call_operand.vmem [shape: f32[8,8], index: 0, kind: input, shape index: {}]
  %s1 = inlined_call_operand.vmem [shape: f32[1,64], index: 1, kind: output, shape index: {}]
  $region1: #{tile.58} parent=0
    #allocation0 [shape = 'u8[4096]{0}', space=vmem, size = 0x1000, scoped, tag = 'scoped mem for output reshape']
    %v2 = vld [vmem:[%s0] sm:$0x1]
    %vm3 = vcmask 64512
    %4 = vst.msk [vmem:[#allocation0] sm:$0x1] %vm3, %v2
    %s5 = scalar_lea.vmem %s0, 7
    %v6 = vld [vmem:[%s5] sm:$0x1]
    %7 = vrot.lane.b32.xlu0 %v6, 56
    %v8 = vpop.permute.xlu0 %7
    %vm9 = vcmask 523712
    %10 = vst.msk [vmem:[#allocation0] sm:$0x1] %vm9, %v8
    %s11 = scalar_lea.vmem %s0, 6
    %v12 = vld [vmem:[%s11] sm:$0x1]
    %13 = vrot.lane.b32.xlu0 %v12, 48
    %v14 = vpop.permute.xlu0 %13
    %vm15 = vcmask 458112
    %16 = vst.msk [vmem:[#allocation0] sm:$0x1] %vm15, %v14
    %s17 = scalar_lea.vmem %s0, 5
    %v18 = vld [vmem:[%s17] sm:$0x1]
    %19 = vrot.lane.b32.xlu0 %v18, 40
    %v20 = vpop.permute.xlu0 %19
    %vm21 = vcmask 392512
    %22 = vst.msk [vmem:[#allocation0] sm:$0x1] %vm21, %v20
    %s23 = scalar_lea.vmem %s0, 4
    %v24 = vld [vmem:[%s23] sm:$0x1]
    %25 = vrot.lane.b32.xlu0 %v24, 32
    %v26 = vpop.permute.xlu0 %25
    %vm27 = vcmask 326912
    %28 = vst.msk [vmem:[#allocation0] sm:$0x1] %vm27, %v26
    %s29 = scalar_lea.vmem %s0, 3
    %v30 = vld [vmem:[%s29] sm:$0x1]
    %31 = vrot.lane.b32.xlu0 %v30, 24
    %v32 = vpop.permute.xlu0 %31
    %vm33 = vcmask 261312
    %34 = vst.msk [vmem:[#allocation0] sm:$0x1] %vm33, %v32
    %s35 = scalar_lea.vmem %s0, 2
    %v36 = vld [vmem:[%s35] sm:$0x1]
    %37 = vrot.lane.b32.xlu0 %v36, 16
    %v38 = vpop.permute.xlu0 %37
    %vm39 = vcmask 195712
    %40 = vst.msk [vmem:[#allocation0] sm:$0x1] %vm39, %v38
    %s41 = scalar_lea.vmem %s0, 1
    %v42 = vld [vmem:[%s41] sm:$0x1]
    %43 = vrot.lane.b32.xlu0 %v42, 8
    %v44 = vpop.permute.xlu0 %43
    %vm45 = vcmask 130112
    %46 = vst.msk [vmem:[#allocation0] sm:$0x1] %vm45, %v44
    %s48 = ssub.s32 2, 1
    %v49 = vld [vmem:[#allocation0] sm:%s48]
    %s51 = ssub.s32 2, 1
    %52 = vst [vmem:[%s1] sm:%s51] %v49

// kernel: _lambda_.5
$region0: #{_lambda_.5}
  #allocation0 [shape = 'u32[]', space=smem, size = 0x4, offset = 0x4, fixed_abs, tag = 'smem constant byte address 0x4 - core index']
  #allocation1 [shape = 'u32[72,128]{1,0:T(1,128)}', space=vmem, size = 0x9000, scoped, tag = 'internal scratch']
  %s0 = inlined_call_operand.vmem [shape: f32[32,64], index: 0, kind: input, shape index: {}]
  %s1 = inlined_call_operand.vmem [shape: f32[1,2,64], index: 1, kind: output, shape index: {}]
  %s2 = sld [smem:[#allocation0]]
  $region14: #{_lambda_.5} parent=0
    _
  %s4 = ssub.s32 1, %s2
  %s5 = scalar_select 0, %s4, %s2
  // Predicated region
  $region2: #{_lambda_.5} parent=0 // pred_check
    _
  $region3: #{_lambda_.5} parent=0 // pred_check_branch
    %7 = sbr.rel (0) target = $region5
  $region4: #{_lambda_.5} parent=0 // pred_region
    _
  $region5: #{_lambda_.5} parent=0 // pred_fallthru
    _
  %v8 = vld [vmem:[%s0] sm:$0xff]
  %v9 = vld [vmem:[%s0 + $0x8] sm:$0xff]
  %v10 = vld [vmem:[%s0 + $0x10] sm:$0xff]
  %v11 = vld [vmem:[%s0 + $0x18] sm:$0xff]
  %vm12 = vcmask 523264
  %v13 = vsel %vm12, %v8, 0.0
  %v14 = vsel %vm12, %v9, 0.0
  %v15 = vadd.f32 %v13, %v14
  %v16 = vsel %vm12, %v10, 0.0
  %v17 = vadd.f32 %v15, %v16
  %v18 = vsel %vm12, %v11, 0.0
  %v19 = vadd.f32 %v17, %v18
  %v20 = vrot.slane %v19, 4
  %v21 = vadd.f32 %v19, %v20
  %v22 = vrot.slane %v21, 2
  %v23 = vadd.f32 %v21, %v22
  %v24 = vrot.slane %v23, 1
  %v25 = vadd.f32 %v23, %v24
  %v26 = vmul.f32 %v8, %v8
  %v27 = vmul.f32 %v9, %v9
  %v28 = vmul.f32 %v10, %v10
  %v29 = vmul.f32 %v11, %v11
  %v30 = vsel %vm12, %v26, 0.0
  %v31 = vsel %vm12, %v27, 0.0
  %v32 = vadd.f32 %v30, %v31
  %v33 = vsel %vm12, %v28, 0.0
  %v34 = vadd.f32 %v32, %v33
  %v35 = vsel %vm12, %v29, 0.0
  %v36 = vadd.f32 %v34, %v35
  %v37 = vrot.slane %v36, 4
  %v38 = vadd.f32 %v36, %v37
  %v39 = vrot.slane %v38, 2
  %v40 = vadd.f32 %v38, %v39
  %v41 = vrot.slane %v40, 1
  %v42 = vadd.f32 %v40, %v41
  %vm43 = vcmask 1040384
  %v44 = vsel %vm43, %v25, %v42
  %vm45 = vcmask 517120
  %46 = vst.msk [vmem:[%s1] sm:$0x3] %vm45, %v44
  // Predicated region
  $region6: #{_lambda_.5} parent=0 // pred_check
    _
  $region7: #{_lambda_.5} parent=0 // pred_check_branch
    %48 = sbr.rel (0) target = $region9
  $region8: #{_lambda_.5} parent=0 // pred_region
    _
  $region9: #{_lambda_.5} parent=0 // pred_fallthru
    _
  // Predicated region
  $region10: #{_lambda_.5} parent=0 // pred_check
    _
  $region11: #{_lambda_.5} parent=0 // pred_check_branch
    %50 = sbr.rel (0) target = $region13
  $region12: #{_lambda_.5} parent=0 // pred_region
    _
  $region13: #{_lambda_.5} parent=0 // pred_fallthru
    _

// kernel: _lambda_.7
$region0: #{_lambda_.7}
  #allocation0 [shape = 'u32[]', space=smem, size = 0x4, offset = 0x4, fixed_abs, tag = 'smem constant byte address 0x4 - core index']
  #allocation1 [shape = 'u32[72,128]{1,0:T(1,128)}', space=vmem, size = 0x9000, scoped, tag = 'internal scratch']
  #allocation2 [shape = 'bf16[10,64]{1,0:T(8,128)(2,1)}', space=vmem, size = 0x1000, scoped, tag = 'scratch operand']
  %s0 = inlined_call_operand.vmem [shape: bf16[2,8,64], index: 0, kind: input, shape index: {}]
  %s1 = inlined_call_operand.vmem [shape: f32[2,64], index: 1, kind: input, shape index: {}]
  %s2 = inlined_call_operand.vmem [shape: bf16[3,64,64], index: 2, kind: input, shape index: {}]
  %s3 = inlined_call_operand.vmem [shape: bf16[2,8,64], index: 3, kind: input, shape index: {}]
  %s4 = inlined_call_operand.vmem [shape: bf16[2,8,64], index: 4, kind: output, shape index: {0}]
  %s5 = inlined_call_operand.vmem [shape: f32[2,2,64], index: 5, kind: output, shape index: {1}]
  %6 = xla_tuple %s4, %s5
  %s7 = sld [smem:[#allocation0]]
  $region57: #{_lambda_.7} parent=0
    _
  %s9 = ssub.s32 1, %s7
  %s10 = scalar_select 0, %s9, %s7
  loop: start=0, step=1, limit=4
  $region2: #{_lambda_.7} parent=0 // loop_pre_header
    _
  $region3: #{_lambda_.7} parent=0 // loop_header
    %s12 = sphi 0, %s16
    %p13 = scmp.ge.s32.totalorder %s12, 4
    %s22 = sphi 0, %s24
    %s25 = sphi 0, %s22
    %s26 = sphi 0, %s25
    %s42 = sphi 0, %s26
    %s46 = sphi 0, %s46
    %s48 = sphi 0, %s46
    %s49 = sphi 0, %s48
    %s63 = sphi 0, %s49
    %s67 = sphi 0, %s67
    %s69 = sphi 0, %s67
    %s70 = sphi 0, %s69
    %s84 = sphi 0, %s70
    %s90 = sphi 0, %s92
    %s93 = sphi 0, %s90
    %s94 = sphi 0, %s93
    %s110 = sphi 0, %s94
    %s116 = sphi 0, %s118
    %s119 = sphi 0, %s116
    %s120 = sphi 0, %s119
    %s136 = sphi 0, %s120
    %s142 = sphi 0, %s144
    %s145 = sphi 0, %s142
    %s146 = sphi 0, %s145
    %s162 = sphi 0, %s146
  $region4: #{_lambda_.7} parent=0 // loop_header_branch
    %15 = sbr.rel (%p13) target = $region8
  $region5: #{_lambda_.7} parent=0 // loop_body
    %s17 = ssub.s32 %s12, 1
    %s18 = ssub.s32 %s12, 2
    %s19 = sadd.s32 %s12, 1
    %s20 = ssub.s32 %s12, %s19
    %p21 = scmp.eq.s32.totalorder %s20, 0
    %s23 = sadd.s32 %s22, 1
    %s24 = scalar_select %p21, %s22, %s23
    %p27 = pneg %p21
    %p28 = scmp.eq.s32.totalorder %s12, 1
    %p29 = por %p27, %p28
    %p30 = scmp.ne.s32.totalorder %s22, %s25
    %p31 = scmp.eq.s32.totalorder %s12, 0
    %p32 = por %p30, %p31
    %p33 = scmp.ne.s32.totalorder %s22, %s25
    %p34 = scmp.eq.s32.totalorder %s17, 1
    %p35 = por %p33, %p34
    %p36 = scmp.ne.s32.totalorder %s25, %s26
    %p37 = scmp.eq.s32.totalorder %s17, 0
    %p38 = por %p36, %p37
    %p39 = scmp.ne.s32.totalorder %s25, %s26
    %p40 = scmp.eq.s32.totalorder %s18, 1
    %p41 = por %p39, %p40
    %p43 = scmp.ne.s32.totalorder %s26, %s42
    %p44 = scmp.eq.s32.totalorder %s18, 0
    %p45 = por %p43, %p44
    %s47 = sadd.s32 %s46, 1
    %p50 = scmp.eq.s32.totalorder %s12, 1
    %p51 = scmp.ne.s32.totalorder %s46, %s48
    %p52 = scmp.eq.s32.totalorder %s12, 0
    %p53 = por %p51, %p52
    %p54 = scmp.ne.s32.totalorder %s46, %s48
    %p55 = scmp.eq.s32.totalorder %s17, 1
    %p56 = por %p54, %p55
    %p57 = scmp.ne.s32.totalorder %s48, %s49
    %p58 = scmp.eq.s32.totalorder %s17, 0
    %p59 = por %p57, %p58
    %p60 = scmp.ne.s32.totalorder %s48, %s49
    %p61 = scmp.eq.s32.totalorder %s18, 1
    %p62 = por %p60, %p61
    %p64 = scmp.ne.s32.totalorder %s49, %s63
    %p65 = scmp.eq.s32.totalorder %s18, 0
    %p66 = por %p64, %p65
    %s68 = sadd.s32 %s67, 1
    %p71 = scmp.eq.s32.totalorder %s12, 1
    %p72 = scmp.ne.s32.totalorder %s67, %s69
    %p73 = scmp.eq.s32.totalorder %s12, 0
    %p74 = por %p72, %p73
    %p75 = scmp.ne.s32.totalorder %s67, %s69
    %p76 = scmp.eq.s32.totalorder %s17, 1
    %p77 = por %p75, %p76
    %p78 = scmp.ne.s32.totalorder %s69, %s70
    %p79 = scmp.eq.s32.totalorder %s17, 0
    %p80 = por %p78, %p79
    %p81 = scmp.ne.s32.totalorder %s69, %s70
    %p82 = scmp.eq.s32.totalorder %s18, 1
    %p83 = por %p81, %p82
    %p85 = scmp.ne.s32.totalorder %s70, %s84
    %p86 = scmp.eq.s32.totalorder %s18, 0
    %p87 = por %p85, %p86
    %s88 = ssub.s32 %s12, %s19
    %p89 = scmp.eq.s32.totalorder %s88, 0
    %s91 = sadd.s32 %s90, 1
    %s92 = scalar_select %p89, %s90, %s91
    %p95 = pneg %p89
    %p96 = scmp.eq.s32.totalorder %s12, 1
    %p97 = por %p95, %p96
    %p98 = scmp.ne.s32.totalorder %s90, %s93
    %p99 = scmp.eq.s32.totalorder %s12, 0
    %p100 = por %p98, %p99
    %p101 = scmp.ne.s32.totalorder %s90, %s93
    %p102 = scmp.eq.s32.totalorder %s17, 1
    %p103 = por %p101, %p102
    %p104 = scmp.ne.s32.totalorder %s93, %s94
    %p105 = scmp.eq.s32.totalorder %s17, 0
    %p106 = por %p104, %p105
    %p107 = scmp.ne.s32.totalorder %s93, %s94
    %p108 = scmp.eq.s32.totalorder %s18, 1
    %p109 = por %p107, %p108
    %p111 = scmp.ne.s32.totalorder %s94, %s110
    %p112 = scmp.eq.s32.totalorder %s18, 0
    %p113 = por %p111, %p112
    %s114 = ssub.s32 %s12, %s19
    %p115 = scmp.eq.s32.totalorder %s114, 0
    %s117 = sadd.s32 %s116, 1
    %s118 = scalar_select %p115, %s116, %s117
    %p121 = pneg %p115
    %p122 = scmp.eq.s32.totalorder %s12, 1
    %p123 = por %p121, %p122
    %p124 = scmp.ne.s32.totalorder %s116, %s119
    %p125 = scmp.eq.s32.totalorder %s12, 0
    %p126 = por %p124, %p125
    %p127 = scmp.ne.s32.totalorder %s116, %s119
    %p128 = scmp.eq.s32.totalorder %s17, 1
    %p129 = por %p127, %p128
    %p130 = scmp.ne.s32.totalorder %s119, %s120
    %p131 = scmp.eq.s32.totalorder %s17, 0
    %p132 = por %p130, %p131
    %p133 = scmp.ne.s32.totalorder %s119, %s120
    %p134 = scmp.eq.s32.totalorder %s18, 1
    %p135 = por %p133, %p134
    %p137 = scmp.ne.s32.totalorder %s120, %s136
    %p138 = scmp.eq.s32.totalorder %s18, 0
    %p139 = por %p137, %p138
    %s140 = ssub.s32 %s12, %s19
    %p141 = scmp.eq.s32.totalorder %s140, 0
    %s143 = sadd.s32 %s142, 1
    %s144 = scalar_select %p141, %s142, %s143
    %p147 = pneg %p141
    %p148 = scmp.eq.s32.totalorder %s12, 1
    %p149 = por %p147, %p148
    %p150 = scmp.ne.s32.totalorder %s142, %s145
    %p151 = scmp.eq.s32.totalorder %s12, 0
    %p152 = por %p150, %p151
    %p153 = scmp.ne.s32.totalorder %s142, %s145
    %p154 = scmp.eq.s32.totalorder %s17, 1
    %p155 = por %p153, %p154
    %p156 = scmp.ne.s32.totalorder %s145, %s146
    %p157 = scmp.eq.s32.totalorder %s17, 0
    %p158 = por %p156, %p157
    %p159 = scmp.ne.s32.totalorder %s145, %s146
    %p160 = scmp.eq.s32.totalorder %s18, 1
    %p161 = por %p159, %p160
    %p163 = scmp.ne.s32.totalorder %s146, %s162
    %p164 = scmp.eq.s32.totalorder %s18, 0
    %p165 = por %p163, %p164
    %p166 = scmp.le.s32.totalorder 1, %s12
    %p167 = scmp.lt.s32.totalorder %s12, 3
    %p168 = pnand %p166, %p167
    %p169 = pneg %p168
    // Predicated region
    $region9: #{_lambda_.7} parent=5 // pred_check
      _
    $region10: #{_lambda_.7} parent=5 // pred_check_branch
      %171 = sbr.rel (%p168) target = $region12
    $region11: #{_lambda_.7} parent=5 // pred_region
      %s172 = ssub.s32 %s12, 1
      // Predicated region
      $region13: #{_lambda_.7} parent=11 // pred_check
        %p173 = pneg %p59
      $region14: #{_lambda_.7} parent=11 // pred_check_branch
        %175 = sbr.rel (%p173) target = $region16
      $region15: #{_lambda_.7} parent=11 // pred_region
        _
      $region16: #{_lambda_.7} parent=11 // pred_fallthru
        _
      // Predicated region
      $region17: #{_lambda_.7} parent=11 // pred_check
        %p176 = pneg %p80
      $region18: #{_lambda_.7} parent=11 // pred_check_branch
        %178 = sbr.rel (%p176) target = $region20
      $region19: #{_lambda_.7} parent=11 // pred_region
        _
      $region20: #{_lambda_.7} parent=11 // pred_fallthru
        _
    $region12: #{_lambda_.7} parent=5 // pred_fallthru
      _
    %p179 = scmp.lt.s32.totalorder %s12, 2
    // Predicated region
    $region21: #{_lambda_.7} parent=5 // pred_check
      %p180 = pneg %p179
    $region22: #{_lambda_.7} parent=5 // pred_check_branch
      %182 = sbr.rel (%p180) target = $region24
    $region23: #{_lambda_.7} parent=5 // pred_region
      // Predicated region
      $region25: #{_lambda_.7} parent=23 // pred_check
        %p183 = pneg %p32
      $region26: #{_lambda_.7} parent=23 // pred_check_branch
        %185 = sbr.rel (%p183) target = $region28
      $region27: #{_lambda_.7} parent=23 // pred_region
        %p186 = scmp.lt.s32.totalorder %s12, 1
        %s187 = scalar_select %p186, %s12, 1
        %s188 = smul.addr %s187, 4
        %s189 = scalar_lea.vmem %s0, %s188
      $region28: #{_lambda_.7} parent=23 // pred_fallthru
        _
      // Predicated region
      $region29: #{_lambda_.7} parent=23 // pred_check
        %p190 = pneg %p100
      $region30: #{_lambda_.7} parent=23 // pred_check_branch
        %192 = sbr.rel (%p190) target = $region32
      $region31: #{_lambda_.7} parent=23 // pred_region
        %p193 = scmp.lt.s32.totalorder %s12, 1
        %s194 = scalar_select %p193, %s12, 1
        %s195 = smul.addr %s194, 4
        %s196 = scalar_lea.vmem %s3, %s195
      $region32: #{_lambda_.7} parent=23 // pred_fallthru
        _
    $region24: #{_lambda_.7} parent=5 // pred_fallthru
      _
    %p197 = scmp.le.s32.totalorder 1, %s12
    %p198 = scmp.lt.s32.totalorder %s12, 3
    %p199 = pnand %p197, %p198
    %p200 = pneg %p199
    // Predicated region
    $region33: #{_lambda_.7} parent=5 // pred_check
      _
    $region34: #{_lambda_.7} parent=5 // pred_check_branch
      %202 = sbr.rel (%p199) target = $region36
    $region35: #{_lambda_.7} parent=5 // pred_region
      %s203 = ssub.s32 %s12, 1
      %p204 = scmp.lt.s32.totalorder %s17, 1
      %s205 = scalar_select %p204, %s17, 1
      %s206 = smul.addr %s205, 4
      %s207 = scalar_lea.vmem %s0, %s206
      %p208 = pneg %p38
      %p209 = pneg %p35
      %p210 = pneg %p59
      %p211 = pneg %p56
      %p212 = pneg %p80
      %p213 = pneg %p77
      %p214 = scmp.lt.s32.totalorder %s17, 1
      %s215 = scalar_select %p214, %s17, 1
      %s216 = smul.addr %s215, 4
      %s217 = scalar_lea.vmem %s3, %s216
      %p218 = pneg %p106
      %p219 = pneg %p103
      %p220 = pneg %p132
      %p221 = pneg %p129
      %p222 = scmp.lt.s32.totalorder %s17, 1
      %s223 = scalar_select %p222, %s17, 1
      %s224 = smul.addr %s223, 4
      %s225 = scalar_lea.vmem %s4, %s224
      %p226 = pneg %p158
      %p227 = pneg %p155
      %p228 = scmp.lt.s32.totalorder %s17, 1
      %s229 = scalar_select %p228, %s17, 1
      %s230 = smul.addr %s229, 2
      %s231 = scalar_lea.vmem %s5, %s230
      %p232 = scmp.lt.s32.totalorder %s17, 1
      %s233 = scalar_select %p232, %s17, 1
      %s234 = smul.addr %s233, 4
      %s235 = scalar_lea.vmem %s0, %s234
      %p236 = scmp.lt.s32.totalorder %s17, 1
      %s237 = scalar_select %p236, %s17, 1
      %s238 = smul.addr %s237, 4
      %s239 = scalar_lea.vmem %s3, %s238
      %p240 = scmp.lt.s32.totalorder %s17, 1
      %s241 = scalar_select %p240, %s17, 1
      %s242 = smul.addr %s241, 4
      %s243 = scalar_lea.vmem %s4, %s242
      %p244 = scmp.lt.s32.totalorder %s17, 1
      %s245 = scalar_select %p244, %s17, 1
      %s246 = smul.addr %s245, 2
      %s247 = scalar_lea.vmem %s5, %s246
      %v249 = vld [vmem:[%s235] sm:$0xf]
      %v250 = vunpack.c.l.bf16 %v249
      %v251 = vld [vmem:[%s1] sm:$0x1]
      %v252 = vperm.slane %v251, 0
      %v253 = vmul.f32 %v250, %v252
      %v254 = vld [vmem:[%s1 + $0x1] sm:$0x1]
      %v255 = vperm.slane %v254, 0
      %v256 = vadd.f32 %v253, %v255
      %v257 = vmax.f32 %v256, 0.0
      %vm258 = vcmask 519168
      %259 = vst.msk [vmem:[#allocation2] sm:$0xf] %vm258, 0
      %vm260 = vcmask 516096
      %261 = vst.msk [vmem:[#allocation2 + $0x4] sm:$0x1] %vm260, 0
      %v262 = vpack.c.bf16 %v257, %v257
      %v264 = vshrl.u32 %v262, 16
      %v266 = vrot.slane %v264, 7
      %v267 = vshll.u32 %v262, 16
      %v269 = vor.u32 %v266, %v267
      %v270 = vrot.slane %v266, 4
      %vm273 = vcmask 519168
      %vm274 = vsmask.f32 7938
      %vm275 = vmand %vm273, %vm274
      %v276 = vld [vmem:[#allocation2] sm:$0xf]
      %v277 = vsel %vm275, %v269, %v276
      %278 = vst [vmem:[#allocation2] sm:$0xf] %v277
      %vm279 = vcmask 516096
      %vm280 = vsmask.f32 256
      %vm281 = vmand %vm279, %vm280
      %v282 = vld [vmem:[#allocation2 + $0x4] sm:$0x1]
      %v283 = vsel %vm281, %v270, %v282
      %284 = vst [vmem:[#allocation2 + $0x4] sm:$0x1] %v283
      %v285 = vld [vmem:[#allocation2] sm:$0xf]
      %v286 = vld [vmem:[#allocation2 + $0x4] sm:$0x1]
      %v287 = vld [vmem:[%s2] sm:$0xf]
      %v288 = vld [vmem:[%s2 + $0x4] sm:$0xf]
      %v289 = vld [vmem:[%s2 + $0x8] sm:$0xf]
      %v290 = vld [vmem:[%s2 + $0xc] sm:$0xf]
      %v291 = vld [vmem:[%s2 + $0x10] sm:$0xf]
      %v292 = vld [vmem:[%s2 + $0x14] sm:$0xf]
      %v293 = vld [vmem:[%s2 + $0x18] sm:$0xf]
      %v294 = vld [vmem:[%s2 + $0x1c] sm:$0xf]
      %s295 = scalar_lea.vmem %s2, 32
      %v296 = vld [vmem:[%s295] sm:$0xf]
      %v297 = vld [vmem:[%s295 + $0x4] sm:$0xf]
      %v298 = vld [vmem:[%s295 + $0x8] sm:$0xf]
      %v299 = vld [vmem:[%s295 + $0xc] sm:$0xf]
      %v300 = vld [vmem:[%s295 + $0x10] sm:$0xf]
      %v301 = vld [vmem:[%s295 + $0x14] sm:$0xf]
      %v302 = vld [vmem:[%s295 + $0x18] sm:$0xf]
      %v303 = vld [vmem:[%s295 + $0x1c] sm:$0xf]
      %v306 = vunpack.c.l.b16 %v285
      %v307 = vunpack.c.l.b16 %v286
      %v308 = vpack.c.b16 %v307, %v306
      %v310 = vshrl.u32 %v308, 16
      %v312 = vshll.u32 %v308, 16
      %v314 = vrot.slane %v312, 1
      %v315 = vor.u32 %v310, %v314
      %v324 = vunpack.c.l.b16 %v296
      %v325 = vunpack.c.l.b16 %v297
      %v326 = vunpack.c.l.b16 %v298
      %v327 = vunpack.c.l.b16 %v299
      %v328 = vunpack.c.l.b16 %v300
      %v329 = vunpack.c.l.b16 %v301
      %v330 = vunpack.c.l.b16 %v302
      %v331 = vunpack.c.l.b16 %v303
      %v332 = vpack.c.b16 %v325, %v324
      %v333 = vpack.c.b16 %v327, %v326
      %v334 = vpack.c.b16 %v329, %v328
      %v335 = vpack.c.b16 %v331, %v330
      %vm340 = vcmask 523264
      %v342 = vsel %vm340, %v315, 0
      %344 = vmatpush.bf16.msra.mxu0 0
      %345 = vmatpush.bf16.msra.mxu0 0
      %346 = vmatpush.bf16.msra.mxu0 0
      %347 = vmatpush.bf16.msra.mxu0 0
      %348 = vmatpush.bf16.msra.mxu0 %v335
      %349 = vmatpush.bf16.msra.mxu0 %v334
      %350 = vmatpush.bf16.msra.mxu0 %v333
      %351 = vmatpush.bf16.msra.mxu0 %v332
      %352 = vmatmul.bf16.gmra.mxu0 %v342
      %v353 = vpop.f32.mrf.mxu0
      %v354 = vadd.f32 0.0, %v353
      %v355 = vpop.f32.mrf.mxu0
      %356 = vdwg.mxu0
      %v365 = vunpack.c.l.b16 %v287
      %v366 = vunpack.c.l.b16 %v288
      %v367 = vunpack.c.l.b16 %v289
      %v368 = vunpack.c.l.b16 %v290
      %v369 = vunpack.c.l.b16 %v291
      %v370 = vunpack.c.l.b16 %v292
      %v371 = vunpack.c.l.b16 %v293
      %v372 = vunpack.c.l.b16 %v294
      %v373 = vpack.c.b16 %v366, %v365
      %v374 = vpack.c.b16 %v368, %v367
      %v375 = vpack.c.b16 %v370, %v369
      %v376 = vpack.c.b16 %v372, %v371
      %v382 = vsel %vm340, %v285, 0
      %384 = vmatpush.bf16.msra.mxu0 0
      %385 = vmatpush.bf16.msra.mxu0 0
      %386 = vmatpush.bf16.msra.mxu0 0
      %387 = vmatpush.bf16.msra.mxu0 0
      %388 = vmatpush.bf16.msra.mxu0 %v376
      %389 = vmatpush.bf16.msra.mxu0 %v375
      %390 = vmatpush.bf16.msra.mxu0 %v374
      %391 = vmatpush.bf16.msra.mxu0 %v373
      %392 = vmatmul.bf16.gmra.mxu0 %v382
      %v393 = vpop.f32.mrf.mxu0
      %v394 = vadd.f32 %v354, %v393
      %v395 = vpop.f32.mrf.mxu0
      %396 = vdwg.mxu0
      %s397 = scalar_lea.vmem %s2, 64
      %v398 = vld [vmem:[%s397] sm:$0xf]
      %v399 = vld [vmem:[%s397 + $0x4] sm:$0xf]
      %v400 = vld [vmem:[%s397 + $0x8] sm:$0xf]
      %v401 = vld [vmem:[%s397 + $0xc] sm:$0xf]
      %v402 = vld [vmem:[%s397 + $0x10] sm:$0xf]
      %v403 = vld [vmem:[%s397 + $0x14] sm:$0xf]
      %v404 = vld [vmem:[%s397 + $0x18] sm:$0xf]
      %v405 = vld [vmem:[%s397 + $0x1c] sm:$0xf]
      %v406 = vrot.slane %v308, 1
      %v415 = vunpack.c.l.b16 %v398
      %v416 = vunpack.c.l.b16 %v399
      %v417 = vunpack.c.l.b16 %v400
      %v418 = vunpack.c.l.b16 %v401
      %v419 = vunpack.c.l.b16 %v402
      %v420 = vunpack.c.l.b16 %v403
      %v421 = vunpack.c.l.b16 %v404
      %v422 = vunpack.c.l.b16 %v405
      %v423 = vpack.c.b16 %v416, %v415
      %v424 = vpack.c.b16 %v418, %v417
      %v425 = vpack.c.b16 %v420, %v419
      %v426 = vpack.c.b16 %v422, %v421
      %v432 = vsel %vm340, %v406, 0
      %434 = vmatpush.bf16.msra.mxu0 0
      %435 = vmatpush.bf16.msra.mxu0 0
      %436 = vmatpush.bf16.msra.mxu0 0
      %437 = vmatpush.bf16.msra.mxu0 0
      %438 = vmatpush.bf16.msra.mxu0 %v426
      %439 = vmatpush.bf16.msra.mxu0 %v425
      %440 = vmatpush.bf16.msra.mxu0 %v424
      %441 = vmatpush.bf16.msra.mxu0 %v423
      %442 = vmatmul.bf16.gmra.mxu0 %v432
      %v443 = vpop.f32.mrf.mxu0
      %v444 = vadd.f32 0.0, %v443
      %v445 = vpop.f32.mrf.mxu0
      %446 = vdwg.mxu0
      %v447 = vadd.f32 %v394, %v444
      %v448 = vld [vmem:[%s239] sm:$0xf]
      %v449 = vunpack.c.l.bf16 %v448
      %v450 = vadd.f32 %v447, %v449
      %v451 = vpack.c.bf16 %v450, %v450
      %452 = vst.msk [vmem:[%s243] sm:$0xf] %vm258, %v451
      %v453 = vsel %vm340, %v450, 0.0
      %v454 = vrot.slane %v453, 4
      %v455 = vadd.f32 %v453, %v454
      %v456 = vrot.slane %v455, 2
      %v457 = vadd.f32 %v455, %v456
      %v458 = vrot.slane %v457, 1
      %v459 = vadd.f32 %v457, %v458
      %v460 = vmul.f32 %v450, %v450
      %v461 = vsel %vm340, %v460, 0.0
      %v462 = vrot.slane %v461, 4
      %v463 = vadd.f32 %v461, %v462
      %v464 = vrot.slane %v463, 2
      %v465 = vadd.f32 %v463, %v464
      %v466 = vrot.slane %v465, 1
      %v467 = vadd.f32 %v465, %v466
      %vm468 = vcmask 1040384
      %v469 = vsel %vm468, %v459, %v467
      %vm470 = vcmask 517120
      %471 = vst.msk [vmem:[%s247] sm:$0x3] %vm470, %v469
      %p472 = scmp.lt.s32.totalorder %s17, 1
      %s473 = scalar_select %p472, %s17, 1
      %s474 = smul.addr %s473, 4
      %s475 = scalar_lea.vmem %s4, %s474
      %p476 = scmp.lt.s32.totalorder %s17, 1
      %s477 = scalar_select %p476, %s17, 1
      %s478 = smul.addr %s477, 2
      %s479 = scalar_lea.vmem %s5, %s478
      // Predicated region
      $region37: #{_lambda_.7} parent=35 // pred_check
        %p480 = pneg %p129
      $region38: #{_lambda_.7} parent=35 // pred_check_branch
        %482 = sbr.rel (%p480) target = $region40
      $region39: #{_lambda_.7} parent=35 // pred_region
        _
      $region40: #{_lambda_.7} parent=35 // pred_fallthru
        _
      // Predicated region
      $region41: #{_lambda_.7} parent=35 // pred_check
        %p483 = pneg %p155
      $region42: #{_lambda_.7} parent=35 // pred_check_branch
        %485 = sbr.rel (%p483) target = $region44
      $region43: #{_lambda_.7} parent=35 // pred_region
        _
      $region44: #{_lambda_.7} parent=35 // pred_fallthru
        _
    $region36: #{_lambda_.7} parent=5 // pred_fallthru
      _
    %p486 = scmp.le.s32.totalorder 2, %s12
    // Predicated region
    $region45: #{_lambda_.7} parent=5 // pred_check
      %p487 = pneg %p486
    $region46: #{_lambda_.7} parent=5 // pred_check_branch
      %489 = sbr.rel (%p487) target = $region48
    $region47: #{_lambda_.7} parent=5 // pred_region
      %s490 = ssub.s32 %s12, 2
      // Predicated region
      $region49: #{_lambda_.7} parent=47 // pred_check
        %p491 = pneg %p135
      $region50: #{_lambda_.7} parent=47 // pred_check_branch
        %493 = sbr.rel (%p491) target = $region52
      $region51: #{_lambda_.7} parent=47 // pred_region
        %p494 = scmp.lt.s32.totalorder %s18, 1
        %s495 = scalar_select %p494, %s18, 1
        %s496 = smul.addr %s495, 4
        %s497 = scalar_lea.vmem %s4, %s496
      $region52: #{_lambda_.7} parent=47 // pred_fallthru
        _
      // Predicated region
      $region53: #{_lambda_.7} parent=47 // pred_check
        %p498 = pneg %p161
      $region54: #{_lambda_.7} parent=47 // pred_check_branch
        %500 = sbr.rel (%p498) target = $region56
      $region55: #{_lambda_.7} parent=47 // pred_region
        %p501 = scmp.lt.s32.totalorder %s18, 1
        %s502 = scalar_select %p501, %s18, 1
        %s503 = smul.addr %s502, 2
        %s504 = scalar_lea.vmem %s5, %s503
      $region56: #{_lambda_.7} parent=47 // pred_fallthru
        _
    $region48: #{_lambda_.7} parent=5 // pred_fallthru
      _
  $region6: #{_lambda_.7} parent=0 // loop_footer
    %s16 = sadd.s32 1, %s12
  $region7: #{_lambda_.7} parent=0 // loop_footer_branch
    %11 = sbr.rel target = $region3
  $region8: #{_lambda_.7} parent=0 // loop_exit
    _

// kernel: _lambda_.6
$region0: #{_lambda_.6}
  #allocation0 [shape = 'u32[]', space=smem, size = 0x4, offset = 0x4, fixed_abs, tag = 'smem constant byte address 0x4 - core index']
  #allocation1 [shape = 'u32[72,128]{1,0:T(1,128)}', space=vmem, size = 0x9000, scoped, tag = 'internal scratch']
  #allocation2 [shape = 'bf16[18,64]{1,0:T(8,128)(2,1)}', space=vmem, size = 0x1800, scoped, tag = 'scratch operand']
  %s0 = inlined_call_operand.vmem [shape: f32[2,16,64], index: 0, kind: input, shape index: {}]
  %s1 = inlined_call_operand.vmem [shape: f32[2,64], index: 1, kind: input, shape index: {}]
  %s2 = inlined_call_operand.vmem [shape: bf16[3,64,64], index: 2, kind: input, shape index: {}]
  %s3 = inlined_call_operand.vmem [shape: bf16[1,64,64], index: 3, kind: input, shape index: {}]
  %s4 = inlined_call_operand.vmem [shape: bf16[2,8,64], index: 4, kind: output, shape index: {0}]
  %s5 = inlined_call_operand.vmem [shape: bf16[2,8,64], index: 5, kind: output, shape index: {1}]
  %s6 = inlined_call_operand.vmem [shape: f32[2,2,64], index: 6, kind: output, shape index: {2}]
  %7 = xla_tuple %s4, %s5, %s6
  %s8 = sld [smem:[#allocation0]]
  $region65: #{_lambda_.6} parent=0
    _
  %s10 = ssub.s32 1, %s8
  %s11 = scalar_select 0, %s10, %s8
  loop: start=0, step=1, limit=4
  $region2: #{_lambda_.6} parent=0 // loop_pre_header
    _
  $region3: #{_lambda_.6} parent=0 // loop_header
    %s13 = sphi 0, %s17
    %p14 = scmp.ge.s32.totalorder %s13, 4
    %s23 = sphi 0, %s25
    %s26 = sphi 0, %s23
    %s27 = sphi 0, %s26
    %s43 = sphi 0, %s27
    %s47 = sphi 0, %s47
    %s49 = sphi 0, %s47
    %s50 = sphi 0, %s49
    %s64 = sphi 0, %s50
    %s68 = sphi 0, %s68
    %s70 = sphi 0, %s68
    %s71 = sphi 0, %s70
    %s85 = sphi 0, %s71
    %s89 = sphi 0, %s89
    %s91 = sphi 0, %s89
    %s92 = sphi 0, %s91
    %s106 = sphi 0, %s92
    %s112 = sphi 0, %s114
    %s115 = sphi 0, %s112
    %s116 = sphi 0, %s115
    %s132 = sphi 0, %s116
    %s138 = sphi 0, %s140
    %s141 = sphi 0, %s138
    %s142 = sphi 0, %s141
    %s158 = sphi 0, %s142
    %s164 = sphi 0, %s166
    %s167 = sphi 0, %s164
    %s168 = sphi 0, %s167
    %s184 = sphi 0, %s168
  $region4: #{_lambda_.6} parent=0 // loop_header_branch
    %16 = sbr.rel (%p14) target = $region8
  $region5: #{_lambda_.6} parent=0 // loop_body
    %s18 = ssub.s32 %s13, 1
    %s19 = ssub.s32 %s13, 2
    %s20 = sadd.s32 %s13, 1
    %s21 = ssub.s32 %s13, %s20
    %p22 = scmp.eq.s32.totalorder %s21, 0
    %s24 = sadd.s32 %s23, 1
    %s25 = scalar_select %p22, %s23, %s24
    %p28 = pneg %p22
    %p29 = scmp.eq.s32.totalorder %s13, 1
    %p30 = por %p28, %p29
    %p31 = scmp.ne.s32.totalorder %s23, %s26
    %p32 = scmp.eq.s32.totalorder %s13, 0
    %p33 = por %p31, %p32
    %p34 = scmp.ne.s32.totalorder %s23, %s26
    %p35 = scmp.eq.s32.totalorder %s18, 1
    %p36 = por %p34, %p35
    %p37 = scmp.ne.s32.totalorder %s26, %s27
    %p38 = scmp.eq.s32.totalorder %s18, 0
    %p39 = por %p37, %p38
    %p40 = scmp.ne.s32.totalorder %s26, %s27
    %p41 = scmp.eq.s32.totalorder %s19, 1
    %p42 = por %p40, %p41
    %p44 = scmp.ne.s32.totalorder %s27, %s43
    %p45 = scmp.eq.s32.totalorder %s19, 0
    %p46 = por %p44, %p45
    %s48 = sadd.s32 %s47, 1
    %p51 = scmp.eq.s32.totalorder %s13, 1
    %p52 = scmp.ne.s32.totalorder %s47, %s49
    %p53 = scmp.eq.s32.totalorder %s13, 0
    %p54 = por %p52, %p53
    %p55 = scmp.ne.s32.totalorder %s47, %s49
    %p56 = scmp.eq.s32.totalorder %s18, 1
    %p57 = por %p55, %p56
    %p58 = scmp.ne.s32.totalorder %s49, %s50
    %p59 = scmp.eq.s32.totalorder %s18, 0
    %p60 = por %p58, %p59
    %p61 = scmp.ne.s32.totalorder %s49, %s50
    %p62 = scmp.eq.s32.totalorder %s19, 1
    %p63 = por %p61, %p62
    %p65 = scmp.ne.s32.totalorder %s50, %s64
    %p66 = scmp.eq.s32.totalorder %s19, 0
    %p67 = por %p65, %p66
    %s69 = sadd.s32 %s68, 1
    %p72 = scmp.eq.s32.totalorder %s13, 1
    %p73 = scmp.ne.s32.totalorder %s68, %s70
    %p74 = scmp.eq.s32.totalorder %s13, 0
    %p75 = por %p73, %p74
    %p76 = scmp.ne.s32.totalorder %s68, %s70
    %p77 = scmp.eq.s32.totalorder %s18, 1
    %p78 = por %p76, %p77
    %p79 = scmp.ne.s32.totalorder %s70, %s71
    %p80 = scmp.eq.s32.totalorder %s18, 0
    %p81 = por %p79, %p80
    %p82 = scmp.ne.s32.totalorder %s70, %s71
    %p83 = scmp.eq.s32.totalorder %s19, 1
    %p84 = por %p82, %p83
    %p86 = scmp.ne.s32.totalorder %s71, %s85
    %p87 = scmp.eq.s32.totalorder %s19, 0
    %p88 = por %p86, %p87
    %s90 = sadd.s32 %s89, 1
    %p93 = scmp.eq.s32.totalorder %s13, 1
    %p94 = scmp.ne.s32.totalorder %s89, %s91
    %p95 = scmp.eq.s32.totalorder %s13, 0
    %p96 = por %p94, %p95
    %p97 = scmp.ne.s32.totalorder %s89, %s91
    %p98 = scmp.eq.s32.totalorder %s18, 1
    %p99 = por %p97, %p98
    %p100 = scmp.ne.s32.totalorder %s91, %s92
    %p101 = scmp.eq.s32.totalorder %s18, 0
    %p102 = por %p100, %p101
    %p103 = scmp.ne.s32.totalorder %s91, %s92
    %p104 = scmp.eq.s32.totalorder %s19, 1
    %p105 = por %p103, %p104
    %p107 = scmp.ne.s32.totalorder %s92, %s106
    %p108 = scmp.eq.s32.totalorder %s19, 0
    %p109 = por %p107, %p108
    %s110 = ssub.s32 %s13, %s20
    %p111 = scmp.eq.s32.totalorder %s110, 0
    %s113 = sadd.s32 %s112, 1
    %s114 = scalar_select %p111, %s112, %s113
    %p117 = pneg %p111
    %p118 = scmp.eq.s32.totalorder %s13, 1
    %p119 = por %p117, %p118
    %p120 = scmp.ne.s32.totalorder %s112, %s115
    %p121 = scmp.eq.s32.totalorder %s13, 0
    %p122 = por %p120, %p121
    %p123 = scmp.ne.s32.totalorder %s112, %s115
    %p124 = scmp.eq.s32.totalorder %s18, 1
    %p125 = por %p123, %p124
    %p126 = scmp.ne.s32.totalorder %s115, %s116
    %p127 = scmp.eq.s32.totalorder %s18, 0
    %p128 = por %p126, %p127
    %p129 = scmp.ne.s32.totalorder %s115, %s116
    %p130 = scmp.eq.s32.totalorder %s19, 1
    %p131 = por %p129, %p130
    %p133 = scmp.ne.s32.totalorder %s116, %s132
    %p134 = scmp.eq.s32.totalorder %s19, 0
    %p135 = por %p133, %p134
    %s136 = ssub.s32 %s13, %s20
    %p137 = scmp.eq.s32.totalorder %s136, 0
    %s139 = sadd.s32 %s138, 1
    %s140 = scalar_select %p137, %s138, %s139
    %p143 = pneg %p137
    %p144 = scmp.eq.s32.totalorder %s13, 1
    %p145 = por %p143, %p144
    %p146 = scmp.ne.s32.totalorder %s138, %s141
    %p147 = scmp.eq.s32.totalorder %s13, 0
    %p148 = por %p146, %p147
    %p149 = scmp.ne.s32.totalorder %s138, %s141
    %p150 = scmp.eq.s32.totalorder %s18, 1
    %p151 = por %p149, %p150
    %p152 = scmp.ne.s32.totalorder %s141, %s142
    %p153 = scmp.eq.s32.totalorder %s18, 0
    %p154 = por %p152, %p153
    %p155 = scmp.ne.s32.totalorder %s141, %s142
    %p156 = scmp.eq.s32.totalorder %s19, 1
    %p157 = por %p155, %p156
    %p159 = scmp.ne.s32.totalorder %s142, %s158
    %p160 = scmp.eq.s32.totalorder %s19, 0
    %p161 = por %p159, %p160
    %s162 = ssub.s32 %s13, %s20
    %p163 = scmp.eq.s32.totalorder %s162, 0
    %s165 = sadd.s32 %s164, 1
    %s166 = scalar_select %p163, %s164, %s165
    %p169 = pneg %p163
    %p170 = scmp.eq.s32.totalorder %s13, 1
    %p171 = por %p169, %p170
    %p172 = scmp.ne.s32.totalorder %s164, %s167
    %p173 = scmp.eq.s32.totalorder %s13, 0
    %p174 = por %p172, %p173
    %p175 = scmp.ne.s32.totalorder %s164, %s167
    %p176 = scmp.eq.s32.totalorder %s18, 1
    %p177 = por %p175, %p176
    %p178 = scmp.ne.s32.totalorder %s167, %s168
    %p179 = scmp.eq.s32.totalorder %s18, 0
    %p180 = por %p178, %p179
    %p181 = scmp.ne.s32.totalorder %s167, %s168
    %p182 = scmp.eq.s32.totalorder %s19, 1
    %p183 = por %p181, %p182
    %p185 = scmp.ne.s32.totalorder %s168, %s184
    %p186 = scmp.eq.s32.totalorder %s19, 0
    %p187 = por %p185, %p186
    %p188 = scmp.le.s32.totalorder 1, %s13
    %p189 = scmp.lt.s32.totalorder %s13, 3
    %p190 = pnand %p188, %p189
    %p191 = pneg %p190
    // Predicated region
    $region9: #{_lambda_.6} parent=5 // pred_check
      _
    $region10: #{_lambda_.6} parent=5 // pred_check_branch
      %193 = sbr.rel (%p190) target = $region12
    $region11: #{_lambda_.6} parent=5 // pred_region
      %s194 = ssub.s32 %s13, 1
      // Predicated region
      $region13: #{_lambda_.6} parent=11 // pred_check
        %p195 = pneg %p60
      $region14: #{_lambda_.6} parent=11 // pred_check_branch
        %197 = sbr.rel (%p195) target = $region16
      $region15: #{_lambda_.6} parent=11 // pred_region
        _
      $region16: #{_lambda_.6} parent=11 // pred_fallthru
        _
      // Predicated region
      $region17: #{_lambda_.6} parent=11 // pred_check
        %p198 = pneg %p81
      $region18: #{_lambda_.6} parent=11 // pred_check_branch
        %200 = sbr.rel (%p198) target = $region20
      $region19: #{_lambda_.6} parent=11 // pred_region
        _
      $region20: #{_lambda_.6} parent=11 // pred_fallthru
        _
      // Predicated region
      $region21: #{_lambda_.6} parent=11 // pred_check
        %p201 = pneg %p102
      $region22: #{_lambda_.6} parent=11 // pred_check_branch
        %203 = sbr.rel (%p201) target = $region24
      $region23: #{_lambda_.6} parent=11 // pred_region
        _
      $region24: #{_lambda_.6} parent=11 // pred_fallthru
        _
    $region12: #{_lambda_.6} parent=5 // pred_fallthru
      _
    %p204 = scmp.lt.s32.totalorder %s13, 2
    // Predicated region
    $region25: #{_lambda_.6} parent=5 // pred_check
      %p205 = pneg %p204
    $region26: #{_lambda_.6} parent=5 // pred_check_branch
      %207 = sbr.rel (%p205) target = $region28
    $region27: #{_lambda_.6} parent=5 // pred_region
      // Predicated region
      $region29: #{_lambda_.6} parent=27 // pred_check
        %p208 = pneg %p33
      $region30: #{_lambda_.6} parent=27 // pred_check_branch
        %210 = sbr.rel (%p208) target = $region32
      $region31: #{_lambda_.6} parent=27 // pred_region
        %p211 = scmp.lt.s32.totalorder %s13, 1
        %s212 = scalar_select %p211, %s13, 1
        %s213 = smul.addr %s212, 2
        %s214 = smul.addr %s213, 8
        %s215 = scalar_lea.vmem %s0, %s214
      $region32: #{_lambda_.6} parent=27 // pred_fallthru
        _
    $region28: #{_lambda_.6} parent=5 // pred_fallthru
      _
    %p216 = scmp.le.s32.totalorder 1, %s13
    %p217 = scmp.lt.s32.totalorder %s13, 3
    %p218 = pnand %p216, %p217
    %p219 = pneg %p218
    // Predicated region
    $region33: #{_lambda_.6} parent=5 // pred_check
      _
    $region34: #{_lambda_.6} parent=5 // pred_check_branch
      %221 = sbr.rel (%p218) target = $region36
    $region35: #{_lambda_.6} parent=5 // pred_region
      %s222 = ssub.s32 %s13, 1
      %p223 = scmp.lt.s32.totalorder %s18, 1
      %s224 = scalar_select %p223, %s18, 1
      %s225 = smul.addr %s224, 2
      %s226 = smul.addr %s225, 8
      %s227 = scalar_lea.vmem %s0, %s226
      %p228 = pneg %p39
      %p229 = pneg %p36
      %p230 = pneg %p60
      %p231 = pneg %p57
      %p232 = pneg %p81
      %p233 = pneg %p78
      %p234 = pneg %p102
      %p235 = pneg %p99
      %p236 = pneg %p128
      %p237 = pneg %p125
      %p238 = scmp.lt.s32.totalorder %s18, 1
      %s239 = scalar_select %p238, %s18, 1
      %s240 = smul.addr %s239, 4
      %s241 = scalar_lea.vmem %s4, %s240
      %p242 = pneg %p154
      %p243 = pneg %p151
      %p244 = scmp.lt.s32.totalorder %s18, 1
      %s245 = scalar_select %p244, %s18, 1
      %s246 = smul.addr %s245, 4
      %s247 = scalar_lea.vmem %s5, %s246
      %p248 = pneg %p180
      %p249 = pneg %p177
      %p250 = scmp.lt.s32.totalorder %s18, 1
      %s251 = scalar_select %p250, %s18, 1
      %s252 = smul.addr %s251, 2
      %s253 = scalar_lea.vmem %s6, %s252
      %p254 = scmp.lt.s32.totalorder %s18, 1
      %s255 = scalar_select %p254, %s18, 1
      %s256 = smul.addr %s255, 2
      %s257 = smul.addr %s256, 8
      %s258 = scalar_lea.vmem %s0, %s257
      %p259 = scmp.lt.s32.totalorder %s18, 1
      %s260 = scalar_select %p259, %s18, 1
      %s261 = smul.addr %s260, 4
      %s262 = scalar_lea.vmem %s4, %s261
      %p263 = scmp.lt.s32.totalorder %s18, 1
      %s264 = scalar_select %p263, %s18, 1
      %s265 = smul.addr %s264, 4
      %s266 = scalar_lea.vmem %s5, %s265
      %p267 = scmp.lt.s32.totalorder %s18, 1
      %s268 = scalar_select %p267, %s18, 1
      %s269 = smul.addr %s268, 2
      %s270 = scalar_lea.vmem %s6, %s269
      %v272 = vld [vmem:[%s258] sm:$0xff]
      %v273 = vld [vmem:[%s258 + $0x8] sm:$0xff]
      %v274 = vld [vmem:[%s1] sm:$0x1]
      %v275 = vperm.slane %v274, 0
      %v276 = vmul.f32 %v272, %v275
      %v277 = vmul.f32 %v273, %v275
      %v278 = vld [vmem:[%s1 + $0x1] sm:$0x1]
      %v279 = vperm.slane %v278, 0
      %v280 = vadd.f32 %v276, %v279
      %v281 = vadd.f32 %v277, %v279
      %v282 = vmax.f32 %v280, 0.0
      %v283 = vmax.f32 %v281, 0.0
      %vm284 = vcmask 519168
      %285 = vst.msk [vmem:[#allocation2] sm:$0xf] %vm284, 0
      %286 = vst.msk [vmem:[#allocation2 + $0x4] sm:$0xf] %vm284, 0
      %vm287 = vcmask 516096
      %288 = vst.msk [vmem:[#allocation2 + $0x8] sm:$0x1] %vm287, 0
      %v289 = vpack.c.bf16 %v282, %v282
      %v290 = vpack.c.bf16 %v283, %v283
      %vm291 = vsmask.f32 256
      %vm292 = vsmask.f32 4368
      %vm293 = vmor %vm291, %vm292
      %v295 = vshrl.u32 %v289, 16
      %v297 = vrot.slane %v295, 7
      %v298 = vshll.u32 %v289, 16
      %v300 = vor.u32 %v297, %v298
      %v301 = vrot.slane %v297, 4
      %v303 = vshrl.u32 %v290, 16
      %v305 = vrot.slane %v303, 7
      %v306 = vshll.u32 %v290, 16
      %v308 = vor.u32 %v305, %v306
      %v309 = vsel %vm293, %v301, %v308
      %v310 = vrot.slane %v305, 4
      %vm314 = vcmask 519168
      %vm315 = vsmask.f32 7938
      %vm316 = vmand %vm314, %vm315
      %v317 = vld [vmem:[#allocation2] sm:$0xf]
      %v318 = vsel %vm316, %v300, %v317
      %319 = vst [vmem:[#allocation2] sm:$0xf] %v318
      %320 = vst.msk [vmem:[#allocation2 + $0x4] sm:$0xf] %vm284, %v309
      %vm321 = vcmask 516096
      %vm322 = vmand %vm321, %vm291
      %v323 = vld [vmem:[#allocation2 + $0x8] sm:$0x1]
      %v324 = vsel %vm322, %v310, %v323
      %325 = vst [vmem:[#allocation2 + $0x8] sm:$0x1] %v324
      %v326 = vld [vmem:[#allocation2] sm:$0xf]
      %v327 = vld [vmem:[#allocation2 + $0x4] sm:$0xf]
      %v328 = vld [vmem:[#allocation2 + $0x8] sm:$0x1]
      %v329 = vlaneseq
      %v330 = vshrl.u32 %v329, 7
      %v331 = vlaneseq
      %v332 = vand.u32 %v331, 127
      %v333 = vmul.u32 %v330, 2
      %vm334 = vcmp.eq.s32.totalorder %v332, %v333
      %v335 = vsel %vm334, 1, 0
      %v336 = vcvt.s32.f32 %v335
      %v337 = vpack.c.bf16 %v336, %v336
      %v341 = vunpack.c.l.b16 %v326
      %v342 = vunpack.c.l.b16 %v327
      %v343 = vunpack.c.l.b16 %v328
      %v344 = vpack.c.b16 %v342, %v341
      %v345 = vpack.c.b16 %v343, %v343
      %vm347 = vcmask 146432
      %v349 = vsel %vm347, %v337, 0
      %vm351 = vcmask 1040384
      %v353 = vsel %vm351, %v345, 0
      %355 = vmatpush.bf16.msra.mxu0 0
      %356 = vmatpush.bf16.msra.mxu0 0
      %357 = vmatpush.bf16.msra.mxu0 0
      %358 = vmatpush.bf16.msra.mxu0 0
      %359 = vmatpush.bf16.msra.mxu0 0
      %360 = vmatpush.bf16.msra.mxu0 0
      %361 = vmatpush.bf16.msra.mxu0 %v353
      %362 = vmatpush.bf16.msra.mxu0 %v344
      %363 = vmatmul.bf16.gmra.mxu0 %v349
      %v364 = vpop.f32.mrf.mxu0
      %v365 = vadd.f32 0.0, %v364
      %v366 = vpop.f32.mrf.mxu0
      %367 = vdwg.mxu0
      %v368 = vpack.c.bf16 %v365, %v365
      %v369 = vld [vmem:[%s2] sm:$0xf]
      %v370 = vld [vmem:[%s2 + $0x4] sm:$0xf]
      %v371 = vld [vmem:[%s2 + $0x8] sm:$0xf]
      %v372 = vld [vmem:[%s2 + $0xc] sm:$0xf]
      %v373 = vld [vmem:[%s2 + $0x10] sm:$0xf]
      %v374 = vld [vmem:[%s2 + $0x14] sm:$0xf]
      %v375 = vld [vmem:[%s2 + $0x18] sm:$0xf]
      %v376 = vld [vmem:[%s2 + $0x1c] sm:$0xf]
      %v377 = vadd.s32 %v333, 1
      %vm378 = vcmp.eq.s32.totalorder %v332, %v377
      %v379 = vsel %vm378, 1, 0
      %v380 = vcvt.s32.f32 %v379
      %v381 = vpack.c.bf16 %v380, %v380
      %v383 = vsel %vm347, %v381, 0
      %385 = vmatpush.bf16.msra.mxu0 0
      %386 = vmatpush.bf16.msra.mxu0 0
      %387 = vmatpush.bf16.msra.mxu0 0
      %388 = vmatpush.bf16.msra.mxu0 0
      %389 = vmatpush.bf16.msra.mxu0 0
      %390 = vmatpush.bf16.msra.mxu0 0
      %391 = vmatpush.bf16.msra.mxu0 %v353
      %392 = vmatpush.bf16.msra.mxu0 %v344
      %393 = vmatmul.bf16.gmra.mxu0 %v383
      %v394 = vpop.f32.mrf.mxu0
      %v395 = vadd.f32 0.0, %v394
      %v396 = vpop.f32.mrf.mxu0
      %397 = vdwg.mxu0
      %v398 = vpack.c.bf16 %v395, %v395
      %s399 = scalar_lea.vmem %s2, 32
      %v400 = vld [vmem:[%s399] sm:$0xf]
      %v401 = vld [vmem:[%s399 + $0x4] sm:$0xf]
      %v402 = vld [vmem:[%s399 + $0x8] sm:$0xf]
      %v403 = vld [vmem:[%s399 + $0xc] sm:$0xf]
      %v404 = vld [vmem:[%s399 + $0x10] sm:$0xf]
      %v405 = vld [vmem:[%s399 + $0x14] sm:$0xf]
      %v406 = vld [vmem:[%s399 + $0x18] sm:$0xf]
      %v407 = vld [vmem:[%s399 + $0x1c] sm:$0xf]
      %v416 = vunpack.c.l.b16 %v400
      %v417 = vunpack.c.l.b16 %v401
      %v418 = vunpack.c.l.b16 %v402
      %v419 = vunpack.c.l.b16 %v403
      %v420 = vunpack.c.l.b16 %v404
      %v421 = vunpack.c.l.b16 %v405
      %v422 = vunpack.c.l.b16 %v406
      %v423 = vunpack.c.l.b16 %v407
      %v424 = vpack.c.b16 %v417, %v416
      %v425 = vpack.c.b16 %v419, %v418
      %v426 = vpack.c.b16 %v421, %v420
      %v427 = vpack.c.b16 %v423, %v422
      %vm432 = vcmask 523264
      %v434 = vsel %vm432, %v398, 0
      %436 = vmatpush.bf16.msra.mxu0 0
      %437 = vmatpush.bf16.msra.mxu0 0
      %438 = vmatpush.bf16.msra.mxu0 0
      %439 = vmatpush.bf16.msra.mxu0 0
      %440 = vmatpush.bf16.msra.mxu0 %v427
      %441 = vmatpush.bf16.msra.mxu0 %v426
      %442 = vmatpush.bf16.msra.mxu0 %v425
      %443 = vmatpush.bf16.msra.mxu0 %v424
      %444 = vmatmul.bf16.gmra.mxu0 %v434
      %v445 = vpop.f32.mrf.mxu0
      %v446 = vadd.f32 0.0, %v445
      %v447 = vpop.f32.mrf.mxu0
      %448 = vdwg.mxu0
      %v457 = vunpack.c.l.b16 %v369
      %v458 = vunpack.c.l.b16 %v370
      %v459 = vunpack.c.l.b16 %v371
      %v460 = vunpack.c.l.b16 %v372
      %v461 = vunpack.c.l.b16 %v373
      %v462 = vunpack.c.l.b16 %v374
      %v463 = vunpack.c.l.b16 %v375
      %v464 = vunpack.c.l.b16 %v376
      %v465 = vpack.c.b16 %v458, %v457
      %v466 = vpack.c.b16 %v460, %v459
      %v467 = vpack.c.b16 %v462, %v461
      %v468 = vpack.c.b16 %v464, %v463
      %v474 = vsel %vm432, %v368, 0
      %476 = vmatpush.bf16.msra.mxu0 0
      %477 = vmatpush.bf16.msra.mxu0 0
      %478 = vmatpush.bf16.msra.mxu0 0
      %479 = vmatpush.bf16.msra.mxu0 0
      %480 = vmatpush.bf16.msra.mxu0 %v468
      %481 = vmatpush.bf16.msra.mxu0 %v467
      %482 = vmatpush.bf16.msra.mxu0 %v466
      %483 = vmatpush.bf16.msra.mxu0 %v465
      %484 = vmatmul.bf16.gmra.mxu0 %v474
      %v485 = vpop.f32.mrf.mxu0
      %v486 = vadd.f32 %v446, %v485
      %v487 = vpop.f32.mrf.mxu0
      %488 = vdwg.mxu0
      %v489 = vadd.s32 %v333, 2
      %vm490 = vcmp.eq.s32.totalorder %v332, %v489
      %v491 = vsel %vm490, 1, 0
      %v492 = vcvt.s32.f32 %v491
      %v493 = vpack.c.bf16 %v492, %v492
      %v495 = vsel %vm347, %v493, 0
      %497 = vmatpush.bf16.msra.mxu0 0
      %498 = vmatpush.bf16.msra.mxu0 0
      %499 = vmatpush.bf16.msra.mxu0 0
      %500 = vmatpush.bf16.msra.mxu0 0
      %501 = vmatpush.bf16.msra.mxu0 0
      %502 = vmatpush.bf16.msra.mxu0 0
      %503 = vmatpush.bf16.msra.mxu0 %v353
      %504 = vmatpush.bf16.msra.mxu0 %v344
      %505 = vmatmul.bf16.gmra.mxu0 %v495
      %v506 = vpop.f32.mrf.mxu0
      %v507 = vadd.f32 0.0, %v506
      %v508 = vpop.f32.mrf.mxu0
      %509 = vdwg.mxu0
      %v510 = vpack.c.bf16 %v507, %v507
      %s511 = scalar_lea.vmem %s2, 64
      %v512 = vld [vmem:[%s511] sm:$0xf]
      %v513 = vld [vmem:[%s511 + $0x4] sm:$0xf]
      %v514 = vld [vmem:[%s511 + $0x8] sm:$0xf]
      %v515 = vld [vmem:[%s511 + $0xc] sm:$0xf]
      %v516 = vld [vmem:[%s511 + $0x10] sm:$0xf]
      %v517 = vld [vmem:[%s511 + $0x14] sm:$0xf]
      %v518 = vld [vmem:[%s511 + $0x18] sm:$0xf]
      %v519 = vld [vmem:[%s511 + $0x1c] sm:$0xf]
      %v528 = vunpack.c.l.b16 %v512
      %v529 = vunpack.c.l.b16 %v513
      %v530 = vunpack.c.l.b16 %v514
      %v531 = vunpack.c.l.b16 %v515
      %v532 = vunpack.c.l.b16 %v516
      %v533 = vunpack.c.l.b16 %v517
      %v534 = vunpack.c.l.b16 %v518
      %v535 = vunpack.c.l.b16 %v519
      %v536 = vpack.c.b16 %v529, %v528
      %v537 = vpack.c.b16 %v531, %v530
      %v538 = vpack.c.b16 %v533, %v532
      %v539 = vpack.c.b16 %v535, %v534
      %v545 = vsel %vm432, %v510, 0
      %547 = vmatpush.bf16.msra.mxu0 0
      %548 = vmatpush.bf16.msra.mxu0 0
      %549 = vmatpush.bf16.msra.mxu0 0
      %550 = vmatpush.bf16.msra.mxu0 0
      %551 = vmatpush.bf16.msra.mxu0 %v539
      %552 = vmatpush.bf16.msra.mxu0 %v538
      %553 = vmatpush.bf16.msra.mxu0 %v537
      %554 = vmatpush.bf16.msra.mxu0 %v536
      %555 = vmatmul.bf16.gmra.mxu0 %v545
      %v556 = vpop.f32.mrf.mxu0
      %v557 = vadd.f32 0.0, %v556
      %v558 = vpop.f32.mrf.mxu0
      %559 = vdwg.mxu0
      %v560 = vadd.f32 %v486, %v557
      %v561 = vpack.c.bf16 %v560, %v560
      %562 = vst.msk [vmem:[%s262] sm:$0xf] %vm284, %v561
      %v563 = vld [vmem:[%s3] sm:$0xf]
      %v564 = vld [vmem:[%s3 + $0x4] sm:$0xf]
      %v565 = vld [vmem:[%s3 + $0x8] sm:$0xf]
      %v566 = vld [vmem:[%s3 + $0xc] sm:$0xf]
      %v567 = vld [vmem:[%s3 + $0x10] sm:$0xf]
      %v568 = vld [vmem:[%s3 + $0x14] sm:$0xf]
      %v569 = vld [vmem:[%s3 + $0x18] sm:$0xf]
      %v570 = vld [vmem:[%s3 + $0x1c] sm:$0xf]
      %v579 = vunpack.c.l.b16 %v563
      %v580 = vunpack.c.l.b16 %v564
      %v581 = vunpack.c.l.b16 %v565
      %v582 = vunpack.c.l.b16 %v566
      %v583 = vunpack.c.l.b16 %v567
      %v584 = vunpack.c.l.b16 %v568
      %v585 = vunpack.c.l.b16 %v569
      %v586 = vunpack.c.l.b16 %v570
      %v587 = vpack.c.b16 %v580, %v579
      %v588 = vpack.c.b16 %v582, %v581
      %v589 = vpack.c.b16 %v584, %v583
      %v590 = vpack.c.b16 %v586, %v585
      %595 = vmatpush.bf16.msra.mxu0 0
      %596 = vmatpush.bf16.msra.mxu0 0
      %597 = vmatpush.bf16.msra.mxu0 0
      %598 = vmatpush.bf16.msra.mxu0 0
      %599 = vmatpush.bf16.msra.mxu0 %v590
      %600 = vmatpush.bf16.msra.mxu0 %v589
      %601 = vmatpush.bf16.msra.mxu0 %v588
      %602 = vmatpush.bf16.msra.mxu0 %v587
      %603 = vmatmul.bf16.gmra.mxu0 %v434
      %v604 = vpop.f32.mrf.mxu0
      %v605 = vadd.f32 0.0, %v604
      %v606 = vpop.f32.mrf.mxu0
      %607 = vdwg.mxu0
      %v608 = vpack.c.bf16 %v605, %v605
      %609 = vst.msk [vmem:[%s266] sm:$0xf] %vm284, %v608
      %v610 = vsel %vm432, %v560, 0.0
      %v611 = vrot.slane %v610, 4
      %v612 = vadd.f32 %v610, %v611
      %v613 = vrot.slane %v612, 2
      %v614 = vadd.f32 %v612, %v613
      %v615 = vrot.slane %v614, 1
      %v616 = vadd.f32 %v614, %v615
      %v617 = vmul.f32 %v560, %v560
      %v618 = vsel %vm432, %v617, 0.0
      %v619 = vrot.slane %v618, 4
      %v620 = vadd.f32 %v618, %v619
      %v621 = vrot.slane %v620, 2
      %v622 = vadd.f32 %v620, %v621
      %v623 = vrot.slane %v622, 1
      %v624 = vadd.f32 %v622, %v623
      %v625 = vsel %vm351, %v616, %v624
      %vm626 = vcmask 517120
      %627 = vst.msk [vmem:[%s270] sm:$0x3] %vm626, %v625
      %p628 = scmp.lt.s32.totalorder %s18, 1
      %s629 = scalar_select %p628, %s18, 1
      %s630 = smul.addr %s629, 4
      %s631 = scalar_lea.vmem %s4, %s630
      %p632 = scmp.lt.s32.totalorder %s18, 1
      %s633 = scalar_select %p632, %s18, 1
      %s634 = smul.addr %s633, 4
      %s635 = scalar_lea.vmem %s5, %s634
      %p636 = scmp.lt.s32.totalorder %s18, 1
      %s637 = scalar_select %p636, %s18, 1
      %s638 = smul.addr %s637, 2
      %s639 = scalar_lea.vmem %s6, %s638
      // Predicated region
      $region37: #{_lambda_.6} parent=35 // pred_check
        %p640 = pneg %p125
      $region38: #{_lambda_.6} parent=35 // pred_check_branch
        %642 = sbr.rel (%p640) target = $region40
      $region39: #{_lambda_.6} parent=35 // pred_region
        _
      $region40: #{_lambda_.6} parent=35 // pred_fallthru
        _
      // Predicated region
      $region41: #{_lambda_.6} parent=35 // pred_check
        %p643 = pneg %p151
      $region42: #{_lambda_.6} parent=35 // pred_check_branch
        %645 = sbr.rel (%p643) target = $region44
      $region43: #{_lambda_.6} parent=35 // pred_region
        _
      $region44: #{_lambda_.6} parent=35 // pred_fallthru
        _
      // Predicated region
      $region45: #{_lambda_.6} parent=35 // pred_check
        %p646 = pneg %p177
      $region46: #{_lambda_.6} parent=35 // pred_check_branch
        %648 = sbr.rel (%p646) target = $region48
      $region47: #{_lambda_.6} parent=35 // pred_region
        _
      $region48: #{_lambda_.6} parent=35 // pred_fallthru
        _
    $region36: #{_lambda_.6} parent=5 // pred_fallthru
      _
    %p649 = scmp.le.s32.totalorder 2, %s13
    // Predicated region
    $region49: #{_lambda_.6} parent=5 // pred_check
      %p650 = pneg %p649
    $region50: #{_lambda_.6} parent=5 // pred_check_branch
      %652 = sbr.rel (%p650) target = $region52
    $region51: #{_lambda_.6} parent=5 // pred_region
      %s653 = ssub.s32 %s13, 2
      // Predicated region
      $region53: #{_lambda_.6} parent=51 // pred_check
        %p654 = pneg %p131
      $region54: #{_lambda_.6} parent=51 // pred_check_branch
        %656 = sbr.rel (%p654) target = $region56
      $region55: #{_lambda_.6} parent=51 // pred_region
        %p657 = scmp.lt.s32.totalorder %s19, 1
        %s658 = scalar_select %p657, %s19, 1
        %s659 = smul.addr %s658, 4
        %s660 = scalar_lea.vmem %s4, %s659
      $region56: #{_lambda_.6} parent=51 // pred_fallthru
        _
      // Predicated region
      $region57: #{_lambda_.6} parent=51 // pred_check
        %p661 = pneg %p157
      $region58: #{_lambda_.6} parent=51 // pred_check_branch
        %663 = sbr.rel (%p661) target = $region60
      $region59: #{_lambda_.6} parent=51 // pred_region
        %p664 = scmp.lt.s32.totalorder %s19, 1
        %s665 = scalar_select %p664, %s19, 1
        %s666 = smul.addr %s665, 4
        %s667 = scalar_lea.vmem %s5, %s666
      $region60: #{_lambda_.6} parent=51 // pred_fallthru
        _
      // Predicated region
      $region61: #{_lambda_.6} parent=51 // pred_check
        %p668 = pneg %p183
      $region62: #{_lambda_.6} parent=51 // pred_check_branch
        %670 = sbr.rel (%p668) target = $region64
      $region63: #{_lambda_.6} parent=51 // pred_region
        %p671 = scmp.lt.s32.totalorder %s19, 1
        %s672 = scalar_select %p671, %s19, 1
        %s673 = smul.addr %s672, 2
        %s674 = scalar_lea.vmem %s6, %s673
      $region64: #{_lambda_.6} parent=51 // pred_fallthru
        _
    $region52: #{_lambda_.6} parent=5 // pred_fallthru
      _
  $region6: #{_lambda_.6} parent=0 // loop_footer
    %s17 = sadd.s32 1, %s13
  $region7: #{_lambda_.6} parent=0 // loop_footer_branch
    %12 = sbr.rel target = $region3
  $region8: #{_lambda_.6} parent=0 // loop_exit
    _

// kernel: _lambda_.8
$region0: #{_lambda_.8}
  #allocation0 [shape = 'u32[]', space=smem, size = 0x4, offset = 0x4, fixed_abs, tag = 'smem constant byte address 0x4 - core index']
  #allocation1 [shape = 'u32[72,128]{1,0:T(1,128)}', space=vmem, size = 0x9000, scoped, tag = 'internal scratch']
  #allocation2 [shape = 'bf16[10,64]{1,0:T(8,128)(2,1)}', space=vmem, size = 0x1000, scoped, tag = 'scratch operand']
  %s0 = inlined_call_operand.vmem [shape: bf16[2,8,64], index: 0, kind: input, shape index: {}]
  %s1 = inlined_call_operand.vmem [shape: f32[2,64], index: 1, kind: input, shape index: {}]
  %s2 = inlined_call_operand.vmem [shape: bf16[3,64,64], index: 2, kind: input, shape index: {}]
  %s3 = inlined_call_operand.vmem [shape: bf16[2,8,64], index: 3, kind: output, shape index: {0}]
  %s4 = inlined_call_operand.vmem [shape: f32[2,2,64], index: 4, kind: output, shape index: {1}]
  %5 = xla_tuple %s3, %s4
  %s6 = sld [smem:[#allocation0]]
  $region53: #{_lambda_.8} parent=0
    _
  %s8 = ssub.s32 1, %s6
  %s9 = scalar_select 0, %s8, %s6
  loop: start=0, step=1, limit=4
  $region2: #{_lambda_.8} parent=0 // loop_pre_header
    _
  $region3: #{_lambda_.8} parent=0 // loop_header
    %s11 = sphi 0, %s15
    %p12 = scmp.ge.s32.totalorder %s11, 4
    %s21 = sphi 0, %s23
    %s24 = sphi 0, %s21
    %s25 = sphi 0, %s24
    %s41 = sphi 0, %s25
    %s45 = sphi 0, %s45
    %s47 = sphi 0, %s45
    %s48 = sphi 0, %s47
    %s62 = sphi 0, %s48
    %s66 = sphi 0, %s66
    %s68 = sphi 0, %s66
    %s69 = sphi 0, %s68
    %s83 = sphi 0, %s69
    %s89 = sphi 0, %s91
    %s92 = sphi 0, %s89
    %s93 = sphi 0, %s92
    %s109 = sphi 0, %s93
    %s115 = sphi 0, %s117
    %s118 = sphi 0, %s115
    %s119 = sphi 0, %s118
    %s135 = sphi 0, %s119
  $region4: #{_lambda_.8} parent=0 // loop_header_branch
    %14 = sbr.rel (%p12) target = $region8
  $region5: #{_lambda_.8} parent=0 // loop_body
    %s16 = ssub.s32 %s11, 1
    %s17 = ssub.s32 %s11, 2
    %s18 = sadd.s32 %s11, 1
    %s19 = ssub.s32 %s11, %s18
    %p20 = scmp.eq.s32.totalorder %s19, 0
    %s22 = sadd.s32 %s21, 1
    %s23 = scalar_select %p20, %s21, %s22
    %p26 = pneg %p20
    %p27 = scmp.eq.s32.totalorder %s11, 1
    %p28 = por %p26, %p27
    %p29 = scmp.ne.s32.totalorder %s21, %s24
    %p30 = scmp.eq.s32.totalorder %s11, 0
    %p31 = por %p29, %p30
    %p32 = scmp.ne.s32.totalorder %s21, %s24
    %p33 = scmp.eq.s32.totalorder %s16, 1
    %p34 = por %p32, %p33
    %p35 = scmp.ne.s32.totalorder %s24, %s25
    %p36 = scmp.eq.s32.totalorder %s16, 0
    %p37 = por %p35, %p36
    %p38 = scmp.ne.s32.totalorder %s24, %s25
    %p39 = scmp.eq.s32.totalorder %s17, 1
    %p40 = por %p38, %p39
    %p42 = scmp.ne.s32.totalorder %s25, %s41
    %p43 = scmp.eq.s32.totalorder %s17, 0
    %p44 = por %p42, %p43
    %s46 = sadd.s32 %s45, 1
    %p49 = scmp.eq.s32.totalorder %s11, 1
    %p50 = scmp.ne.s32.totalorder %s45, %s47
    %p51 = scmp.eq.s32.totalorder %s11, 0
    %p52 = por %p50, %p51
    %p53 = scmp.ne.s32.totalorder %s45, %s47
    %p54 = scmp.eq.s32.totalorder %s16, 1
    %p55 = por %p53, %p54
    %p56 = scmp.ne.s32.totalorder %s47, %s48
    %p57 = scmp.eq.s32.totalorder %s16, 0
    %p58 = por %p56, %p57
    %p59 = scmp.ne.s32.totalorder %s47, %s48
    %p60 = scmp.eq.s32.totalorder %s17, 1
    %p61 = por %p59, %p60
    %p63 = scmp.ne.s32.totalorder %s48, %s62
    %p64 = scmp.eq.s32.totalorder %s17, 0
    %p65 = por %p63, %p64
    %s67 = sadd.s32 %s66, 1
    %p70 = scmp.eq.s32.totalorder %s11, 1
    %p71 = scmp.ne.s32.totalorder %s66, %s68
    %p72 = scmp.eq.s32.totalorder %s11, 0
    %p73 = por %p71, %p72
    %p74 = scmp.ne.s32.totalorder %s66, %s68
    %p75 = scmp.eq.s32.totalorder %s16, 1
    %p76 = por %p74, %p75
    %p77 = scmp.ne.s32.totalorder %s68, %s69
    %p78 = scmp.eq.s32.totalorder %s16, 0
    %p79 = por %p77, %p78
    %p80 = scmp.ne.s32.totalorder %s68, %s69
    %p81 = scmp.eq.s32.totalorder %s17, 1
    %p82 = por %p80, %p81
    %p84 = scmp.ne.s32.totalorder %s69, %s83
    %p85 = scmp.eq.s32.totalorder %s17, 0
    %p86 = por %p84, %p85
    %s87 = ssub.s32 %s11, %s18
    %p88 = scmp.eq.s32.totalorder %s87, 0
    %s90 = sadd.s32 %s89, 1
    %s91 = scalar_select %p88, %s89, %s90
    %p94 = pneg %p88
    %p95 = scmp.eq.s32.totalorder %s11, 1
    %p96 = por %p94, %p95
    %p97 = scmp.ne.s32.totalorder %s89, %s92
    %p98 = scmp.eq.s32.totalorder %s11, 0
    %p99 = por %p97, %p98
    %p100 = scmp.ne.s32.totalorder %s89, %s92
    %p101 = scmp.eq.s32.totalorder %s16, 1
    %p102 = por %p100, %p101
    %p103 = scmp.ne.s32.totalorder %s92, %s93
    %p104 = scmp.eq.s32.totalorder %s16, 0
    %p105 = por %p103, %p104
    %p106 = scmp.ne.s32.totalorder %s92, %s93
    %p107 = scmp.eq.s32.totalorder %s17, 1
    %p108 = por %p106, %p107
    %p110 = scmp.ne.s32.totalorder %s93, %s109
    %p111 = scmp.eq.s32.totalorder %s17, 0
    %p112 = por %p110, %p111
    %s113 = ssub.s32 %s11, %s18
    %p114 = scmp.eq.s32.totalorder %s113, 0
    %s116 = sadd.s32 %s115, 1
    %s117 = scalar_select %p114, %s115, %s116
    %p120 = pneg %p114
    %p121 = scmp.eq.s32.totalorder %s11, 1
    %p122 = por %p120, %p121
    %p123 = scmp.ne.s32.totalorder %s115, %s118
    %p124 = scmp.eq.s32.totalorder %s11, 0
    %p125 = por %p123, %p124
    %p126 = scmp.ne.s32.totalorder %s115, %s118
    %p127 = scmp.eq.s32.totalorder %s16, 1
    %p128 = por %p126, %p127
    %p129 = scmp.ne.s32.totalorder %s118, %s119
    %p130 = scmp.eq.s32.totalorder %s16, 0
    %p131 = por %p129, %p130
    %p132 = scmp.ne.s32.totalorder %s118, %s119
    %p133 = scmp.eq.s32.totalorder %s17, 1
    %p134 = por %p132, %p133
    %p136 = scmp.ne.s32.totalorder %s119, %s135
    %p137 = scmp.eq.s32.totalorder %s17, 0
    %p138 = por %p136, %p137
    %p139 = scmp.le.s32.totalorder 1, %s11
    %p140 = scmp.lt.s32.totalorder %s11, 3
    %p141 = pnand %p139, %p140
    %p142 = pneg %p141
    // Predicated region
    $region9: #{_lambda_.8} parent=5 // pred_check
      _
    $region10: #{_lambda_.8} parent=5 // pred_check_branch
      %144 = sbr.rel (%p141) target = $region12
    $region11: #{_lambda_.8} parent=5 // pred_region
      %s145 = ssub.s32 %s11, 1
      // Predicated region
      $region13: #{_lambda_.8} parent=11 // pred_check
        %p146 = pneg %p58
      $region14: #{_lambda_.8} parent=11 // pred_check_branch
        %148 = sbr.rel (%p146) target = $region16
      $region15: #{_lambda_.8} parent=11 // pred_region
        _
      $region16: #{_lambda_.8} parent=11 // pred_fallthru
        _
      // Predicated region
      $region17: #{_lambda_.8} parent=11 // pred_check
        %p149 = pneg %p79
      $region18: #{_lambda_.8} parent=11 // pred_check_branch
        %151 = sbr.rel (%p149) target = $region20
      $region19: #{_lambda_.8} parent=11 // pred_region
        _
      $region20: #{_lambda_.8} parent=11 // pred_fallthru
        _
    $region12: #{_lambda_.8} parent=5 // pred_fallthru
      _
    %p152 = scmp.lt.s32.totalorder %s11, 2
    // Predicated region
    $region21: #{_lambda_.8} parent=5 // pred_check
      %p153 = pneg %p152
    $region22: #{_lambda_.8} parent=5 // pred_check_branch
      %155 = sbr.rel (%p153) target = $region24
    $region23: #{_lambda_.8} parent=5 // pred_region
      // Predicated region
      $region25: #{_lambda_.8} parent=23 // pred_check
        %p156 = pneg %p31
      $region26: #{_lambda_.8} parent=23 // pred_check_branch
        %158 = sbr.rel (%p156) target = $region28
      $region27: #{_lambda_.8} parent=23 // pred_region
        %p159 = scmp.lt.s32.totalorder %s11, 1
        %s160 = scalar_select %p159, %s11, 1
        %s161 = smul.addr %s160, 4
        %s162 = scalar_lea.vmem %s0, %s161
      $region28: #{_lambda_.8} parent=23 // pred_fallthru
        _
    $region24: #{_lambda_.8} parent=5 // pred_fallthru
      _
    %p163 = scmp.le.s32.totalorder 1, %s11
    %p164 = scmp.lt.s32.totalorder %s11, 3
    %p165 = pnand %p163, %p164
    %p166 = pneg %p165
    // Predicated region
    $region29: #{_lambda_.8} parent=5 // pred_check
      _
    $region30: #{_lambda_.8} parent=5 // pred_check_branch
      %168 = sbr.rel (%p165) target = $region32
    $region31: #{_lambda_.8} parent=5 // pred_region
      %s169 = ssub.s32 %s11, 1
      %p170 = scmp.lt.s32.totalorder %s16, 1
      %s171 = scalar_select %p170, %s16, 1
      %s172 = smul.addr %s171, 4
      %s173 = scalar_lea.vmem %s0, %s172
      %p174 = pneg %p37
      %p175 = pneg %p34
      %p176 = pneg %p58
      %p177 = pneg %p55
      %p178 = pneg %p79
      %p179 = pneg %p76
      %p180 = pneg %p105
      %p181 = pneg %p102
      %p182 = scmp.lt.s32.totalorder %s16, 1
      %s183 = scalar_select %p182, %s16, 1
      %s184 = smul.addr %s183, 4
      %s185 = scalar_lea.vmem %s3, %s184
      %p186 = pneg %p131
      %p187 = pneg %p128
      %p188 = scmp.lt.s32.totalorder %s16, 1
      %s189 = scalar_select %p188, %s16, 1
      %s190 = smul.addr %s189, 2
      %s191 = scalar_lea.vmem %s4, %s190
      %p192 = scmp.lt.s32.totalorder %s16, 1
      %s193 = scalar_select %p192, %s16, 1
      %s194 = smul.addr %s193, 4
      %s195 = scalar_lea.vmem %s0, %s194
      %p196 = scmp.lt.s32.totalorder %s16, 1
      %s197 = scalar_select %p196, %s16, 1
      %s198 = smul.addr %s197, 4
      %s199 = scalar_lea.vmem %s3, %s198
      %p200 = scmp.lt.s32.totalorder %s16, 1
      %s201 = scalar_select %p200, %s16, 1
      %s202 = smul.addr %s201, 2
      %s203 = scalar_lea.vmem %s4, %s202
      %v205 = vld [vmem:[%s195] sm:$0xf]
      %v206 = vunpack.c.l.bf16 %v205
      %v207 = vld [vmem:[%s1] sm:$0x1]
      %v208 = vperm.slane %v207, 0
      %v209 = vmul.f32 %v206, %v208
      %v210 = vld [vmem:[%s1 + $0x1] sm:$0x1]
      %v211 = vperm.slane %v210, 0
      %v212 = vadd.f32 %v209, %v211
      %v213 = vmax.f32 %v212, 0.0
      %vm214 = vcmask 519168
      %215 = vst.msk [vmem:[#allocation2] sm:$0xf] %vm214, 0
      %vm216 = vcmask 516096
      %217 = vst.msk [vmem:[#allocation2 + $0x4] sm:$0x1] %vm216, 0
      %v218 = vpack.c.bf16 %v213, %v213
      %v220 = vshrl.u32 %v218, 16
      %v222 = vrot.slane %v220, 7
      %v223 = vshll.u32 %v218, 16
      %v225 = vor.u32 %v222, %v223
      %v226 = vrot.slane %v222, 4
      %vm229 = vcmask 519168
      %vm230 = vsmask.f32 7938
      %vm231 = vmand %vm229, %vm230
      %v232 = vld [vmem:[#allocation2] sm:$0xf]
      %v233 = vsel %vm231, %v225, %v232
      %234 = vst [vmem:[#allocation2] sm:$0xf] %v233
      %vm235 = vcmask 516096
      %vm236 = vsmask.f32 256
      %vm237 = vmand %vm235, %vm236
      %v238 = vld [vmem:[#allocation2 + $0x4] sm:$0x1]
      %v239 = vsel %vm237, %v226, %v238
      %240 = vst [vmem:[#allocation2 + $0x4] sm:$0x1] %v239
      %v241 = vld [vmem:[#allocation2] sm:$0xf]
      %v242 = vld [vmem:[#allocation2 + $0x4] sm:$0x1]
      %v243 = vld [vmem:[%s2] sm:$0xf]
      %v244 = vld [vmem:[%s2 + $0x4] sm:$0xf]
      %v245 = vld [vmem:[%s2 + $0x8] sm:$0xf]
      %v246 = vld [vmem:[%s2 + $0xc] sm:$0xf]
      %v247 = vld [vmem:[%s2 + $0x10] sm:$0xf]
      %v248 = vld [vmem:[%s2 + $0x14] sm:$0xf]
      %v249 = vld [vmem:[%s2 + $0x18] sm:$0xf]
      %v250 = vld [vmem:[%s2 + $0x1c] sm:$0xf]
      %s251 = scalar_lea.vmem %s2, 32
      %v252 = vld [vmem:[%s251] sm:$0xf]
      %v253 = vld [vmem:[%s251 + $0x4] sm:$0xf]
      %v254 = vld [vmem:[%s251 + $0x8] sm:$0xf]
      %v255 = vld [vmem:[%s251 + $0xc] sm:$0xf]
      %v256 = vld [vmem:[%s251 + $0x10] sm:$0xf]
      %v257 = vld [vmem:[%s251 + $0x14] sm:$0xf]
      %v258 = vld [vmem:[%s251 + $0x18] sm:$0xf]
      %v259 = vld [vmem:[%s251 + $0x1c] sm:$0xf]
      %v262 = vunpack.c.l.b16 %v241
      %v263 = vunpack.c.l.b16 %v242
      %v264 = vpack.c.b16 %v263, %v262
      %v266 = vshrl.u32 %v264, 16
      %v268 = vshll.u32 %v264, 16
      %v270 = vrot.slane %v268, 1
      %v271 = vor.u32 %v266, %v270
      %v280 = vunpack.c.l.b16 %v252
      %v281 = vunpack.c.l.b16 %v253
      %v282 = vunpack.c.l.b16 %v254
      %v283 = vunpack.c.l.b16 %v255
      %v284 = vunpack.c.l.b16 %v256
      %v285 = vunpack.c.l.b16 %v257
      %v286 = vunpack.c.l.b16 %v258
      %v287 = vunpack.c.l.b16 %v259
      %v288 = vpack.c.b16 %v281, %v280
      %v289 = vpack.c.b16 %v283, %v282
      %v290 = vpack.c.b16 %v285, %v284
      %v291 = vpack.c.b16 %v287, %v286
      %vm296 = vcmask 523264
      %v298 = vsel %vm296, %v271, 0
      %300 = vmatpush.bf16.msra.mxu0 0
      %301 = vmatpush.bf16.msra.mxu0 0
      %302 = vmatpush.bf16.msra.mxu0 0
      %303 = vmatpush.bf16.msra.mxu0 0
      %304 = vmatpush.bf16.msra.mxu0 %v291
      %305 = vmatpush.bf16.msra.mxu0 %v290
      %306 = vmatpush.bf16.msra.mxu0 %v289
      %307 = vmatpush.bf16.msra.mxu0 %v288
      %308 = vmatmul.bf16.gmra.mxu0 %v298
      %v309 = vpop.f32.mrf.mxu0
      %v310 = vadd.f32 0.0, %v309
      %v311 = vpop.f32.mrf.mxu0
      %312 = vdwg.mxu0
      %v321 = vunpack.c.l.b16 %v243
      %v322 = vunpack.c.l.b16 %v244
      %v323 = vunpack.c.l.b16 %v245
      %v324 = vunpack.c.l.b16 %v246
      %v325 = vunpack.c.l.b16 %v247
      %v326 = vunpack.c.l.b16 %v248
      %v327 = vunpack.c.l.b16 %v249
      %v328 = vunpack.c.l.b16 %v250
      %v329 = vpack.c.b16 %v322, %v321
      %v330 = vpack.c.b16 %v324, %v323
      %v331 = vpack.c.b16 %v326, %v325
      %v332 = vpack.c.b16 %v328, %v327
      %v338 = vsel %vm296, %v241, 0
      %340 = vmatpush.bf16.msra.mxu0 0
      %341 = vmatpush.bf16.msra.mxu0 0
      %342 = vmatpush.bf16.msra.mxu0 0
      %343 = vmatpush.bf16.msra.mxu0 0
      %344 = vmatpush.bf16.msra.mxu0 %v332
      %345 = vmatpush.bf16.msra.mxu0 %v331
      %346 = vmatpush.bf16.msra.mxu0 %v330
      %347 = vmatpush.bf16.msra.mxu0 %v329
      %348 = vmatmul.bf16.gmra.mxu0 %v338
      %v349 = vpop.f32.mrf.mxu0
      %v350 = vadd.f32 %v310, %v349
      %v351 = vpop.f32.mrf.mxu0
      %352 = vdwg.mxu0
      %s353 = scalar_lea.vmem %s2, 64
      %v354 = vld [vmem:[%s353] sm:$0xf]
      %v355 = vld [vmem:[%s353 + $0x4] sm:$0xf]
      %v356 = vld [vmem:[%s353 + $0x8] sm:$0xf]
      %v357 = vld [vmem:[%s353 + $0xc] sm:$0xf]
      %v358 = vld [vmem:[%s353 + $0x10] sm:$0xf]
      %v359 = vld [vmem:[%s353 + $0x14] sm:$0xf]
      %v360 = vld [vmem:[%s353 + $0x18] sm:$0xf]
      %v361 = vld [vmem:[%s353 + $0x1c] sm:$0xf]
      %v362 = vrot.slane %v264, 1
      %v371 = vunpack.c.l.b16 %v354
      %v372 = vunpack.c.l.b16 %v355
      %v373 = vunpack.c.l.b16 %v356
      %v374 = vunpack.c.l.b16 %v357
      %v375 = vunpack.c.l.b16 %v358
      %v376 = vunpack.c.l.b16 %v359
      %v377 = vunpack.c.l.b16 %v360
      %v378 = vunpack.c.l.b16 %v361
      %v379 = vpack.c.b16 %v372, %v371
      %v380 = vpack.c.b16 %v374, %v373
      %v381 = vpack.c.b16 %v376, %v375
      %v382 = vpack.c.b16 %v378, %v377
      %v388 = vsel %vm296, %v362, 0
      %390 = vmatpush.bf16.msra.mxu0 0
      %391 = vmatpush.bf16.msra.mxu0 0
      %392 = vmatpush.bf16.msra.mxu0 0
      %393 = vmatpush.bf16.msra.mxu0 0
      %394 = vmatpush.bf16.msra.mxu0 %v382
      %395 = vmatpush.bf16.msra.mxu0 %v381
      %396 = vmatpush.bf16.msra.mxu0 %v380
      %397 = vmatpush.bf16.msra.mxu0 %v379
      %398 = vmatmul.bf16.gmra.mxu0 %v388
      %v399 = vpop.f32.mrf.mxu0
      %v400 = vadd.f32 0.0, %v399
      %v401 = vpop.f32.mrf.mxu0
      %402 = vdwg.mxu0
      %v403 = vadd.f32 %v350, %v400
      %v404 = vpack.c.bf16 %v403, %v403
      %405 = vst.msk [vmem:[%s199] sm:$0xf] %vm214, %v404
      %v406 = vsel %vm296, %v403, 0.0
      %v407 = vrot.slane %v406, 4
      %v408 = vadd.f32 %v406, %v407
      %v409 = vrot.slane %v408, 2
      %v410 = vadd.f32 %v408, %v409
      %v411 = vrot.slane %v410, 1
      %v412 = vadd.f32 %v410, %v411
      %v413 = vmul.f32 %v403, %v403
      %v414 = vsel %vm296, %v413, 0.0
      %v415 = vrot.slane %v414, 4
      %v416 = vadd.f32 %v414, %v415
      %v417 = vrot.slane %v416, 2
      %v418 = vadd.f32 %v416, %v417
      %v419 = vrot.slane %v418, 1
      %v420 = vadd.f32 %v418, %v419
      %vm421 = vcmask 1040384
      %v422 = vsel %vm421, %v412, %v420
      %vm423 = vcmask 517120
      %424 = vst.msk [vmem:[%s203] sm:$0x3] %vm423, %v422
      %p425 = scmp.lt.s32.totalorder %s16, 1
      %s426 = scalar_select %p425, %s16, 1
      %s427 = smul.addr %s426, 4
      %s428 = scalar_lea.vmem %s3, %s427
      %p429 = scmp.lt.s32.totalorder %s16, 1
      %s430 = scalar_select %p429, %s16, 1
      %s431 = smul.addr %s430, 2
      %s432 = scalar_lea.vmem %s4, %s431
      // Predicated region
      $region33: #{_lambda_.8} parent=31 // pred_check
        %p433 = pneg %p102
      $region34: #{_lambda_.8} parent=31 // pred_check_branch
        %435 = sbr.rel (%p433) target = $region36
      $region35: #{_lambda_.8} parent=31 // pred_region
        _
      $region36: #{_lambda_.8} parent=31 // pred_fallthru
        _
      // Predicated region
      $region37: #{_lambda_.8} parent=31 // pred_check
        %p436 = pneg %p128
      $region38: #{_lambda_.8} parent=31 // pred_check_branch
        %438 = sbr.rel (%p436) target = $region40
      $region39: #{_lambda_.8} parent=31 // pred_region
        _
      $region40: #{_lambda_.8} parent=31 // pred_fallthru
        _
    $region32: #{_lambda_.8} parent=5 // pred_fallthru
      _
    %p439 = scmp.le.s32.totalorder 2, %s11
    // Predicated region
    $region41: #{_lambda_.8} parent=5 // pred_check
      %p440 = pneg %p439
    $region42: #{_lambda_.8} parent=5 // pred_check_branch
      %442 = sbr.rel (%p440) target = $region44
    $region43: #{_lambda_.8} parent=5 // pred_region
      %s443 = ssub.s32 %s11, 2
      // Predicated region
      $region45: #{_lambda_.8} parent=43 // pred_check
        %p444 = pneg %p108
      $region46: #{_lambda_.8} parent=43 // pred_check_branch
        %446 = sbr.rel (%p444) target = $region48
      $region47: #{_lambda_.8} parent=43 // pred_region
        %p447 = scmp.lt.s32.totalorder %s17, 1
        %s448 = scalar_select %p447, %s17, 1
        %s449 = smul.addr %s448, 4
        %s450 = scalar_lea.vmem %s3, %s449
      $region48: #{_lambda_.8} parent=43 // pred_fallthru
        _
      // Predicated region
      $region49: #{_lambda_.8} parent=43 // pred_check
        %p451 = pneg %p134
      $region50: #{_lambda_.8} parent=43 // pred_check_branch
        %453 = sbr.rel (%p451) target = $region52
      $region51: #{_lambda_.8} parent=43 // pred_region
        %p454 = scmp.lt.s32.totalorder %s17, 1
        %s455 = scalar_select %p454, %s17, 1
        %s456 = smul.addr %s455, 2
        %s457 = scalar_lea.vmem %s4, %s456
      $region52: #{_lambda_.8} parent=43 // pred_fallthru
        _
    $region44: #{_lambda_.8} parent=5 // pred_fallthru
      _
  $region6: #{_lambda_.8} parent=0 // loop_footer
    %s15 = sadd.s32 1, %s11
  $region7: #{_lambda_.8} parent=0 // loop_footer_branch
    %10 = sbr.rel target = $region3
  $region8: #{_lambda_.8} parent=0 // loop_exit
    _

// kernel: _lambda_.9
$region0: #{_lambda_.9}
  #allocation0 [shape = 'u32[]', space=smem, size = 0x4, offset = 0x4, fixed_abs, tag = 'smem constant byte address 0x4 - core index']
  #allocation1 [shape = 'u32[72,128]{1,0:T(1,128)}', space=vmem, size = 0x9000, scoped, tag = 'internal scratch']
  #allocation2 [shape = 'bf16[10,64]{1,0:T(8,128)(2,1)}', space=vmem, size = 0x1000, scoped, tag = 'scratch operand']
  %s0 = inlined_call_operand.vmem [shape: bf16[2,8,64], index: 0, kind: input, shape index: {}]
  %s1 = inlined_call_operand.vmem [shape: f32[2,64], index: 1, kind: input, shape index: {}]
  %s2 = inlined_call_operand.vmem [shape: bf16[3,64,64], index: 2, kind: input, shape index: {}]
  %s3 = inlined_call_operand.vmem [shape: bf16[2,8,64], index: 3, kind: input, shape index: {}]
  %s4 = inlined_call_operand.vmem [shape: bf16[2,8,64], index: 4, kind: output, shape index: {}]
  %s5 = sld [smem:[#allocation0]]
  $region49: #{_lambda_.9} parent=0
    _
  %s7 = ssub.s32 1, %s5
  %s8 = scalar_select 0, %s7, %s5
  loop: start=0, step=1, limit=4
  $region2: #{_lambda_.9} parent=0 // loop_pre_header
    _
  $region3: #{_lambda_.9} parent=0 // loop_header
    %s10 = sphi 0, %s14
    %p11 = scmp.ge.s32.totalorder %s10, 4
    %s20 = sphi 0, %s22
    %s23 = sphi 0, %s20
    %s24 = sphi 0, %s23
    %s40 = sphi 0, %s24
    %s44 = sphi 0, %s44
    %s46 = sphi 0, %s44
    %s47 = sphi 0, %s46
    %s61 = sphi 0, %s47
    %s65 = sphi 0, %s65
    %s67 = sphi 0, %s65
    %s68 = sphi 0, %s67
    %s82 = sphi 0, %s68
    %s88 = sphi 0, %s90
    %s91 = sphi 0, %s88
    %s92 = sphi 0, %s91
    %s108 = sphi 0, %s92
    %s114 = sphi 0, %s116
    %s117 = sphi 0, %s114
    %s118 = sphi 0, %s117
    %s134 = sphi 0, %s118
  $region4: #{_lambda_.9} parent=0 // loop_header_branch
    %13 = sbr.rel (%p11) target = $region8
  $region5: #{_lambda_.9} parent=0 // loop_body
    %s15 = ssub.s32 %s10, 1
    %s16 = ssub.s32 %s10, 2
    %s17 = sadd.s32 %s10, 1
    %s18 = ssub.s32 %s10, %s17
    %p19 = scmp.eq.s32.totalorder %s18, 0
    %s21 = sadd.s32 %s20, 1
    %s22 = scalar_select %p19, %s20, %s21
    %p25 = pneg %p19
    %p26 = scmp.eq.s32.totalorder %s10, 1
    %p27 = por %p25, %p26
    %p28 = scmp.ne.s32.totalorder %s20, %s23
    %p29 = scmp.eq.s32.totalorder %s10, 0
    %p30 = por %p28, %p29
    %p31 = scmp.ne.s32.totalorder %s20, %s23
    %p32 = scmp.eq.s32.totalorder %s15, 1
    %p33 = por %p31, %p32
    %p34 = scmp.ne.s32.totalorder %s23, %s24
    %p35 = scmp.eq.s32.totalorder %s15, 0
    %p36 = por %p34, %p35
    %p37 = scmp.ne.s32.totalorder %s23, %s24
    %p38 = scmp.eq.s32.totalorder %s16, 1
    %p39 = por %p37, %p38
    %p41 = scmp.ne.s32.totalorder %s24, %s40
    %p42 = scmp.eq.s32.totalorder %s16, 0
    %p43 = por %p41, %p42
    %s45 = sadd.s32 %s44, 1
    %p48 = scmp.eq.s32.totalorder %s10, 1
    %p49 = scmp.ne.s32.totalorder %s44, %s46
    %p50 = scmp.eq.s32.totalorder %s10, 0
    %p51 = por %p49, %p50
    %p52 = scmp.ne.s32.totalorder %s44, %s46
    %p53 = scmp.eq.s32.totalorder %s15, 1
    %p54 = por %p52, %p53
    %p55 = scmp.ne.s32.totalorder %s46, %s47
    %p56 = scmp.eq.s32.totalorder %s15, 0
    %p57 = por %p55, %p56
    %p58 = scmp.ne.s32.totalorder %s46, %s47
    %p59 = scmp.eq.s32.totalorder %s16, 1
    %p60 = por %p58, %p59
    %p62 = scmp.ne.s32.totalorder %s47, %s61
    %p63 = scmp.eq.s32.totalorder %s16, 0
    %p64 = por %p62, %p63
    %s66 = sadd.s32 %s65, 1
    %p69 = scmp.eq.s32.totalorder %s10, 1
    %p70 = scmp.ne.s32.totalorder %s65, %s67
    %p71 = scmp.eq.s32.totalorder %s10, 0
    %p72 = por %p70, %p71
    %p73 = scmp.ne.s32.totalorder %s65, %s67
    %p74 = scmp.eq.s32.totalorder %s15, 1
    %p75 = por %p73, %p74
    %p76 = scmp.ne.s32.totalorder %s67, %s68
    %p77 = scmp.eq.s32.totalorder %s15, 0
    %p78 = por %p76, %p77
    %p79 = scmp.ne.s32.totalorder %s67, %s68
    %p80 = scmp.eq.s32.totalorder %s16, 1
    %p81 = por %p79, %p80
    %p83 = scmp.ne.s32.totalorder %s68, %s82
    %p84 = scmp.eq.s32.totalorder %s16, 0
    %p85 = por %p83, %p84
    %s86 = ssub.s32 %s10, %s17
    %p87 = scmp.eq.s32.totalorder %s86, 0
    %s89 = sadd.s32 %s88, 1
    %s90 = scalar_select %p87, %s88, %s89
    %p93 = pneg %p87
    %p94 = scmp.eq.s32.totalorder %s10, 1
    %p95 = por %p93, %p94
    %p96 = scmp.ne.s32.totalorder %s88, %s91
    %p97 = scmp.eq.s32.totalorder %s10, 0
    %p98 = por %p96, %p97
    %p99 = scmp.ne.s32.totalorder %s88, %s91
    %p100 = scmp.eq.s32.totalorder %s15, 1
    %p101 = por %p99, %p100
    %p102 = scmp.ne.s32.totalorder %s91, %s92
    %p103 = scmp.eq.s32.totalorder %s15, 0
    %p104 = por %p102, %p103
    %p105 = scmp.ne.s32.totalorder %s91, %s92
    %p106 = scmp.eq.s32.totalorder %s16, 1
    %p107 = por %p105, %p106
    %p109 = scmp.ne.s32.totalorder %s92, %s108
    %p110 = scmp.eq.s32.totalorder %s16, 0
    %p111 = por %p109, %p110
    %s112 = ssub.s32 %s10, %s17
    %p113 = scmp.eq.s32.totalorder %s112, 0
    %s115 = sadd.s32 %s114, 1
    %s116 = scalar_select %p113, %s114, %s115
    %p119 = pneg %p113
    %p120 = scmp.eq.s32.totalorder %s10, 1
    %p121 = por %p119, %p120
    %p122 = scmp.ne.s32.totalorder %s114, %s117
    %p123 = scmp.eq.s32.totalorder %s10, 0
    %p124 = por %p122, %p123
    %p125 = scmp.ne.s32.totalorder %s114, %s117
    %p126 = scmp.eq.s32.totalorder %s15, 1
    %p127 = por %p125, %p126
    %p128 = scmp.ne.s32.totalorder %s117, %s118
    %p129 = scmp.eq.s32.totalorder %s15, 0
    %p130 = por %p128, %p129
    %p131 = scmp.ne.s32.totalorder %s117, %s118
    %p132 = scmp.eq.s32.totalorder %s16, 1
    %p133 = por %p131, %p132
    %p135 = scmp.ne.s32.totalorder %s118, %s134
    %p136 = scmp.eq.s32.totalorder %s16, 0
    %p137 = por %p135, %p136
    %p138 = scmp.le.s32.totalorder 1, %s10
    %p139 = scmp.lt.s32.totalorder %s10, 3
    %p140 = pnand %p138, %p139
    %p141 = pneg %p140
    // Predicated region
    $region9: #{_lambda_.9} parent=5 // pred_check
      _
    $region10: #{_lambda_.9} parent=5 // pred_check_branch
      %143 = sbr.rel (%p140) target = $region12
    $region11: #{_lambda_.9} parent=5 // pred_region
      %s144 = ssub.s32 %s10, 1
      // Predicated region
      $region13: #{_lambda_.9} parent=11 // pred_check
        %p145 = pneg %p57
      $region14: #{_lambda_.9} parent=11 // pred_check_branch
        %147 = sbr.rel (%p145) target = $region16
      $region15: #{_lambda_.9} parent=11 // pred_region
        _
      $region16: #{_lambda_.9} parent=11 // pred_fallthru
        _
      // Predicated region
      $region17: #{_lambda_.9} parent=11 // pred_check
        %p148 = pneg %p78
      $region18: #{_lambda_.9} parent=11 // pred_check_branch
        %150 = sbr.rel (%p148) target = $region20
      $region19: #{_lambda_.9} parent=11 // pred_region
        _
      $region20: #{_lambda_.9} parent=11 // pred_fallthru
        _
    $region12: #{_lambda_.9} parent=5 // pred_fallthru
      _
    %p151 = scmp.lt.s32.totalorder %s10, 2
    // Predicated region
    $region21: #{_lambda_.9} parent=5 // pred_check
      %p152 = pneg %p151
    $region22: #{_lambda_.9} parent=5 // pred_check_branch
      %154 = sbr.rel (%p152) target = $region24
    $region23: #{_lambda_.9} parent=5 // pred_region
      // Predicated region
      $region25: #{_lambda_.9} parent=23 // pred_check
        %p155 = pneg %p30
      $region26: #{_lambda_.9} parent=23 // pred_check_branch
        %157 = sbr.rel (%p155) target = $region28
      $region27: #{_lambda_.9} parent=23 // pred_region
        %p158 = scmp.lt.s32.totalorder %s10, 1
        %s159 = scalar_select %p158, %s10, 1
        %s160 = smul.addr %s159, 4
        %s161 = scalar_lea.vmem %s0, %s160
      $region28: #{_lambda_.9} parent=23 // pred_fallthru
        _
      // Predicated region
      $region29: #{_lambda_.9} parent=23 // pred_check
        %p162 = pneg %p98
      $region30: #{_lambda_.9} parent=23 // pred_check_branch
        %164 = sbr.rel (%p162) target = $region32
      $region31: #{_lambda_.9} parent=23 // pred_region
        %p165 = scmp.lt.s32.totalorder %s10, 1
        %s166 = scalar_select %p165, %s10, 1
        %s167 = smul.addr %s166, 4
        %s168 = scalar_lea.vmem %s3, %s167
      $region32: #{_lambda_.9} parent=23 // pred_fallthru
        _
    $region24: #{_lambda_.9} parent=5 // pred_fallthru
      _
    %p169 = scmp.le.s32.totalorder 1, %s10
    %p170 = scmp.lt.s32.totalorder %s10, 3
    %p171 = pnand %p169, %p170
    %p172 = pneg %p171
    // Predicated region
    $region33: #{_lambda_.9} parent=5 // pred_check
      _
    $region34: #{_lambda_.9} parent=5 // pred_check_branch
      %174 = sbr.rel (%p171) target = $region36
    $region35: #{_lambda_.9} parent=5 // pred_region
      %s175 = ssub.s32 %s10, 1
      %p176 = scmp.lt.s32.totalorder %s15, 1
      %s177 = scalar_select %p176, %s15, 1
      %s178 = smul.addr %s177, 4
      %s179 = scalar_lea.vmem %s0, %s178
      %p180 = pneg %p36
      %p181 = pneg %p33
      %p182 = pneg %p57
      %p183 = pneg %p54
      %p184 = pneg %p78
      %p185 = pneg %p75
      %p186 = scmp.lt.s32.totalorder %s15, 1
      %s187 = scalar_select %p186, %s15, 1
      %s188 = smul.addr %s187, 4
      %s189 = scalar_lea.vmem %s3, %s188
      %p190 = pneg %p104
      %p191 = pneg %p101
      %p192 = pneg %p130
      %p193 = pneg %p127
      %p194 = scmp.lt.s32.totalorder %s15, 1
      %s195 = scalar_select %p194, %s15, 1
      %s196 = smul.addr %s195, 4
      %s197 = scalar_lea.vmem %s4, %s196
      %p198 = scmp.lt.s32.totalorder %s15, 1
      %s199 = scalar_select %p198, %s15, 1
      %s200 = smul.addr %s199, 4
      %s201 = scalar_lea.vmem %s0, %s200
      %p202 = scmp.lt.s32.totalorder %s15, 1
      %s203 = scalar_select %p202, %s15, 1
      %s204 = smul.addr %s203, 4
      %s205 = scalar_lea.vmem %s3, %s204
      %p206 = scmp.lt.s32.totalorder %s15, 1
      %s207 = scalar_select %p206, %s15, 1
      %s208 = smul.addr %s207, 4
      %s209 = scalar_lea.vmem %s4, %s208
      %v211 = vld [vmem:[%s201] sm:$0xf]
      %v212 = vunpack.c.l.bf16 %v211
      %v213 = vld [vmem:[%s1] sm:$0x1]
      %v214 = vperm.slane %v213, 0
      %v215 = vmul.f32 %v212, %v214
      %v216 = vld [vmem:[%s1 + $0x1] sm:$0x1]
      %v217 = vperm.slane %v216, 0
      %v218 = vadd.f32 %v215, %v217
      %v219 = vmax.f32 %v218, 0.0
      %vm220 = vcmask 519168
      %221 = vst.msk [vmem:[#allocation2] sm:$0xf] %vm220, 0
      %vm222 = vcmask 516096
      %223 = vst.msk [vmem:[#allocation2 + $0x4] sm:$0x1] %vm222, 0
      %v224 = vpack.c.bf16 %v219, %v219
      %v226 = vshrl.u32 %v224, 16
      %v228 = vrot.slane %v226, 7
      %v229 = vshll.u32 %v224, 16
      %v231 = vor.u32 %v228, %v229
      %v232 = vrot.slane %v228, 4
      %vm235 = vcmask 519168
      %vm236 = vsmask.f32 7938
      %vm237 = vmand %vm235, %vm236
      %v238 = vld [vmem:[#allocation2] sm:$0xf]
      %v239 = vsel %vm237, %v231, %v238
      %240 = vst [vmem:[#allocation2] sm:$0xf] %v239
      %vm241 = vcmask 516096
      %vm242 = vsmask.f32 256
      %vm243 = vmand %vm241, %vm242
      %v244 = vld [vmem:[#allocation2 + $0x4] sm:$0x1]
      %v245 = vsel %vm243, %v232, %v244
      %246 = vst [vmem:[#allocation2 + $0x4] sm:$0x1] %v245
      %v247 = vld [vmem:[#allocation2] sm:$0xf]
      %v248 = vld [vmem:[#allocation2 + $0x4] sm:$0x1]
      %v249 = vld [vmem:[%s2] sm:$0xf]
      %v250 = vld [vmem:[%s2 + $0x4] sm:$0xf]
      %v251 = vld [vmem:[%s2 + $0x8] sm:$0xf]
      %v252 = vld [vmem:[%s2 + $0xc] sm:$0xf]
      %v253 = vld [vmem:[%s2 + $0x10] sm:$0xf]
      %v254 = vld [vmem:[%s2 + $0x14] sm:$0xf]
      %v255 = vld [vmem:[%s2 + $0x18] sm:$0xf]
      %v256 = vld [vmem:[%s2 + $0x1c] sm:$0xf]
      %s257 = scalar_lea.vmem %s2, 32
      %v258 = vld [vmem:[%s257] sm:$0xf]
      %v259 = vld [vmem:[%s257 + $0x4] sm:$0xf]
      %v260 = vld [vmem:[%s257 + $0x8] sm:$0xf]
      %v261 = vld [vmem:[%s257 + $0xc] sm:$0xf]
      %v262 = vld [vmem:[%s257 + $0x10] sm:$0xf]
      %v263 = vld [vmem:[%s257 + $0x14] sm:$0xf]
      %v264 = vld [vmem:[%s257 + $0x18] sm:$0xf]
      %v265 = vld [vmem:[%s257 + $0x1c] sm:$0xf]
      %v268 = vunpack.c.l.b16 %v247
      %v269 = vunpack.c.l.b16 %v248
      %v270 = vpack.c.b16 %v269, %v268
      %v272 = vshrl.u32 %v270, 16
      %v274 = vshll.u32 %v270, 16
      %v276 = vrot.slane %v274, 1
      %v277 = vor.u32 %v272, %v276
      %v286 = vunpack.c.l.b16 %v258
      %v287 = vunpack.c.l.b16 %v259
      %v288 = vunpack.c.l.b16 %v260
      %v289 = vunpack.c.l.b16 %v261
      %v290 = vunpack.c.l.b16 %v262
      %v291 = vunpack.c.l.b16 %v263
      %v292 = vunpack.c.l.b16 %v264
      %v293 = vunpack.c.l.b16 %v265
      %v294 = vpack.c.b16 %v287, %v286
      %v295 = vpack.c.b16 %v289, %v288
      %v296 = vpack.c.b16 %v291, %v290
      %v297 = vpack.c.b16 %v293, %v292
      %vm302 = vcmask 523264
      %v304 = vsel %vm302, %v277, 0
      %306 = vmatpush.bf16.msra.mxu0 0
      %307 = vmatpush.bf16.msra.mxu0 0
      %308 = vmatpush.bf16.msra.mxu0 0
      %309 = vmatpush.bf16.msra.mxu0 0
      %310 = vmatpush.bf16.msra.mxu0 %v297
      %311 = vmatpush.bf16.msra.mxu0 %v296
      %312 = vmatpush.bf16.msra.mxu0 %v295
      %313 = vmatpush.bf16.msra.mxu0 %v294
      %314 = vmatmul.bf16.gmra.mxu0 %v304
      %v315 = vpop.f32.mrf.mxu0
      %v316 = vadd.f32 0.0, %v315
      %v317 = vpop.f32.mrf.mxu0
      %318 = vdwg.mxu0
      %v327 = vunpack.c.l.b16 %v249
      %v328 = vunpack.c.l.b16 %v250
      %v329 = vunpack.c.l.b16 %v251
      %v330 = vunpack.c.l.b16 %v252
      %v331 = vunpack.c.l.b16 %v253
      %v332 = vunpack.c.l.b16 %v254
      %v333 = vunpack.c.l.b16 %v255
      %v334 = vunpack.c.l.b16 %v256
      %v335 = vpack.c.b16 %v328, %v327
      %v336 = vpack.c.b16 %v330, %v329
      %v337 = vpack.c.b16 %v332, %v331
      %v338 = vpack.c.b16 %v334, %v333
      %v344 = vsel %vm302, %v247, 0
      %346 = vmatpush.bf16.msra.mxu0 0
      %347 = vmatpush.bf16.msra.mxu0 0
      %348 = vmatpush.bf16.msra.mxu0 0
      %349 = vmatpush.bf16.msra.mxu0 0
      %350 = vmatpush.bf16.msra.mxu0 %v338
      %351 = vmatpush.bf16.msra.mxu0 %v337
      %352 = vmatpush.bf16.msra.mxu0 %v336
      %353 = vmatpush.bf16.msra.mxu0 %v335
      %354 = vmatmul.bf16.gmra.mxu0 %v344
      %v355 = vpop.f32.mrf.mxu0
      %v356 = vadd.f32 %v316, %v355
      %v357 = vpop.f32.mrf.mxu0
      %358 = vdwg.mxu0
      %s359 = scalar_lea.vmem %s2, 64
      %v360 = vld [vmem:[%s359] sm:$0xf]
      %v361 = vld [vmem:[%s359 + $0x4] sm:$0xf]
      %v362 = vld [vmem:[%s359 + $0x8] sm:$0xf]
      %v363 = vld [vmem:[%s359 + $0xc] sm:$0xf]
      %v364 = vld [vmem:[%s359 + $0x10] sm:$0xf]
      %v365 = vld [vmem:[%s359 + $0x14] sm:$0xf]
      %v366 = vld [vmem:[%s359 + $0x18] sm:$0xf]
      %v367 = vld [vmem:[%s359 + $0x1c] sm:$0xf]
      %v368 = vrot.slane %v270, 1
      %v377 = vunpack.c.l.b16 %v360
      %v378 = vunpack.c.l.b16 %v361
      %v379 = vunpack.c.l.b16 %v362
      %v380 = vunpack.c.l.b16 %v363
      %v381 = vunpack.c.l.b16 %v364
      %v382 = vunpack.c.l.b16 %v365
      %v383 = vunpack.c.l.b16 %v366
      %v384 = vunpack.c.l.b16 %v367
      %v385 = vpack.c.b16 %v378, %v377
      %v386 = vpack.c.b16 %v380, %v379
      %v387 = vpack.c.b16 %v382, %v381
      %v388 = vpack.c.b16 %v384, %v383
      %v394 = vsel %vm302, %v368, 0
      %396 = vmatpush.bf16.msra.mxu0 0
      %397 = vmatpush.bf16.msra.mxu0 0
      %398 = vmatpush.bf16.msra.mxu0 0
      %399 = vmatpush.bf16.msra.mxu0 0
      %400 = vmatpush.bf16.msra.mxu0 %v388
      %401 = vmatpush.bf16.msra.mxu0 %v387
      %402 = vmatpush.bf16.msra.mxu0 %v386
      %403 = vmatpush.bf16.msra.mxu0 %v385
      %404 = vmatmul.bf16.gmra.mxu0 %v394
      %v405 = vpop.f32.mrf.mxu0
      %v406 = vadd.f32 0.0, %v405
      %v407 = vpop.f32.mrf.mxu0
      %408 = vdwg.mxu0
      %v409 = vadd.f32 %v356, %v406
      %v410 = vld [vmem:[%s205] sm:$0xf]
      %v411 = vunpack.c.l.bf16 %v410
      %v412 = vadd.f32 %v409, %v411
      %v413 = vpack.c.bf16 %v412, %v412
      %414 = vst.msk [vmem:[%s209] sm:$0xf] %vm220, %v413
      %p415 = scmp.lt.s32.totalorder %s15, 1
      %s416 = scalar_select %p415, %s15, 1
      %s417 = smul.addr %s416, 4
      %s418 = scalar_lea.vmem %s4, %s417
      // Predicated region
      $region37: #{_lambda_.9} parent=35 // pred_check
        %p419 = pneg %p127
      $region38: #{_lambda_.9} parent=35 // pred_check_branch
        %421 = sbr.rel (%p419) target = $region40
      $region39: #{_lambda_.9} parent=35 // pred_region
        _
      $region40: #{_lambda_.9} parent=35 // pred_fallthru
        _
    $region36: #{_lambda_.9} parent=5 // pred_fallthru
      _
    %p422 = scmp.le.s32.totalorder 2, %s10
    // Predicated region
    $region41: #{_lambda_.9} parent=5 // pred_check
      %p423 = pneg %p422
    $region42: #{_lambda_.9} parent=5 // pred_check_branch
      %425 = sbr.rel (%p423) target = $region44
    $region43: #{_lambda_.9} parent=5 // pred_region
      %s426 = ssub.s32 %s10, 2
      // Predicated region
      $region45: #{_lambda_.9} parent=43 // pred_check
        %p427 = pneg %p133
      $region46: #{_lambda_.9} parent=43 // pred_check_branch
        %429 = sbr.rel (%p427) target = $region48
      $region47: #{_lambda_.9} parent=43 // pred_region
        %p430 = scmp.lt.s32.totalorder %s16, 1
        %s431 = scalar_select %p430, %s16, 1
        %s432 = smul.addr %s431, 4
        %s433 = scalar_lea.vmem %s4, %s432
      $region48: #{_lambda_.9} parent=43 // pred_fallthru
        _
    $region44: #{_lambda_.9} parent=5 // pred_fallthru
      _
  $region6: #{_lambda_.9} parent=0 // loop_footer
    %s14 = sadd.s32 1, %s10
  $region7: #{_lambda_.9} parent=0 // loop_footer_branch
    %9 = sbr.rel target = $region3
  $region8: #{_lambda_.9} parent=0 // loop_exit
    _

</llo_original>
